<compile_context>
chip_gen: v5e
topology: v5e:2x2
jax: 0.10.0
libtpu: 0.0.40
codegen_flags: <defaults>
</compile_context>

<pallas_src>
import functools
import math

import jax
import jax.numpy as jnp
from jax.experimental import pallas as pl
from jax.experimental.pallas import tpu as pltpu


# --------------------------------------------------------------------------
# Small helpers
# --------------------------------------------------------------------------
def _round_up(x, m):
    return ((x + m - 1) // m) * m


def _row_tiling(M):
    """Row tile that divides M (avoids host-side padding); capped at 256."""
    for tm in (256, 128, 64, 32, 16, 8):
        if M % tm == 0:
            return M, tm
    tm = 256 if M > 256 else _round_up(M, 8)
    return _round_up(M, tm), tm


def _seq_tile(S):
    for ts in (256, 128, 64, 32, 16, 8):
        if S % ts == 0:
            return ts
    return S


def _vmem_limit_bytes():
    """~75% of physical VMEM (lifts the scoped default where it matters,
    never above capacity).  None -> compiler default."""
    try:
        cap = getattr(pltpu.get_tpu_info(), "vmem_capacity_bytes", None)
        if cap:
            return int(cap) * 3 // 4
    except Exception:
        pass
    return None


def _layer_norm(x, g, b, eps):
    mu = jnp.mean(x, axis=-1, keepdims=True)
    var = jnp.mean(jnp.square(x - mu), axis=-1, keepdims=True)
    return (x - mu) * jax.lax.rsqrt(var + eps) * g + b


# --------------------------------------------------------------------------
# Kernel: input projection + 3D positional embedding (fused)
# --------------------------------------------------------------------------
def _proj_pos_kernel(x_ref, w_ref, pos_ref, o_ref):
    x = x_ref[0].astype(jnp.bfloat16)                         # (ts, F)
    y = jnp.dot(x, w_ref[...], preferred_element_type=jnp.float32)
    o_ref[0] = (y + pos_ref[...]).astype(o_ref.dtype)


def fused_proj_pos(feat, proj_w, pos):
    """feat: (B, S, F) f32, proj_w: (F, D) bf16, pos: (S, D) f32 -> (B,S,D) bf16."""
    B, S, F = feat.shape
    D = proj_w.shape[1]
    ts = _seq_tile(S)
    return pl.pallas_call(
        _proj_pos_kernel,
        out_shape=jax.ShapeDtypeStruct((B, S, D), jnp.bfloat16),
        grid=(B, S // ts),
        in_specs=[
            pl.BlockSpec((1, ts, F), lambda b, s: (b, s, 0)),
            pl.BlockSpec((F, D), lambda b, s: (0, 0)),
            pl.BlockSpec((ts, D), lambda b, s: (s, 0)),
        ],
        out_specs=pl.BlockSpec((1, ts, D), lambda b, s: (b, s, 0)),
        compiler_params=pltpu.CompilerParams(
            dimension_semantics=("parallel", "parallel")),
    )(feat, proj_w, pos)


# --------------------------------------------------------------------------
# Kernel: ALL decoder layers fused (grid over L, tgt resident in VMEM)
# --------------------------------------------------------------------------
def _decoder_stack_kernel(mem_ref, qe_ref,
                          wq_ref, bq_ref, wk_ref, bk_ref, wv_ref, bv_ref,
                          wo_ref, bo_ref, ln1g_ref, ln1b_ref,
                          w1_ref, b1_ref, w2_ref, b2_ref,
                          ln2g_ref, ln2b_ref,
                          hs_ref, attn_ref, tgt_ref, *, eps):
    l = pl.program_id(0)
    L = pl.num_programs(0)
    B, Q, D = tgt_ref.shape
    S = mem_ref.shape[1]

    @pl.when(l == 0)
    def _():
        tgt_ref[...] = jnp.zeros_like(tgt_ref)

    t = tgt_ref[...]                                          # (B, Q, D) f32
    mem2 = mem_ref[...].reshape(B * S, D)                     # bf16, loaded once

    # per-layer K/V projection from the VMEM-resident memory (no HBM KV tensor)
    k = (jnp.dot(mem2, wk_ref[0], preferred_element_type=jnp.float32)
         + bk_ref[0]).astype(jnp.bfloat16).reshape(B, S, D)
    v = (jnp.dot(mem2, wv_ref[0], preferred_element_type=jnp.float32)
         + bv_ref[0]).astype(jnp.bfloat16).reshape(B, S, D)

    # q projection: fold batch into the MXU M dim (Wq/bq pre-scaled by 1/sqrt(D))
    q_in = (t + qe_ref[...].astype(jnp.float32)).astype(jnp.bfloat16)
    q = (jnp.dot(q_in.reshape(B * Q, D), wq_ref[0],
                 preferred_element_type=jnp.float32) + bq_ref[0])
    q = q.astype(jnp.bfloat16).reshape(B, Q, D)

    # attention scores + exact f32 softmax (attn map is a model output)
    s = jnp.einsum('bqd,bkd->bqk', q, k, preferred_element_type=jnp.float32)
    s = s - jnp.max(s, axis=-1, keepdims=True)
    p = jnp.exp(s)
    p = p / jnp.sum(p, axis=-1, keepdims=True)                # (B, Q, S)
    ctx = jnp.einsum('bqk,bkd->bqd', p.astype(jnp.bfloat16), v,
                     preferred_element_type=jnp.float32)

    # output projection + residual + LayerNorm (batch folded into M)
    o = (jnp.dot(ctx.reshape(B * Q, D).astype(jnp.bfloat16), wo_ref[0],
                 preferred_element_type=jnp.float32) + bo_ref[0])
    x = _layer_norm(t.reshape(B * Q, D) + o, ln1g_ref[0], ln1b_ref[0], eps)

    # FFN + residual + LayerNorm
    h = jnp.dot(x.astype(jnp.bfloat16), w1_ref[0],
                preferred_element_type=jnp.float32) + b1_ref[0]
    h = jnp.maximum(h, 0.0)
    y = jnp.dot(h.astype(jnp.bfloat16), w2_ref[0],
                preferred_element_type=jnp.float32) + b2_ref[0]
    x = _layer_norm(x + y, ln2g_ref[0], ln2b_ref[0], eps)

    x = x.reshape(B, Q, D)
    tgt_ref[...] = x
    hs_ref[0] = x.astype(hs_ref.dtype)

    @pl.when(l == L - 1)
    def _():
        attn_ref[...] = p.astype(attn_ref.dtype)


def transformer_decoder(kp, memory):
    """Minimal DETR-style decoder stand-in: hs (L, B, Q, D) bf16, attn (B, Q, S) f32."""
    B, S, D = memory.shape
    dec = kp["dec"]
    L = dec["wq"].shape[0]
    Dff = dec["w1"].shape[2]
    qe = kp["query_embed"]
    Q = qe.shape[0]

    mat = lambda n: pl.BlockSpec((1, D, n), lambda l: (l, 0, 0))
    mat_t = lambda n: pl.BlockSpec((1, n, D), lambda l: (l, 0, 0))
    vec = lambda n: pl.BlockSpec((1, 1, n), lambda l: (l, 0, 0))

    hs, attn = pl.pallas_call(
        functools.partial(_decoder_stack_kernel, eps=1e-5),
        out_shape=(jax.ShapeDtypeStruct((L, B, Q, D), jnp.bfloat16),
                   jax.ShapeDtypeStruct((B, Q, S), jnp.float32)),
        grid=(L,),
        in_specs=[
            pl.BlockSpec((B, S, D), lambda l: (0, 0, 0)),   # memory (loaded once)
            pl.BlockSpec((Q, D), lambda l: (0, 0)),          # query_embed
            mat(D), vec(D),                                  # wq, bq (pre-scaled)
            mat(D), vec(D),                                  # wk, bk
            mat(D), vec(D),                                  # wv, bv
            mat(D), vec(D),                                  # wo, bo
            vec(D), vec(D),                                  # ln1 gamma/beta
            mat(Dff), vec(Dff),                              # w1, b1
            mat_t(Dff), vec(D),                              # w2, b2
            vec(D), vec(D),                                  # ln2 gamma/beta
        ],
        out_specs=(pl.BlockSpec((1, B, Q, D), lambda l: (l, 0, 0, 0)),
                   pl.BlockSpec((B, Q, S), lambda l: (0, 0, 0))),
        scratch_shapes=[pltpu.VMEM((B, Q, D), jnp.float32)],
        compiler_params=pltpu.CompilerParams(
            dimension_semantics=("arbitrary",),
            vmem_limit_bytes=_vmem_limit_bytes()),
    )(memory, qe,
      dec["wq"], dec["bq"], dec["wk"], dec["bk"], dec["wv"], dec["bv"],
      dec["wo"], dec["bo"], dec["ln1_g"], dec["ln1_b"],
      dec["w1"], dec["b1"], dec["w2"], dec["b2"],
      dec["ln2_g"], dec["ln2_b"])
    return hs, attn


# --------------------------------------------------------------------------
# Kernel: fused class head + frame_proj + bbox MLP on hs[-1] (pred_traj path)
# --------------------------------------------------------------------------
def _traj_heads_kernel(hs_ref, cw_ref, cb_ref, whs_ref, fpb_ref, ft_ref,
                       w1_ref, b1_ref, w2_ref, b2_ref, w3_ref, b3_ref,
                       cls_ref, box_ref, a_ref):
    t = pl.program_id(0)
    B, Q, D = a_ref.shape
    x2 = hs_ref[...].reshape(B * Q, D)                        # bf16

    @pl.when(t == 0)
    def _():
        cls = (jnp.dot(x2, cw_ref[...], preferred_element_type=jnp.float32)
               + cb_ref[...])
        cls_ref[...] = cls.reshape(B, Q, -1)
        a_ref[...] = (jnp.dot(x2, whs_ref[...],
                              preferred_element_type=jnp.float32)
                      + fpb_ref[...]).reshape(B, Q, D)

    # cond_hs row block for frame t: hs@W_hs + b + frame_index[t]@W_frame
    cond = (a_ref[...].reshape(B * Q, D) + ft_ref[0]).astype(jnp.bfloat16)
    h = jnp.dot(cond, w1_ref[...], preferred_element_type=jnp.float32) + b1_ref[...]
    h = jnp.maximum(h, 0.0).astype(jnp.bfloat16)
    h = jnp.dot(h, w2_ref[...], preferred_element_type=jnp.float32) + b2_ref[...]
    h = jnp.maximum(h, 0.0).astype(jnp.bfloat16)
    y = jnp.dot(h, w3_ref[...], preferred_element_type=jnp.float32) + b3_ref[...]
    box_ref[...] = jax.nn.sigmoid(y).reshape(B, 1, Q, -1)


def fused_traj_heads(hs_last, frame_term, kp):
    """hs_last: (B, Q, D) bf16, frame_term: (T, 1, D) f32.
    Returns class logits (B, Q, Ncls_pad) and boxes (B, T, Q, Nbox_pad)."""
    B, Q, D = hs_last.shape
    T = frame_term.shape[0]
    Ncls = kp["class_w_pad"].shape[1]
    Nbox = kp["bbox_w3_pad"].shape[1]
    return pl.pallas_call(
        _traj_heads_kernel,
        out_shape=(jax.ShapeDtypeStruct((B, Q, Ncls), jnp.float32),
                   jax.ShapeDtypeStruct((B, T, Q, Nbox), jnp.float32)),
        grid=(T,),
        in_specs=[
            pl.BlockSpec((B, Q, D), lambda t: (0, 0, 0)),
            pl.BlockSpec((D, Ncls), lambda t: (0, 0)),
            pl.BlockSpec((1, Ncls), lambda t: (0, 0)),
            pl.BlockSpec((D, D), lambda t: (0, 0)),
            pl.BlockSpec((1, D), lambda t: (0, 0)),
            pl.BlockSpec((1, 1, D), lambda t: (t, 0, 0)),     # frame_term[t]
            pl.BlockSpec((D, D), lambda t: (0, 0)),
            pl.BlockSpec((1, D), lambda t: (0, 0)),
            pl.BlockSpec((D, D), lambda t: (0, 0)),
            pl.BlockSpec((1, D), lambda t: (0, 0)),
            pl.BlockSpec((D, Nbox), lambda t: (0, 0)),
            pl.BlockSpec((1, Nbox), lambda t: (0, 0)),
        ],
        out_specs=(pl.BlockSpec((B, Q, Ncls), lambda t: (0, 0, 0)),
                   pl.BlockSpec((B, 1, Q, Nbox), lambda t: (0, t, 0, 0))),
        scratch_shapes=[pltpu.VMEM((B, Q, D), jnp.float32)],
        compiler_params=pltpu.CompilerParams(
            dimension_semantics=("arbitrary",)),
    )(hs_last, kp["class_w_pad"], kp["class_b_pad"], kp["w_hs"],
      kp["frame_proj_b"], frame_term,
      kp["bbox_w1"], kp["bbox_b1"], kp["bbox_w2"], kp["bbox_b2"],
      kp["bbox_w3_pad"], kp["bbox_b3_pad"])


# --------------------------------------------------------------------------
# Generic linear + fused bbox MLP (non-pred_traj fallback path only)
# --------------------------------------------------------------------------
def _linear_kernel(x_ref, w_ref, b_ref, o_ref):
    x = x_ref[...].astype(jnp.bfloat16)
    y = jnp.dot(x, w_ref[...], preferred_element_type=jnp.float32) + b_ref[...]
    o_ref[...] = y.astype(o_ref.dtype)


def pallas_linear(x2, w, b):
    M, K = x2.shape
    N = w.shape[1]
    Mp, tm = _row_tiling(M)
    x = x2 if Mp == M else jnp.pad(x2, ((0, Mp - M), (0, 0)))
    out = pl.pallas_call(
        _linear_kernel,
        out_shape=jax.ShapeDtypeStruct((Mp, N), jnp.float32),
        grid=(Mp // tm,),
        in_specs=[pl.BlockSpec((tm, K), lambda i: (i, 0)),
                  pl.BlockSpec((K, N), lambda i: (0, 0)),
                  pl.BlockSpec((1, N), lambda i: (0, 0))],
        out_specs=pl.BlockSpec((tm, N), lambda i: (i, 0)),
        compiler_params=pltpu.CompilerParams(
            dimension_semantics=("parallel",)),
    )(x, w, b)
    return out[:M]


def _bbox_mlp_kernel(x_ref, w1_ref, b1_ref, w2_ref, b2_ref, w3_ref, b3_ref,
                     o_ref):
    x = x_ref[...].astype(jnp.bfloat16)
    h = jnp.dot(x, w1_ref[...], preferred_element_type=jnp.float32) + b1_ref[...]
    h = jnp.maximum(h, 0.0).astype(jnp.bfloat16)
    h = jnp.dot(h, w2_ref[...], preferred_element_type=jnp.float32) + b2_ref[...]
    h = jnp.maximum(h, 0.0).astype(jnp.bfloat16)
    y = jnp.dot(h, w3_ref[...], preferred_element_type=jnp.float32) + b3_ref[...]
    o_ref[...] = jax.nn.sigmoid(y).astype(o_ref.dtype)


def fused_bbox_mlp(x2, kp):
    M, D = x2.shape
    Np = kp["bbox_w3_pad"].shape[1]
    Mp, tm = _row_tiling(M)
    x = x2 if Mp == M else jnp.pad(x2, ((0, Mp - M), (0, 0)))
    out = pl.pallas_call(
        _bbox_mlp_kernel,
        out_shape=jax.ShapeDtypeStruct((Mp, Np), jnp.float32),
        grid=(Mp // tm,),
        in_specs=[
            pl.BlockSpec((tm, D), lambda i: (i, 0)),
            pl.BlockSpec((D, D), lambda i: (0, 0)),
            pl.BlockSpec((1, D), lambda i: (0, 0)),
            pl.BlockSpec((D, D), lambda i: (0, 0)),
            pl.BlockSpec((1, D), lambda i: (0, 0)),
            pl.BlockSpec((D, Np), lambda i: (0, 0)),
            pl.BlockSpec((1, Np), lambda i: (0, 0)),
        ],
        out_specs=pl.BlockSpec((tm, Np), lambda i: (i, 0)),
        compiler_params=pltpu.CompilerParams(
            dimension_semantics=("parallel",)),
    )(x, kp["bbox_w1"], kp["bbox_b1"], kp["bbox_w2"], kp["bbox_b2"],
      kp["bbox_w3_pad"], kp["bbox_b3_pad"])
    return out[:M]


# --------------------------------------------------------------------------
# Parameter setup (PyTorch-like f32 params + one-time kernel repack)
# --------------------------------------------------------------------------
def init_params(key, *, feature_dim, hidden_dim, num_classes, num_queries,
                num_frames, patches_per_frame, num_decoder_layers):
    D = hidden_dim
    keys = iter(jax.random.split(key, 128))

    def nrm(shape, std=0.02):
        return std * jax.random.normal(next(keys), shape, jnp.float32)

    p = {
        "proj_w": nrm((feature_dim, D)),                 # nn.Linear(feat, D, bias=False)
        "query_embed": nrm((num_queries, D)),            # nn.Embedding(Q, D)
        "class_w": nrm((D, num_classes + 1)),            # nn.Linear(D, C+1)
        "class_b": jnp.zeros((num_classes + 1,), jnp.float32),
        "bbox_w1": nrm((D, D)), "bbox_b1": jnp.zeros((D,), jnp.float32),
        "bbox_w2": nrm((D, D)), "bbox_b2": jnp.zeros((D,), jnp.float32),
        "bbox_w3": nrm((D, 4)), "bbox_b3": jnp.zeros((4,), jnp.float32),
        "frame_index": nrm((num_frames, D)),             # nn.Embedding(T, D)
        "frame_proj_w": nrm((2 * D, D)),                 # nn.Linear(2D, D)
        "frame_proj_b": jnp.zeros((D,), jnp.float32),
        "pos_embed": nrm((1, patches_per_frame + 1, D)),
        "temporal_embed": nrm((1, num_frames, D)),
    }
    layers = []
    for _ in range(num_decoder_layers):
        lp = {}
        for nm in ("wq", "wk", "wv", "wo"):
            lp[nm] = nrm((D, D))
            lp["b" + nm[1]] = jnp.zeros((D,), jnp.float32)
        lp["w1"] = nrm((D, 4 * D)); lp["b1"] = jnp.zeros((4 * D,), jnp.float32)
        lp["w2"] = nrm((4 * D, D)); lp["b2"] = jnp.zeros((D,), jnp.float32)
        lp["ln1_g"] = jnp.ones((D,), jnp.float32)
        lp["ln1_b"] = jnp.zeros((D,), jnp.float32)
        lp["ln2_g"] = jnp.ones((D,), jnp.float32)
        lp["ln2_b"] = jnp.zeros((D,), jnp.float32)
        layers.append(lp)
    p["tfm_layers"] = layers
    return p


def prepare_params(p):
    """One-time repack: bf16 MXU weights, (1,N) f32 biases, 128-lane-padded
    heads, per-layer weights stacked along a leading L axis, attention scale
    folded into Wq/bq, frame_proj split into W_hs / W_frame."""
    bf = jnp.bfloat16
    D = p["proj_w"].shape[1]
    C1 = p["class_w"].shape[1]
    Ncls = _round_up(C1, 128)
    Nbox = _round_up(p["bbox_w3"].shape[1], 128)
    L = len(p["tfm_layers"])
    Dff = p["tfm_layers"][0]["w1"].shape[1]
    scale = 1.0 / math.sqrt(D)

    kp = {
        "proj_w": p["proj_w"].astype(bf),
        "query_embed": p["query_embed"].astype(bf),
        "pos_embed": p["pos_embed"],                          # f32 (added in f32)
        "temporal_embed": p["temporal_embed"],
        "frame_index": p["frame_index"],
        "class_w_pad": jnp.pad(p["class_w"], ((0, 0), (0, Ncls - C1))).astype(bf),
        "class_b_pad": jnp.pad(p["class_b"], (0, Ncls - C1)).reshape(1, Ncls),
        # frame_proj split: concat([hs, frame]) @ W + b == hs@W_hs + frame@W_frame + b
        "w_hs": p["frame_proj_w"][:D].astype(bf),
        "w_frame": p["frame_proj_w"][D:],                     # f32 (tiny)
        "frame_proj_b": p["frame_proj_b"].reshape(1, D),
        "bbox_w1": p["bbox_w1"].astype(bf), "bbox_b1": p["bbox_b1"].reshape(1, D),
        "bbox_w2": p["bbox_w2"].astype(bf), "bbox_b2": p["bbox_b2"].reshape(1, D),
        "bbox_w3_pad": jnp.pad(
            p["bbox_w3"], ((0, 0), (0, Nbox - p["bbox_w3"].shape[1]))).astype(bf),
        "bbox_b3_pad": jnp.pad(
            p["bbox_b3"], (0, Nbox - p["bbox_b3"].shape[0])).reshape(1, Nbox),
    }

    def stack(nm):
        return jnp.stack([lp[nm] for lp in p["tfm_layers"]], axis=0)

    kp["dec"] = {
        "wq": (stack("wq") * scale).astype(bf),               # (L, D, D), scale folded
        "bq": (stack("bq") * scale).reshape(L, 1, D),
        "wk": stack("wk").astype(bf), "bk": stack("bk").reshape(L, 1, D),
        "wv": stack("wv").astype(bf), "bv": stack("bv").reshape(L, 1, D),
        "wo": stack("wo").astype(bf), "bo": stack("bo").reshape(L, 1, D),
        "w1": stack("w1").astype(bf), "b1": stack("b1").reshape(L, 1, Dff),
        "w2": stack("w2").astype(bf), "b2": stack("b2").reshape(L, 1, D),
        "ln1_g": stack("ln1_g").reshape(L, 1, D),
        "ln1_b": stack("ln1_b").reshape(L, 1, D),
        "ln2_g": stack("ln2_g").reshape(L, 1, D),
        "ln2_b": stack("ln2_b").reshape(L, 1, D),
    }
    return kp


# --------------------------------------------------------------------------
# Forward orchestration
# --------------------------------------------------------------------------
def construct_pos_embed(kp, T, P):
    D = kp["pos_embed"].shape[-1]
    tile_pos = jnp.tile(kp["pos_embed"][:, 1:, :], (1, T, 1))        # (1, T*P, D)
    tile_temp = jnp.repeat(kp["temporal_embed"], P, axis=1)          # (1, T*P, D)
    return (tile_pos + tile_temp).reshape(T * P, D)                  # (S, D) f32


def obj_decoder_forward(kp, features, *, num_classes_p1):
    """features: (B, T, P, feature_dim) channels-last (matches PyTorch b h w c)."""
    B, T, P, F = features.shape
    D = kp["proj_w"].shape[1]
    num_frames = kp["frame_index"].shape[0]
    Q = kp["query_embed"].shape[0]
    S = T * P

    # self.proj (no bias) + 3D pos-embed add, fused; memory stays bf16.
    pos = construct_pos_embed(kp, T, P)                              # (S, D) f32
    memory = fused_proj_pos(features.reshape(B, S, F), kp["proj_w"], pos)

    # TODO(synk): the all-zero padding mask of the reference is a no-op; ignored.
    hs_bf, attn = transformer_decoder(kp, memory)    # (L,B,Q,D) bf16, (B,Q,S) f32
    hs_last = hs_bf[-1]                              # aux_loss=False: heads on last layer only

    if T == num_frames:
        # pred_traj branch: class head + hs@W_hs + per-frame bbox MLP in ONE kernel;
        # the (T,D) frame_index@W_frame term is a tiny XLA matmul outside.
        frame_term = jnp.dot(kp["frame_index"], kp["w_frame"]).reshape(T, 1, D)
        cls_pad, boxes_pad = fused_traj_heads(hs_last, frame_term, kp)
        logits = cls_pad[:, :, :num_classes_p1]                      # (B, Q, C+1)
        # NOTE: PyTorch hard-codes expand(..., 4, ...); here T == num_frames.
        pred_logits = jnp.broadcast_to(
            logits[:, None], (B, T, Q, num_classes_p1)
        ).reshape(B * T, Q, num_classes_p1)
        pred_boxes = boxes_pad[..., :4].reshape(B * T, Q, 4)
    else:
        hs2 = hs_last.reshape(B * Q, D)
        cls_pad = pallas_linear(hs2, kp["class_w_pad"], kp["class_b_pad"])
        pred_logits = cls_pad[:, :num_classes_p1].reshape(B, Q, num_classes_p1)
        pred_boxes = fused_bbox_mlp(hs2, kp)[:, :4].reshape(B, Q, 4)

    out = {"pred_logits": pred_logits, "pred_boxes": pred_boxes}
    # TODO(synk): aux_loss=False path only; self_attn module unused (self_attn=False).
    self_attn = None
    return out, hs_bf.astype(jnp.float32), attn, self_attn


# --------------------------------------------------------------------------
if __name__ == "__main__":
    B, T, P, FEAT_DIM = 2, 4, 16, 32
    HIDDEN, NUM_CLASSES, NUM_QUERIES, NUM_DEC_LAYERS = 32, 5, 4, 2

    key = jax.random.PRNGKey(0)
    pkey, xkey = jax.random.split(key)
    params = init_params(pkey,
                         feature_dim=FEAT_DIM, hidden_dim=HIDDEN,
                         num_classes=NUM_CLASSES, num_queries=NUM_QUERIES,
                         num_frames=T, patches_per_frame=P,
                         num_decoder_layers=NUM_DEC_LAYERS)
    kparams = prepare_params(params)          # one-time weight repack (outside jit)
    features = jax.random.normal(xkey, (B, T, P, FEAT_DIM), jnp.float32)

    fwd = jax.jit(functools.partial(obj_decoder_forward,
                                    num_classes_p1=NUM_CLASSES + 1))
    out, hs, attn, self_attn = fwd(kparams, features)
    jax.block_until_ready((out, hs, attn))

    assert out["pred_logits"].shape == (B * T, NUM_QUERIES, NUM_CLASSES + 1)
    assert out["pred_boxes"].shape == (B * T, NUM_QUERIES, 4)
    assert hs.shape == (NUM_DEC_LAYERS, B, NUM_QUERIES, HIDDEN)
    assert attn.shape == (B, NUM_QUERIES, T * P)
    print("KERNEL_OK")
</pallas_src>

<mosaic_0001>
module attributes {stable_mosaic.version = 11 : i64} {
  func.func @_proj_pos_kernel(%arg0: i32, %arg1: i32, %arg2: memref<1x64x32xf32, #tpu.memory_space<vmem>>, %arg3: memref<32x32xbf16, #tpu.memory_space<vmem>>, %arg4: memref<64x32xf32, #tpu.memory_space<vmem>>, %arg5: memref<1x64x32xbf16, #tpu.memory_space<vmem>>) attributes {dimension_semantics = [#tpu.dimension_semantics<parallel>, #tpu.dimension_semantics<parallel>], iteration_bounds = array<i64: 2, 1>, scalar_prefetch = 0 : i64, scratch_operands = 0 : i64, tpu.core_type = #tpu.core_type<tc>, window_params = [{transform_indices = @transform_0, window_bounds = array<i64: 1, 64, 32>}, {pipeline_mode = #tpu.pipeline_mode<synchronous>, transform_indices = @transform_1, window_bounds = array<i64: 32, 32>}, {transform_indices = @transform_2, window_bounds = array<i64: 64, 32>}, {transform_indices = @transform_3, window_bounds = array<i64: 1, 64, 32>}]} {
    %c0 = arith.constant 0 : index
    %c0_0 = arith.constant 0 : index
    %c0_1 = arith.constant 0 : index
    %0 = vector.load %arg2[%c0, %c0_0, %c0_1] : memref<1x64x32xf32, #tpu.memory_space<vmem>>, vector<1x64x32xf32>
    %1 = vector.shape_cast %0 : vector<1x64x32xf32> to vector<64x32xf32>
    %2 = arith.truncf %1 : vector<64x32xf32> to vector<64x32xbf16>
    %c0_2 = arith.constant 0 : index
    %c0_3 = arith.constant 0 : index
    %3 = vector.load %arg3[%c0_2, %c0_3] : memref<32x32xbf16, #tpu.memory_space<vmem>>, vector<32x32xbf16>
    %cst = arith.constant dense<0.000000e+00> : vector<64x32xf32>
    %4 = tpu.matmul %2, %3, %cst {dimension_numbers = #tpu.dot_dimension_numbers<[1], [0], [0], [1], [0, 0, 1, 1], [], []>} : vector<64x32xbf16>, vector<32x32xbf16>, vector<64x32xf32> -> vector<64x32xf32>
    %c0_4 = arith.constant 0 : index
    %c0_5 = arith.constant 0 : index
    %5 = vector.load %arg4[%c0_4, %c0_5] : memref<64x32xf32, #tpu.memory_space<vmem>>, vector<64x32xf32>
    %6 = arith.addf %4, %5 : vector<64x32xf32>
    %7 = arith.truncf %6 : vector<64x32xf32> to vector<64x32xbf16>
    %c0_6 = arith.constant 0 : index
    %c0_7 = arith.constant 0 : index
    %c0_8 = arith.constant 0 : index
    %8 = vector.load %arg5[%c0_6, %c0_7, %c0_8] : memref<1x64x32xbf16, #tpu.memory_space<vmem>>, vector<1x64x32xbf16>
    %9 = vector.shape_cast %8 : vector<1x64x32xbf16> to vector<64x32xbf16>
    %10 = vector.shape_cast %7 : vector<64x32xbf16> to vector<1x64x32xbf16>
    tpu.vector_store %arg5[%c0_6, %c0_7, %c0_8], %10 {strides = array<i32>} : memref<1x64x32xbf16, #tpu.memory_space<vmem>>, vector<1x64x32xbf16>,
    return
  }
  func.func @transform_0(%arg0: i32, %arg1: i32) -> (i32, i32, i32) {
    %c0_i32 = arith.constant 0 : i32
    %c0_i32_0 = arith.constant 0 : i32
    return %arg0, %arg1, %c0_i32 : i32, i32, i32
  }
  func.func @transform_1(%arg0: i32, %arg1: i32) -> (i32, i32) {
    %c0_i32 = arith.constant 0 : i32
    %c0_i32_0 = arith.constant 0 : i32
    %c0_i32_1 = arith.constant 0 : i32
    return %c0_i32, %c0_i32_0 : i32, i32
  }
  func.func @transform_2(%arg0: i32, %arg1: i32) -> (i32, i32) {
    %c0_i32 = arith.constant 0 : i32
    %c0_i32_0 = arith.constant 0 : i32
    return %arg1, %c0_i32 : i32, i32
  }
  func.func @transform_3(%arg0: i32, %arg1: i32) -> (i32, i32, i32) {
    %c0_i32 = arith.constant 0 : i32
    %c0_i32_0 = arith.constant 0 : i32
    return %arg0, %arg1, %c0_i32 : i32, i32, i32
  }
}

module attributes {stable_mosaic.version = 11 : i64} {
  func.func @_decoder_stack_kernel(%arg0: i32, %arg1: memref<2x64x32xbf16, #tpu.memory_space<vmem>>, %arg2: memref<4x32xbf16, #tpu.memory_space<vmem>>, %arg3: memref<1x32x32xbf16, #tpu.memory_space<vmem>>, %arg4: memref<1x1x32xf32, #tpu.memory_space<vmem>>, %arg5: memref<1x32x32xbf16, #tpu.memory_space<vmem>>, %arg6: memref<1x1x32xf32, #tpu.memory_space<vmem>>, %arg7: memref<1x32x32xbf16, #tpu.memory_space<vmem>>, %arg8: memref<1x1x32xf32, #tpu.memory_space<vmem>>, %arg9: memref<1x32x32xbf16, #tpu.memory_space<vmem>>, %arg10: memref<1x1x32xf32, #tpu.memory_space<vmem>>, %arg11: memref<1x1x32xf32, #tpu.memory_space<vmem>>, %arg12: memref<1x1x32xf32, #tpu.memory_space<vmem>>, %arg13: memref<1x32x128xbf16, #tpu.memory_space<vmem>>, %arg14: memref<1x1x128xf32, #tpu.memory_space<vmem>>, %arg15: memref<1x128x32xbf16, #tpu.memory_space<vmem>>, %arg16: memref<1x1x32xf32, #tpu.memory_space<vmem>>, %arg17: memref<1x1x32xf32, #tpu.memory_space<vmem>>, %arg18: memref<1x1x32xf32, #tpu.memory_space<vmem>>, %arg19: memref<1x2x4x32xbf16, #tpu.memory_space<vmem>>, %arg20: memref<2x4x64xf32, #tpu.memory_space<vmem>>, %arg21: memref<2x4x32xf32, #tpu.memory_space<vmem>>) attributes {dimension_semantics = [#tpu.dimension_semantics<arbitrary>], iteration_bounds = array<i64: 2>, scalar_prefetch = 0 : i64, scratch_operands = 1 : i64, tpu.core_type = #tpu.core_type<tc>, window_params = [{pipeline_mode = #tpu.pipeline_mode<synchronous>, transform_indices = @transform_0, window_bounds = array<i64: 2, 64, 32>}, {pipeline_mode = #tpu.pipeline_mode<synchronous>, transform_indices = @transform_1, window_bounds = array<i64: 4, 32>}, {transform_indices = @transform_2, window_bounds = array<i64: 1, 32, 32>}, {transform_indices = @transform_3, window_bounds = array<i64: 1, 1, 32>}, {transform_indices = @transform_4, window_bounds = array<i64: 1, 32, 32>}, {transform_indices = @transform_5, window_bounds = array<i64: 1, 1, 32>}, {transform_indices = @transform_6, window_bounds = array<i64: 1, 32, 32>}, {transform_indices = @transform_7, window_bounds = array<i64: 1, 1, 32>}, {transform_indices = @transform_8, window_bounds = array<i64: 1, 32, 32>}, {transform_indices = @transform_9, window_bounds = array<i64: 1, 1, 32>}, {transform_indices = @transform_10, window_bounds = array<i64: 1, 1, 32>}, {transform_indices = @transform_11, window_bounds = array<i64: 1, 1, 32>}, {transform_indices = @transform_12, window_bounds = array<i64: 1, 32, 128>}, {transform_indices = @transform_13, window_bounds = array<i64: 1, 1, 128>}, {transform_indices = @transform_14, window_bounds = array<i64: 1, 128, 32>}, {transform_indices = @transform_15, window_bounds = array<i64: 1, 1, 32>}, {transform_indices = @transform_16, window_bounds = array<i64: 1, 1, 32>}, {transform_indices = @transform_17, window_bounds = array<i64: 1, 1, 32>}, {transform_indices = @transform_18, window_bounds = array<i64: 1, 2, 4, 32>}, {pipeline_mode = #tpu.pipeline_mode<synchronous>, transform_indices = @transform_19, window_bounds = array<i64: 2, 4, 64>}]} {
    %c0_i32 = arith.constant 0 : i32
    %0 = arith.cmpi eq, %arg0, %c0_i32 : i32
    %1 = arith.extui %0 : i1 to i32
    %c0_i32_0 = arith.constant 0 : i32
    %2 = arith.cmpi ne, %1, %c0_i32_0 : i32
    scf.if %2 {
      %cst_84 = arith.constant 0.000000e+00 : f32
      %143 = vector.broadcast %cst_84 : f32 to vector<2x4x32xf32>
      %c0_85 = arith.constant 0 : index
      %c0_86 = arith.constant 0 : index
      %c0_87 = arith.constant 0 : index
      %144 = vector.load %arg21[%c0_85, %c0_86, %c0_87] : memref<2x4x32xf32, #tpu.memory_space<vmem>>, vector<2x4x32xf32>
      tpu.vector_store %arg21[%c0_85, %c0_86, %c0_87], %143 {strides = array<i32>} : memref<2x4x32xf32, #tpu.memory_space<vmem>>, vector<2x4x32xf32>,
    } else {
    }
    %c0 = arith.constant 0 : index
    %c0_1 = arith.constant 0 : index
    %c0_2 = arith.constant 0 : index
    %3 = vector.load %arg21[%c0, %c0_1, %c0_2] : memref<2x4x32xf32, #tpu.memory_space<vmem>>, vector<2x4x32xf32>
    %c0_3 = arith.constant 0 : index
    %c0_4 = arith.constant 0 : index
    %c0_5 = arith.constant 0 : index
    %4 = vector.load %arg1[%c0_3, %c0_4, %c0_5] : memref<2x64x32xbf16, #tpu.memory_space<vmem>>, vector<2x64x32xbf16>
    %5 = vector.shape_cast %4 : vector<2x64x32xbf16> to vector<128x32xbf16>
    %c0_6 = arith.constant 0 : index
    %c0_7 = arith.constant 0 : index
    %c0_8 = arith.constant 0 : index
    %6 = vector.load %arg5[%c0_6, %c0_7, %c0_8] : memref<1x32x32xbf16, #tpu.memory_space<vmem>>, vector<1x32x32xbf16>
    %7 = vector.shape_cast %6 : vector<1x32x32xbf16> to vector<32x32xbf16>
    %cst = arith.constant dense<0.000000e+00> : vector<128x32xf32>
    %8 = tpu.matmul %5, %7, %cst {dimension_numbers = #tpu.dot_dimension_numbers<[1], [0], [0], [1], [0, 0, 1, 1], [], []>} : vector<128x32xbf16>, vector<32x32xbf16>, vector<128x32xf32> -> vector<128x32xf32>
    %c0_9 = arith.constant 0 : index
    %c0_10 = arith.constant 0 : index
    %c0_11 = arith.constant 0 : index
    %9 = vector.load %arg6[%c0_9, %c0_10, %c0_11] : memref<1x1x32xf32, #tpu.memory_space<vmem>>, vector<1x1x32xf32>
    %10 = vector.shape_cast %9 : vector<1x1x32xf32> to vector<1x32xf32>
    %11 = vector.broadcast %10 : vector<1x32xf32> to vector<128x32xf32>
    %12 = arith.addf %8, %11 : vector<128x32xf32>
    %13 = arith.truncf %12 : vector<128x32xf32> to vector<128x32xbf16>
    %14 = vector.shape_cast %13 : vector<128x32xbf16> to vector<2x64x32xbf16>
    %c0_12 = arith.constant 0 : index
    %c0_13 = arith.constant 0 : index
    %c0_14 = arith.constant 0 : index
    %15 = vector.load %arg7[%c0_12, %c0_13, %c0_14] : memref<1x32x32xbf16, #tpu.memory_space<vmem>>, vector<1x32x32xbf16>
    %16 = vector.shape_cast %15 : vector<1x32x32xbf16> to vector<32x32xbf16>
    %cst_15 = arith.constant dense<0.000000e+00> : vector<128x32xf32>
    %17 = tpu.matmul %5, %16, %cst_15 {dimension_numbers = #tpu.dot_dimension_numbers<[1], [0], [0], [1], [0, 0, 1, 1], [], []>} : vector<128x32xbf16>, vector<32x32xbf16>, vector<128x32xf32> -> vector<128x32xf32>
    %c0_16 = arith.constant 0 : index
    %c0_17 = arith.constant 0 : index
    %c0_18 = arith.constant 0 : index
    %18 = vector.load %arg8[%c0_16, %c0_17, %c0_18] : memref<1x1x32xf32, #tpu.memory_space<vmem>>, vector<1x1x32xf32>
    %19 = vector.shape_cast %18 : vector<1x1x32xf32> to vector<1x32xf32>
    %20 = vector.broadcast %19 : vector<1x32xf32> to vector<128x32xf32>
    %21 = arith.addf %17, %20 : vector<128x32xf32>
    %22 = arith.truncf %21 : vector<128x32xf32> to vector<128x32xbf16>
    %23 = vector.shape_cast %22 : vector<128x32xbf16> to vector<2x64x32xbf16>
    %c0_19 = arith.constant 0 : index
    %c0_20 = arith.constant 0 : index
    %24 = vector.load %arg2[%c0_19, %c0_20] : memref<4x32xbf16, #tpu.memory_space<vmem>>, vector<4x32xbf16>
    %25 = arith.extf %24 : vector<4x32xbf16> to vector<4x32xf32>
    %26 = vector.shape_cast %25 : vector<4x32xf32> to vector<1x4x32xf32>
    %27 = vector.broadcast %26 : vector<1x4x32xf32> to vector<2x4x32xf32>
    %28 = arith.addf %3, %27 : vector<2x4x32xf32>
    %29 = arith.truncf %28 : vector<2x4x32xf32> to vector<2x4x32xbf16>
    %30 = vector.shape_cast %29 : vector<2x4x32xbf16> to vector<8x32xbf16>
    %c0_21 = arith.constant 0 : index
    %c0_22 = arith.constant 0 : index
    %c0_23 = arith.constant 0 : index
    %31 = vector.load %arg3[%c0_21, %c0_22, %c0_23] : memref<1x32x32xbf16, #tpu.memory_space<vmem>>, vector<1x32x32xbf16>
    %32 = vector.shape_cast %31 : vector<1x32x32xbf16> to vector<32x32xbf16>
    %cst_24 = arith.constant dense<0.000000e+00> : vector<8x32xf32>
    %33 = tpu.matmul %30, %32, %cst_24 {dimension_numbers = #tpu.dot_dimension_numbers<[1], [0], [0], [1], [0, 0, 1, 1], [], []>} : vector<8x32xbf16>, vector<32x32xbf16>, vector<8x32xf32> -> vector<8x32xf32>
    %c0_25 = arith.constant 0 : index
    %c0_26 = arith.constant 0 : index
    %c0_27 = arith.constant 0 : index
    %34 = vector.load %arg4[%c0_25, %c0_26, %c0_27] : memref<1x1x32xf32, #tpu.memory_space<vmem>>, vector<1x1x32xf32>
    %35 = vector.shape_cast %34 : vector<1x1x32xf32> to vector<1x32xf32>
    %36 = vector.broadcast %35 : vector<1x32xf32> to vector<8x32xf32>
    %37 = arith.addf %33, %36 : vector<8x32xf32>
    %38 = arith.truncf %37 : vector<8x32xf32> to vector<8x32xbf16>
    %39 = vector.shape_cast %38 : vector<8x32xbf16> to vector<2x4x32xbf16>
    "tpu.trace_start"() <{level = 10 : i32, message = "bqd,bkd->bqk"}> : () -> ()
    %cst_28 = arith.constant dense<0.000000e+00> : vector<2x4x64xf32>
    %40 = tpu.matmul %39, %14, %cst_28 {dimension_numbers = #tpu.dot_dimension_numbers<[2], [2], [1], [1], [0, 0, 0, 1, 1, 1], [0], [0]>} : vector<2x4x32xbf16>, vector<2x64x32xbf16>, vector<2x4x64xf32> -> vector<2x4x64xf32>
    "tpu.trace_stop"() : () -> ()
    %cst_29 = arith.constant dense<0xFF800000> : vector<2x4xf32>
    %41 = vector.multi_reduction <maximumf>, %40, %cst_29 [2] : vector<2x4x64xf32> to vector<2x4xf32>
    %42 = vector.shape_cast %41 : vector<2x4xf32> to vector<2x4x1xf32>
    %43 = vector.broadcast %42 : vector<2x4x1xf32> to vector<2x4x64xf32>
    %44 = arith.subf %40, %43 : vector<2x4x64xf32>
    %45 = math.exp %44 : vector<2x4x64xf32>
    %cst_30 = arith.constant dense<0.000000e+00> : vector<2x4xf32>
    %46 = vector.multi_reduction <add>, %45, %cst_30 [2] : vector<2x4x64xf32> to vector<2x4xf32>
    %47 = vector.shape_cast %46 : vector<2x4xf32> to vector<2x4x1xf32>
    %48 = vector.broadcast %47 : vector<2x4x1xf32> to vector<2x4x64xf32>
    %49 = arith.divf %45, %48 : vector<2x4x64xf32>
    %50 = arith.truncf %49 : vector<2x4x64xf32> to vector<2x4x64xbf16>
    "tpu.trace_start"() <{level = 10 : i32, message = "bqk,bkd->bqd"}> : () -> ()
    %cst_31 = arith.constant dense<0.000000e+00> : vector<2x4x32xf32>
    %51 = tpu.matmul %50, %23, %cst_31 {dimension_numbers = #tpu.dot_dimension_numbers<[2], [1], [1], [2], [0, 0, 0, 1, 1, 2], [0], [0]>} : vector<2x4x64xbf16>, vector<2x64x32xbf16>, vector<2x4x32xf32> -> vector<2x4x32xf32>
    "tpu.trace_stop"() : () -> ()
    %52 = vector.shape_cast %51 : vector<2x4x32xf32> to vector<8x32xf32>
    %53 = arith.truncf %52 : vector<8x32xf32> to vector<8x32xbf16>
    %c0_32 = arith.constant 0 : index
    %c0_33 = arith.constant 0 : index
    %c0_34 = arith.constant 0 : index
    %54 = vector.load %arg9[%c0_32, %c0_33, %c0_34] : memref<1x32x32xbf16, #tpu.memory_space<vmem>>, vector<1x32x32xbf16>
    %55 = vector.shape_cast %54 : vector<1x32x32xbf16> to vector<32x32xbf16>
    %cst_35 = arith.constant dense<0.000000e+00> : vector<8x32xf32>
    %56 = tpu.matmul %53, %55, %cst_35 {dimension_numbers = #tpu.dot_dimension_numbers<[1], [0], [0], [1], [0, 0, 1, 1], [], []>} : vector<8x32xbf16>, vector<32x32xbf16>, vector<8x32xf32> -> vector<8x32xf32>
    %c0_36 = arith.constant 0 : index
    %c0_37 = arith.constant 0 : index
    %c0_38 = arith.constant 0 : index
    %57 = vector.load %arg10[%c0_36, %c0_37, %c0_38] : memref<1x1x32xf32, #tpu.memory_space<vmem>>, vector<1x1x32xf32>
    %58 = vector.shape_cast %57 : vector<1x1x32xf32> to vector<1x32xf32>
    %59 = vector.broadcast %58 : vector<1x32xf32> to vector<8x32xf32>
    %60 = arith.addf %56, %59 : vector<8x32xf32>
    %61 = vector.shape_cast %3 : vector<2x4x32xf32> to vector<8x32xf32>
    %62 = arith.addf %61, %60 : vector<8x32xf32>
    %c0_39 = arith.constant 0 : index
    %c0_40 = arith.constant 0 : index
    %c0_41 = arith.constant 0 : index
    %63 = vector.load %arg11[%c0_39, %c0_40, %c0_41] : memref<1x1x32xf32, #tpu.memory_space<vmem>>, vector<1x1x32xf32>
    %64 = vector.shape_cast %63 : vector<1x1x32xf32> to vector<1x32xf32>
    %c0_42 = arith.constant 0 : index
    %c0_43 = arith.constant 0 : index
    %c0_44 = arith.constant 0 : index
    %65 = vector.load %arg12[%c0_42, %c0_43, %c0_44] : memref<1x1x32xf32, #tpu.memory_space<vmem>>, vector<1x1x32xf32>
    %66 = vector.shape_cast %65 : vector<1x1x32xf32> to vector<1x32xf32>
    %cst_45 = arith.constant dense<0.000000e+00> : vector<8xf32>
    %67 = vector.multi_reduction <add>, %62, %cst_45 [1] : vector<8x32xf32> to vector<8xf32>
    %68 = vector.shape_cast %67 : vector<8xf32> to vector<8x1xf32>
    %cst_46 = arith.constant 3.200000e+01 : f32
    %69 = vector.broadcast %cst_46 : f32 to vector<8x1xf32>
    %70 = arith.divf %68, %69 : vector<8x1xf32>
    %71 = vector.broadcast %70 : vector<8x1xf32> to vector<8x32xf32>
    %72 = arith.subf %62, %71 : vector<8x32xf32>
    %73 = arith.mulf %72, %72 : vector<8x32xf32>
    %cst_47 = arith.constant dense<0.000000e+00> : vector<8xf32>
    %74 = vector.multi_reduction <add>, %73, %cst_47 [1] : vector<8x32xf32> to vector<8xf32>
    %75 = vector.shape_cast %74 : vector<8xf32> to vector<8x1xf32>
    %cst_48 = arith.constant 3.200000e+01 : f32
    %76 = vector.broadcast %cst_48 : f32 to vector<8x1xf32>
    %77 = arith.divf %75, %76 : vector<8x1xf32>
    %78 = vector.broadcast %70 : vector<8x1xf32> to vector<8x32xf32>
    %79 = arith.subf %62, %78 : vector<8x32xf32>
    %cst_49 = arith.constant 9.99999974E-6 : f32
    %80 = vector.broadcast %cst_49 : f32 to vector<8x1xf32>
    %81 = arith.addf %77, %80 : vector<8x1xf32>
    %82 = math.rsqrt %81 : vector<8x1xf32>
    %83 = vector.broadcast %82 : vector<8x1xf32> to vector<8x32xf32>
    %84 = arith.mulf %79, %83 : vector<8x32xf32>
    %85 = vector.broadcast %64 : vector<1x32xf32> to vector<8x32xf32>
    %86 = arith.mulf %84, %85 : vector<8x32xf32>
    %87 = vector.broadcast %66 : vector<1x32xf32> to vector<8x32xf32>
    %88 = arith.addf %86, %87 : vector<8x32xf32>
    %89 = arith.truncf %88 : vector<8x32xf32> to vector<8x32xbf16>
    %c0_50 = arith.constant 0 : index
    %c0_51 = arith.constant 0 : index
    %c0_52 = arith.constant 0 : index
    %90 = vector.load %arg13[%c0_50, %c0_51, %c0_52] : memref<1x32x128xbf16, #tpu.memory_space<vmem>>, vector<1x32x128xbf16>
    %91 = vector.shape_cast %90 : vector<1x32x128xbf16> to vector<32x128xbf16>
    %cst_53 = arith.constant dense<0.000000e+00> : vector<8x128xf32>
    %92 = tpu.matmul %89, %91, %cst_53 {dimension_numbers = #tpu.dot_dimension_numbers<[1], [0], [0], [1], [0, 0, 1, 1], [], []>} : vector<8x32xbf16>, vector<32x128xbf16>, vector<8x128xf32> -> vector<8x128xf32>
    %c0_54 = arith.constant 0 : index
    %c0_55 = arith.constant 0 : index
    %c0_56 = arith.constant 0 : index
    %93 = vector.load %arg14[%c0_54, %c0_55, %c0_56] : memref<1x1x128xf32, #tpu.memory_space<vmem>>, vector<1x1x128xf32>
    %94 = vector.shape_cast %93 : vector<1x1x128xf32> to vector<1x128xf32>
    %95 = vector.broadcast %94 : vector<1x128xf32> to vector<8x128xf32>
    %96 = arith.addf %92, %95 : vector<8x128xf32>
    %cst_57 = arith.constant 0.000000e+00 : f32
    %97 = vector.broadcast %cst_57 : f32 to vector<8x128xf32>
    %98 = arith.maximumf %96, %97 : vector<8x128xf32>
    %99 = arith.truncf %98 : vector<8x128xf32> to vector<8x128xbf16>
    %c0_58 = arith.constant 0 : index
    %c0_59 = arith.constant 0 : index
    %c0_60 = arith.constant 0 : index
    %100 = vector.load %arg15[%c0_58, %c0_59, %c0_60] : memref<1x128x32xbf16, #tpu.memory_space<vmem>>, vector<1x128x32xbf16>
    %101 = vector.shape_cast %100 : vector<1x128x32xbf16> to vector<128x32xbf16>
    %cst_61 = arith.constant dense<0.000000e+00> : vector<8x32xf32>
    %102 = tpu.matmul %99, %101, %cst_61 {dimension_numbers = #tpu.dot_dimension_numbers<[1], [0], [0], [1], [0, 0, 1, 1], [], []>} : vector<8x128xbf16>, vector<128x32xbf16>, vector<8x32xf32> -> vector<8x32xf32>
    %c0_62 = arith.constant 0 : index
    %c0_63 = arith.constant 0 : index
    %c0_64 = arith.constant 0 : index
    %103 = vector.load %arg16[%c0_62, %c0_63, %c0_64] : memref<1x1x32xf32, #tpu.memory_space<vmem>>, vector<1x1x32xf32>
    %104 = vector.shape_cast %103 : vector<1x1x32xf32> to vector<1x32xf32>
    %105 = vector.broadcast %104 : vector<1x32xf32> to vector<8x32xf32>
    %106 = arith.addf %102, %105 : vector<8x32xf32>
    %107 = arith.addf %88, %106 : vector<8x32xf32>
    %c0_65 = arith.constant 0 : index
    %c0_66 = arith.constant 0 : index
    %c0_67 = arith.constant 0 : index
    %108 = vector.load %arg17[%c0_65, %c0_66, %c0_67] : memref<1x1x32xf32, #tpu.memory_space<vmem>>, vector<1x1x32xf32>
    %109 = vector.shape_cast %108 : vector<1x1x32xf32> to vector<1x32xf32>
    %c0_68 = arith.constant 0 : index
    %c0_69 = arith.constant 0 : index
    %c0_70 = arith.constant 0 : index
    %110 = vector.load %arg18[%c0_68, %c0_69, %c0_70] : memref<1x1x32xf32, #tpu.memory_space<vmem>>, vector<1x1x32xf32>
    %111 = vector.shape_cast %110 : vector<1x1x32xf32> to vector<1x32xf32>
    %cst_71 = arith.constant dense<0.000000e+00> : vector<8xf32>
    %112 = vector.multi_reduction <add>, %107, %cst_71 [1] : vector<8x32xf32> to vector<8xf32>
    %113 = vector.shape_cast %112 : vector<8xf32> to vector<8x1xf32>
    %cst_72 = arith.constant 3.200000e+01 : f32
    %114 = vector.broadcast %cst_72 : f32 to vector<8x1xf32>
    %115 = arith.divf %113, %114 : vector<8x1xf32>
    %116 = vector.broadcast %115 : vector<8x1xf32> to vector<8x32xf32>
    %117 = arith.subf %107, %116 : vector<8x32xf32>
    %118 = arith.mulf %117, %117 : vector<8x32xf32>
    %cst_73 = arith.constant dense<0.000000e+00> : vector<8xf32>
    %119 = vector.multi_reduction <add>, %118, %cst_73 [1] : vector<8x32xf32> to vector<8xf32>
    %120 = vector.shape_cast %119 : vector<8xf32> to vector<8x1xf32>
    %cst_74 = arith.constant 3.200000e+01 : f32
    %121 = vector.broadcast %cst_74 : f32 to vector<8x1xf32>
    %122 = arith.divf %120, %121 : vector<8x1xf32>
    %123 = vector.broadcast %115 : vector<8x1xf32> to vector<8x32xf32>
    %124 = arith.subf %107, %123 : vector<8x32xf32>
    %cst_75 = arith.constant 9.99999974E-6 : f32
    %125 = vector.broadcast %cst_75 : f32 to vector<8x1xf32>
    %126 = arith.addf %122, %125 : vector<8x1xf32>
    %127 = math.rsqrt %126 : vector<8x1xf32>
    %128 = vector.broadcast %127 : vector<8x1xf32> to vector<8x32xf32>
    %129 = arith.mulf %124, %128 : vector<8x32xf32>
    %130 = vector.broadcast %109 : vector<1x32xf32> to vector<8x32xf32>
    %131 = arith.mulf %129, %130 : vector<8x32xf32>
    %132 = vector.broadcast %111 : vector<1x32xf32> to vector<8x32xf32>
    %133 = arith.addf %131, %132 : vector<8x32xf32>
    %134 = vector.shape_cast %133 : vector<8x32xf32> to vector<2x4x32xf32>
    %c0_76 = arith.constant 0 : index
    %c0_77 = arith.constant 0 : index
    %c0_78 = arith.constant 0 : index
    %135 = vector.load %arg21[%c0_76, %c0_77, %c0_78] : memref<2x4x32xf32, #tpu.memory_space<vmem>>, vector<2x4x32xf32>
    tpu.vector_store %arg21[%c0_76, %c0_77, %c0_78], %134 {strides = array<i32>} : memref<2x4x32xf32, #tpu.memory_space<vmem>>, vector<2x4x32xf32>,
    %136 = arith.truncf %134 : vector<2x4x32xf32> to vector<2x4x32xbf16>
    %c0_79 = arith.constant 0 : index
    %c0_80 = arith.constant 0 : index
    %c0_81 = arith.constant 0 : index
    %c0_82 = arith.constant 0 : index
    %137 = vector.load %arg19[%c0_79, %c0_80, %c0_81, %c0_82] : memref<1x2x4x32xbf16, #tpu.memory_space<vmem>>, vector<1x2x4x32xbf16>
    %138 = vector.shape_cast %137 : vector<1x2x4x32xbf16> to vector<2x4x32xbf16>
    %139 = vector.shape_cast %136 : vector<2x4x32xbf16> to vector<1x2x4x32xbf16>
    tpu.vector_store %arg19[%c0_79, %c0_80, %c0_81, %c0_82], %139 {strides = array<i32>} : memref<1x2x4x32xbf16, #tpu.memory_space<vmem>>, vector<1x2x4x32xbf16>,
    %c1_i32 = arith.constant 1 : i32
    %140 = arith.cmpi eq, %arg0, %c1_i32 : i32
    %141 = arith.extui %140 : i1 to i32
    %c0_i32_83 = arith.constant 0 : i32
    %142 = arith.cmpi ne, %141, %c0_i32_83 : i32
    scf.if %142 {
      %c0_84 = arith.constant 0 : index
      %c0_85 = arith.constant 0 : index
      %c0_86 = arith.constant 0 : index
      %143 = vector.load %arg20[%c0_84, %c0_85, %c0_86] : memref<2x4x64xf32, #tpu.memory_space<vmem>>, vector<2x4x64xf32>
      tpu.vector_store %arg20[%c0_84, %c0_85, %c0_86], %49 {strides = array<i32>} : memref<2x4x64xf32, #tpu.memory_space<vmem>>, vector<2x4x64xf32>,
    } else {
    }
    return
  }
  func.func @transform_0(%arg0: i32) -> (i32, i32, i32) {
    %c0_i32 = arith.constant 0 : i32
    %c0_i32_0 = arith.constant 0 : i32
    %c0_i32_1 = arith.constant 0 : i32
    %c0_i32_2 = arith.constant 0 : i32
    return %c0_i32, %c0_i32_0, %c0_i32_1 : i32, i32, i32
  }
  func.func @transform_1(%arg0: i32) -> (i32, i32) {
    %c0_i32 = arith.constant 0 : i32
    %c0_i32_0 = arith.constant 0 : i32
    %c0_i32_1 = arith.constant 0 : i32
    return %c0_i32, %c0_i32_0 : i32, i32
  }
  func.func @transform_2(%arg0: i32) -> (i32, i32, i32) {
    %c0_i32 = arith.constant 0 : i32
    %c0_i32_0 = arith.constant 0 : i32
    %c0_i32_1 = arith.constant 0 : i32
    return %arg0, %c0_i32, %c0_i32_0 : i32, i32, i32
  }
  func.func @transform_3(%arg0: i32) -> (i32, i32, i32) {
    %c0_i32 = arith.constant 0 : i32
    %c0_i32_0 = arith.constant 0 : i32
    %c0_i32_1 = arith.constant 0 : i32
    return %arg0, %c0_i32, %c0_i32_0 : i32, i32, i32
  }
  func.func @transform_4(%arg0: i32) -> (i32, i32, i32) {
    %c0_i32 = arith.constant 0 : i32
    %c0_i32_0 = arith.constant 0 : i32
    %c0_i32_1 = arith.constant 0 : i32
    return %arg0, %c0_i32, %c0_i32_0 : i32, i32, i32
  }
  func.func @transform_5(%arg0: i32) -> (i32, i32, i32) {
    %c0_i32 = arith.constant 0 : i32
    %c0_i32_0 = arith.constant 0 : i32
    %c0_i32_1 = arith.constant 0 : i32
    return %arg0, %c0_i32, %c0_i32_0 : i32, i32, i32
  }
  func.func @transform_6(%arg0: i32) -> (i32, i32, i32) {
    %c0_i32 = arith.constant 0 : i32
    %c0_i32_0 = arith.constant 0 : i32
    %c0_i32_1 = arith.constant 0 : i32
    return %arg0, %c0_i32, %c0_i32_0 : i32, i32, i32
  }
  func.func @transform_7(%arg0: i32) -> (i32, i32, i32) {
    %c0_i32 = arith.constant 0 : i32
    %c0_i32_0 = arith.constant 0 : i32
    %c0_i32_1 = arith.constant 0 : i32
    return %arg0, %c0_i32, %c0_i32_0 : i32, i32, i32
  }
  func.func @transform_8(%arg0: i32) -> (i32, i32, i32) {
    %c0_i32 = arith.constant 0 : i32
    %c0_i32_0 = arith.constant 0 : i32
    %c0_i32_1 = arith.constant 0 : i32
    return %arg0, %c0_i32, %c0_i32_0 : i32, i32, i32
  }
  func.func @transform_9(%arg0: i32) -> (i32, i32, i32) {
    %c0_i32 = arith.constant 0 : i32
    %c0_i32_0 = arith.constant 0 : i32
    %c0_i32_1 = arith.constant 0 : i32
    return %arg0, %c0_i32, %c0_i32_0 : i32, i32, i32
  }
  func.func @transform_10(%arg0: i32) -> (i32, i32, i32) {
    %c0_i32 = arith.constant 0 : i32
    %c0_i32_0 = arith.constant 0 : i32
    %c0_i32_1 = arith.constant 0 : i32
    return %arg0, %c0_i32, %c0_i32_0 : i32, i32, i32
  }
  func.func @transform_11(%arg0: i32) -> (i32, i32, i32) {
    %c0_i32 = arith.constant 0 : i32
    %c0_i32_0 = arith.constant 0 : i32
    %c0_i32_1 = arith.constant 0 : i32
    return %arg0, %c0_i32, %c0_i32_0 : i32, i32, i32
  }
  func.func @transform_12(%arg0: i32) -> (i32, i32, i32) {
    %c0_i32 = arith.constant 0 : i32
    %c0_i32_0 = arith.constant 0 : i32
    %c0_i32_1 = arith.constant 0 : i32
    return %arg0, %c0_i32, %c0_i32_0 : i32, i32, i32
  }
  func.func @transform_13(%arg0: i32) -> (i32, i32, i32) {
    %c0_i32 = arith.constant 0 : i32
    %c0_i32_0 = arith.constant 0 : i32
    %c0_i32_1 = arith.constant 0 : i32
    return %arg0, %c0_i32, %c0_i32_0 : i32, i32, i32
  }
  func.func @transform_14(%arg0: i32) -> (i32, i32, i32) {
    %c0_i32 = arith.constant 0 : i32
    %c0_i32_0 = arith.constant 0 : i32
    %c0_i32_1 = arith.constant 0 : i32
    return %arg0, %c0_i32, %c0_i32_0 : i32, i32, i32
  }
  func.func @transform_15(%arg0: i32) -> (i32, i32, i32) {
    %c0_i32 = arith.constant 0 : i32
    %c0_i32_0 = arith.constant 0 : i32
    %c0_i32_1 = arith.constant 0 : i32
    return %arg0, %c0_i32, %c0_i32_0 : i32, i32, i32
  }
  func.func @transform_16(%arg0: i32) -> (i32, i32, i32) {
    %c0_i32 = arith.constant 0 : i32
    %c0_i32_0 = arith.constant 0 : i32
    %c0_i32_1 = arith.constant 0 : i32
    return %arg0, %c0_i32, %c0_i32_0 : i32, i32, i32
  }
  func.func @transform_17(%arg0: i32) -> (i32, i32, i32) {
    %c0_i32 = arith.constant 0 : i32
    %c0_i32_0 = arith.constant 0 : i32
    %c0_i32_1 = arith.constant 0 : i32
    return %arg0, %c0_i32, %c0_i32_0 : i32, i32, i32
  }
  func.func @transform_18(%arg0: i32) -> (i32, i32, i32, i32) {
    %c0_i32 = arith.constant 0 : i32
    %c0_i32_0 = arith.constant 0 : i32
    %c0_i32_1 = arith.constant 0 : i32
    %c0_i32_2 = arith.constant 0 : i32
    return %arg0, %c0_i32, %c0_i32_0, %c0_i32_1 : i32, i32, i32, i32
  }
  func.func @transform_19(%arg0: i32) -> (i32, i32, i32) {
    %c0_i32 = arith.constant 0 : i32
    %c0_i32_0 = arith.constant 0 : i32
    %c0_i32_1 = arith.constant 0 : i32
    %c0_i32_2 = arith.constant 0 : i32
    return %c0_i32, %c0_i32_0, %c0_i32_1 : i32, i32, i32
  }
}

module attributes {stable_mosaic.version = 11 : i64} {
  func.func @_traj_heads_kernel(%arg0: i32, %arg1: memref<2x4x32xbf16, #tpu.memory_space<vmem>>, %arg2: memref<32x128xbf16, #tpu.memory_space<vmem>>, %arg3: memref<1x128xf32, #tpu.memory_space<vmem>>, %arg4: memref<32x32xbf16, #tpu.memory_space<vmem>>, %arg5: memref<1x32xf32, #tpu.memory_space<vmem>>, %arg6: memref<1x1x32xf32, #tpu.memory_space<vmem>>, %arg7: memref<32x32xbf16, #tpu.memory_space<vmem>>, %arg8: memref<1x32xf32, #tpu.memory_space<vmem>>, %arg9: memref<32x32xbf16, #tpu.memory_space<vmem>>, %arg10: memref<1x32xf32, #tpu.memory_space<vmem>>, %arg11: memref<32x128xbf16, #tpu.memory_space<vmem>>, %arg12: memref<1x128xf32, #tpu.memory_space<vmem>>, %arg13: memref<2x4x128xf32, #tpu.memory_space<vmem>>, %arg14: memref<2x1x4x128xf32, #tpu.memory_space<vmem>>, %arg15: memref<2x4x32xf32, #tpu.memory_space<vmem>>) attributes {dimension_semantics = [#tpu.dimension_semantics<arbitrary>], iteration_bounds = array<i64: 4>, scalar_prefetch = 0 : i64, scratch_operands = 1 : i64, tpu.core_type = #tpu.core_type<tc>, window_params = [{pipeline_mode = #tpu.pipeline_mode<synchronous>, transform_indices = @transform_0, window_bounds = array<i64: 2, 4, 32>}, {pipeline_mode = #tpu.pipeline_mode<synchronous>, transform_indices = @transform_1, window_bounds = array<i64: 32, 128>}, {pipeline_mode = #tpu.pipeline_mode<synchronous>, transform_indices = @transform_2, window_bounds = array<i64: 1, 128>}, {pipeline_mode = #tpu.pipeline_mode<synchronous>, transform_indices = @transform_3, window_bounds = array<i64: 32, 32>}, {pipeline_mode = #tpu.pipeline_mode<synchronous>, transform_indices = @transform_4, window_bounds = array<i64: 1, 32>}, {transform_indices = @transform_5, window_bounds = array<i64: 1, 1, 32>}, {pipeline_mode = #tpu.pipeline_mode<synchronous>, transform_indices = @transform_6, window_bounds = array<i64: 32, 32>}, {pipeline_mode = #tpu.pipeline_mode<synchronous>, transform_indices = @transform_7, window_bounds = array<i64: 1, 32>}, {pipeline_mode = #tpu.pipeline_mode<synchronous>, transform_indices = @transform_8, window_bounds = array<i64: 32, 32>}, {pipeline_mode = #tpu.pipeline_mode<synchronous>, transform_indices = @transform_9, window_bounds = array<i64: 1, 32>}, {pipeline_mode = #tpu.pipeline_mode<synchronous>, transform_indices = @transform_10, window_bounds = array<i64: 32, 128>}, {pipeline_mode = #tpu.pipeline_mode<synchronous>, transform_indices = @transform_11, window_bounds = array<i64: 1, 128>}, {pipeline_mode = #tpu.pipeline_mode<synchronous>, transform_indices = @transform_12, window_bounds = array<i64: 2, 4, 128>}, {transform_indices = @transform_13, window_bounds = array<i64: 2, 1, 4, 128>}]} {
    %c0 = arith.constant 0 : index
    %c0_0 = arith.constant 0 : index
    %c0_1 = arith.constant 0 : index
    %0 = vector.load %arg1[%c0, %c0_0, %c0_1] : memref<2x4x32xbf16, #tpu.memory_space<vmem>>, vector<2x4x32xbf16>
    %1 = vector.shape_cast %0 : vector<2x4x32xbf16> to vector<8x32xbf16>
    %c0_i32 = arith.constant 0 : i32
    %2 = arith.cmpi eq, %arg0, %c0_i32 : i32
    %3 = arith.extui %2 : i1 to i32
    %c0_i32_2 = arith.constant 0 : i32
    %4 = arith.cmpi ne, %3, %c0_i32_2 : i32
    scf.if %4 {
      %c0_30 = arith.constant 0 : index
      %c0_31 = arith.constant 0 : index
      %40 = vector.load %arg2[%c0_30, %c0_31] : memref<32x128xbf16, #tpu.memory_space<vmem>>, vector<32x128xbf16>
      %cst_32 = arith.constant dense<0.000000e+00> : vector<8x128xf32>
      %41 = tpu.matmul %1, %40, %cst_32 {dimension_numbers = #tpu.dot_dimension_numbers<[1], [0], [0], [1], [0, 0, 1, 1], [], []>} : vector<8x32xbf16>, vector<32x128xbf16>, vector<8x128xf32> -> vector<8x128xf32>
      %c0_33 = arith.constant 0 : index
      %c0_34 = arith.constant 0 : index
      %42 = vector.load %arg3[%c0_33, %c0_34] : memref<1x128xf32, #tpu.memory_space<vmem>>, vector<1x128xf32>
      %43 = vector.broadcast %42 : vector<1x128xf32> to vector<8x128xf32>
      %44 = arith.addf %41, %43 : vector<8x128xf32>
      %45 = vector.shape_cast %44 : vector<8x128xf32> to vector<2x4x128xf32>
      %c0_35 = arith.constant 0 : index
      %c0_36 = arith.constant 0 : index
      %c0_37 = arith.constant 0 : index
      %46 = vector.load %arg13[%c0_35, %c0_36, %c0_37] : memref<2x4x128xf32, #tpu.memory_space<vmem>>, vector<2x4x128xf32>
      tpu.vector_store %arg13[%c0_35, %c0_36, %c0_37], %45 {strides = array<i32>} : memref<2x4x128xf32, #tpu.memory_space<vmem>>, vector<2x4x128xf32>,
      %c0_38 = arith.constant 0 : index
      %c0_39 = arith.constant 0 : index
      %47 = vector.load %arg4[%c0_38, %c0_39] : memref<32x32xbf16, #tpu.memory_space<vmem>>, vector<32x32xbf16>
      %cst_40 = arith.constant dense<0.000000e+00> : vector<8x32xf32>
      %48 = tpu.matmul %1, %47, %cst_40 {dimension_numbers = #tpu.dot_dimension_numbers<[1], [0], [0], [1], [0, 0, 1, 1], [], []>} : vector<8x32xbf16>, vector<32x32xbf16>, vector<8x32xf32> -> vector<8x32xf32>
      %c0_41 = arith.constant 0 : index
      %c0_42 = arith.constant 0 : index
      %49 = vector.load %arg5[%c0_41, %c0_42] : memref<1x32xf32, #tpu.memory_space<vmem>>, vector<1x32xf32>
      %50 = vector.broadcast %49 : vector<1x32xf32> to vector<8x32xf32>
      %51 = arith.addf %48, %50 : vector<8x32xf32>
      %52 = vector.shape_cast %51 : vector<8x32xf32> to vector<2x4x32xf32>
      %c0_43 = arith.constant 0 : index
      %c0_44 = arith.constant 0 : index
      %c0_45 = arith.constant 0 : index
      %53 = vector.load %arg15[%c0_43, %c0_44, %c0_45] : memref<2x4x32xf32, #tpu.memory_space<vmem>>, vector<2x4x32xf32>
      tpu.vector_store %arg15[%c0_43, %c0_44, %c0_45], %52 {strides = array<i32>} : memref<2x4x32xf32, #tpu.memory_space<vmem>>, vector<2x4x32xf32>,
    } else {
    }
    %c0_3 = arith.constant 0 : index
    %c0_4 = arith.constant 0 : index
    %c0_5 = arith.constant 0 : index
    %5 = vector.load %arg15[%c0_3, %c0_4, %c0_5] : memref<2x4x32xf32, #tpu.memory_space<vmem>>, vector<2x4x32xf32>
    %6 = vector.shape_cast %5 : vector<2x4x32xf32> to vector<8x32xf32>
    %c0_6 = arith.constant 0 : index
    %c0_7 = arith.constant 0 : index
    %c0_8 = arith.constant 0 : index
    %7 = vector.load %arg6[%c0_6, %c0_7, %c0_8] : memref<1x1x32xf32, #tpu.memory_space<vmem>>, vector<1x1x32xf32>
    %8 = vector.shape_cast %7 : vector<1x1x32xf32> to vector<1x32xf32>
    %9 = vector.broadcast %8 : vector<1x32xf32> to vector<8x32xf32>
    %10 = arith.addf %6, %9 : vector<8x32xf32>
    %11 = arith.truncf %10 : vector<8x32xf32> to vector<8x32xbf16>
    %c0_9 = arith.constant 0 : index
    %c0_10 = arith.constant 0 : index
    %12 = vector.load %arg7[%c0_9, %c0_10] : memref<32x32xbf16, #tpu.memory_space<vmem>>, vector<32x32xbf16>
    %cst = arith.constant dense<0.000000e+00> : vector<8x32xf32>
    %13 = tpu.matmul %11, %12, %cst {dimension_numbers = #tpu.dot_dimension_numbers<[1], [0], [0], [1], [0, 0, 1, 1], [], []>} : vector<8x32xbf16>, vector<32x32xbf16>, vector<8x32xf32> -> vector<8x32xf32>
    %c0_11 = arith.constant 0 : index
    %c0_12 = arith.constant 0 : index
    %14 = vector.load %arg8[%c0_11, %c0_12] : memref<1x32xf32, #tpu.memory_space<vmem>>, vector<1x32xf32>
    %15 = vector.broadcast %14 : vector<1x32xf32> to vector<8x32xf32>
    %16 = arith.addf %13, %15 : vector<8x32xf32>
    %cst_13 = arith.constant 0.000000e+00 : f32
    %17 = vector.broadcast %cst_13 : f32 to vector<8x32xf32>
    %18 = arith.maximumf %16, %17 : vector<8x32xf32>
    %19 = arith.truncf %18 : vector<8x32xf32> to vector<8x32xbf16>
    %c0_14 = arith.constant 0 : index
    %c0_15 = arith.constant 0 : index
    %20 = vector.load %arg9[%c0_14, %c0_15] : memref<32x32xbf16, #tpu.memory_space<vmem>>, vector<32x32xbf16>
    %cst_16 = arith.constant dense<0.000000e+00> : vector<8x32xf32>
    %21 = tpu.matmul %19, %20, %cst_16 {dimension_numbers = #tpu.dot_dimension_numbers<[1], [0], [0], [1], [0, 0, 1, 1], [], []>} : vector<8x32xbf16>, vector<32x32xbf16>, vector<8x32xf32> -> vector<8x32xf32>
    %c0_17 = arith.constant 0 : index
    %c0_18 = arith.constant 0 : index
    %22 = vector.load %arg10[%c0_17, %c0_18] : memref<1x32xf32, #tpu.memory_space<vmem>>, vector<1x32xf32>
    %23 = vector.broadcast %22 : vector<1x32xf32> to vector<8x32xf32>
    %24 = arith.addf %21, %23 : vector<8x32xf32>
    %cst_19 = arith.constant 0.000000e+00 : f32
    %25 = vector.broadcast %cst_19 : f32 to vector<8x32xf32>
    %26 = arith.maximumf %24, %25 : vector<8x32xf32>
    %27 = arith.truncf %26 : vector<8x32xf32> to vector<8x32xbf16>
    %c0_20 = arith.constant 0 : index
    %c0_21 = arith.constant 0 : index
    %28 = vector.load %arg11[%c0_20, %c0_21] : memref<32x128xbf16, #tpu.memory_space<vmem>>, vector<32x128xbf16>
    %cst_22 = arith.constant dense<0.000000e+00> : vector<8x128xf32>
    %29 = tpu.matmul %27, %28, %cst_22 {dimension_numbers = #tpu.dot_dimension_numbers<[1], [0], [0], [1], [0, 0, 1, 1], [], []>} : vector<8x32xbf16>, vector<32x128xbf16>, vector<8x128xf32> -> vector<8x128xf32>
    %c0_23 = arith.constant 0 : index
    %c0_24 = arith.constant 0 : index
    %30 = vector.load %arg12[%c0_23, %c0_24] : memref<1x128xf32, #tpu.memory_space<vmem>>, vector<1x128xf32>
    %31 = vector.broadcast %30 : vector<1x128xf32> to vector<8x128xf32>
    %32 = arith.addf %29, %31 : vector<8x128xf32>
    %33 = arith.negf %32 : vector<8x128xf32>
    %34 = math.exp %33 : vector<8x128xf32>
    %cst_25 = arith.constant 1.000000e+00 : f32
    %35 = vector.broadcast %cst_25 : f32 to vector<8x128xf32>
    %36 = arith.addf %35, %34 : vector<8x128xf32>
    %37 = arith.divf %35, %36 : vector<8x128xf32>
    %38 = vector.shape_cast %37 : vector<8x128xf32> to vector<2x1x4x128xf32>
    %c0_26 = arith.constant 0 : index
    %c0_27 = arith.constant 0 : index
    %c0_28 = arith.constant 0 : index
    %c0_29 = arith.constant 0 : index
    %39 = vector.load %arg14[%c0_26, %c0_27, %c0_28, %c0_29] : memref<2x1x4x128xf32, #tpu.memory_space<vmem>>, vector<2x1x4x128xf32>
    tpu.vector_store %arg14[%c0_26, %c0_27, %c0_28, %c0_29], %38 {strides = array<i32>} : memref<2x1x4x128xf32, #tpu.memory_space<vmem>>, vector<2x1x4x128xf32>,
    return
  }
  func.func @transform_0(%arg0: i32) -> (i32, i32, i32) {
    %c0_i32 = arith.constant 0 : i32
    %c0_i32_0 = arith.constant 0 : i32
    %c0_i32_1 = arith.constant 0 : i32
    %c0_i32_2 = arith.constant 0 : i32
    return %c0_i32, %c0_i32_0, %c0_i32_1 : i32, i32, i32
  }
  func.func @transform_1(%arg0: i32) -> (i32, i32) {
    %c0_i32 = arith.constant 0 : i32
    %c0_i32_0 = arith.constant 0 : i32
    %c0_i32_1 = arith.constant 0 : i32
    return %c0_i32, %c0_i32_0 : i32, i32
  }
  func.func @transform_2(%arg0: i32) -> (i32, i32) {
    %c0_i32 = arith.constant 0 : i32
    %c0_i32_0 = arith.constant 0 : i32
    %c0_i32_1 = arith.constant 0 : i32
    return %c0_i32, %c0_i32_0 : i32, i32
  }
  func.func @transform_3(%arg0: i32) -> (i32, i32) {
    %c0_i32 = arith.constant 0 : i32
    %c0_i32_0 = arith.constant 0 : i32
    %c0_i32_1 = arith.constant 0 : i32
    return %c0_i32, %c0_i32_0 : i32, i32
  }
  func.func @transform_4(%arg0: i32) -> (i32, i32) {
    %c0_i32 = arith.constant 0 : i32
    %c0_i32_0 = arith.constant 0 : i32
    %c0_i32_1 = arith.constant 0 : i32
    return %c0_i32, %c0_i32_0 : i32, i32
  }
  func.func @transform_5(%arg0: i32) -> (i32, i32, i32) {
    %c0_i32 = arith.constant 0 : i32
    %c0_i32_0 = arith.constant 0 : i32
    %c0_i32_1 = arith.constant 0 : i32
    return %arg0, %c0_i32, %c0_i32_0 : i32, i32, i32
  }
  func.func @transform_6(%arg0: i32) -> (i32, i32) {
    %c0_i32 = arith.constant 0 : i32
    %c0_i32_0 = arith.constant 0 : i32
    %c0_i32_1 = arith.constant 0 : i32
    return %c0_i32, %c0_i32_0 : i32, i32
  }
  func.func @transform_7(%arg0: i32) -> (i32, i32) {
    %c0_i32 = arith.constant 0 : i32
    %c0_i32_0 = arith.constant 0 : i32
    %c0_i32_1 = arith.constant 0 : i32
    return %c0_i32, %c0_i32_0 : i32, i32
  }
  func.func @transform_8(%arg0: i32) -> (i32, i32) {
    %c0_i32 = arith.constant 0 : i32
    %c0_i32_0 = arith.constant 0 : i32
    %c0_i32_1 = arith.constant 0 : i32
    return %c0_i32, %c0_i32_0 : i32, i32
  }
  func.func @transform_9(%arg0: i32) -> (i32, i32) {
    %c0_i32 = arith.constant 0 : i32
    %c0_i32_0 = arith.constant 0 : i32
    %c0_i32_1 = arith.constant 0 : i32
    return %c0_i32, %c0_i32_0 : i32, i32
  }
  func.func @transform_10(%arg0: i32) -> (i32, i32) {
    %c0_i32 = arith.constant 0 : i32
    %c0_i32_0 = arith.constant 0 : i32
    %c0_i32_1 = arith.constant 0 : i32
    return %c0_i32, %c0_i32_0 : i32, i32
  }
  func.func @transform_11(%arg0: i32) -> (i32, i32) {
    %c0_i32 = arith.constant 0 : i32
    %c0_i32_0 = arith.constant 0 : i32
    %c0_i32_1 = arith.constant 0 : i32
    return %c0_i32, %c0_i32_0 : i32, i32
  }
  func.func @transform_12(%arg0: i32) -> (i32, i32, i32) {
    %c0_i32 = arith.constant 0 : i32
    %c0_i32_0 = arith.constant 0 : i32
    %c0_i32_1 = arith.constant 0 : i32
    %c0_i32_2 = arith.constant 0 : i32
    return %c0_i32, %c0_i32_0, %c0_i32_1 : i32, i32, i32
  }
  func.func @transform_13(%arg0: i32) -> (i32, i32, i32, i32) {
    %c0_i32 = arith.constant 0 : i32
    %c0_i32_0 = arith.constant 0 : i32
    %c0_i32_1 = arith.constant 0 : i32
    %c0_i32_2 = arith.constant 0 : i32
    return %c0_i32, %arg0, %c0_i32_0, %c0_i32_1 : i32, i32, i32, i32
  }
}

</mosaic_0001>

<llo_original>
// kernel: obj_decoder_forward.3
$region0: #{obj_decoder_forward.3}
  #allocation0 [shape = 'u32[]', space=smem, size = 0x4, offset = 0x4, fixed_abs, tag = 'smem constant byte address 0x4 - core index']
  #allocation1 [shape = 'u32[72,128]{1,0:T(1,128)}', space=vmem, size = 0x9000, scoped, tag = 'internal scratch']
  %s0 = inlined_call_operand.hbm [shape: f32[2,64,32], index: 0, kind: input, shape index: {}]
  %s1 = inlined_call_operand.vmem [shape: bf16[32,32], index: 1, kind: input, shape index: {}]
  %s2 = inlined_call_operand.vmem [shape: f32[64,32], index: 2, kind: input, shape index: {}]
  %s3 = inlined_call_operand.vmem [shape: bf16[2,64,32], index: 3, kind: output, shape index: {}]
  %s4 = sld [smem:[#allocation0]]
  $region49: #{obj_decoder_forward.3} parent=0
    _
  %s6 = ssub.s32 1, %s4
  %s7 = scalar_select 0, %s6, %s4
  $region1: #{obj_decoder_forward.3} parent=0
    #allocation2 [shape = 'u8[65536]{0}', space=vmem, size = 0x10000, scoped, tag = 'input window, operand 0']
    #allocation3 [shape = 's32[2]{0}', space=sflag, size = 0x8, scoped, tag = 'scoped memory for obj_decoder_forward.3']
    %8 = vsyncpa [#allocation3], 0
    %s9 = scalar_lea.sflag [#allocation3], 1
    %10 = vsyncpa %s9, 0
    loop: start=0, step=1, limit=4
    $region2: #{obj_decoder_forward.3} parent=1 // loop_pre_header
      _
    $region3: #{obj_decoder_forward.3} parent=1 // loop_header
      %s12 = sphi 0, %s16
      %p13 = scmp.ge.s32.totalorder %s12, 4
      %s19 = sphi 0, %s31
      %s20 = sphi 0, %s27
      %s21 = sphi 0, %s19
      %s22 = sphi 0, %s20
      %s23 = sphi 0, %s21
      %s24 = sphi 0, %s22
      %s36 = sphi 0, %s38
      %s39 = sphi 0, %s36
      %s40 = sphi 0, %s39
      %s56 = sphi 0, %s40
      %s60 = sphi 0, %s60
      %s62 = sphi 0, %s60
      %s63 = sphi 0, %s62
      %s77 = sphi 0, %s63
      %s83 = sphi 0, %s85
      %s86 = sphi 0, %s83
      %s87 = sphi 0, %s86
      %s103 = sphi 0, %s87
      %s111 = sphi 0, %s113
      %s114 = sphi 0, %s111
      %s115 = sphi 0, %s114
      %s131 = sphi 0, %s115
    $region4: #{obj_decoder_forward.3} parent=1 // loop_header_branch
      %15 = sbr.rel (%p13) target = $region8
    $region5: #{obj_decoder_forward.3} parent=1 // loop_body
      %s17 = ssub.s32 %s12, 1
      %s18 = ssub.s32 %s12, 2
      %s25 = sadd.s32 1, %s20
      %p26 = scmp.ge.s32.totalorder %s25, 1
      %s27 = scalar_select %p26, 0, %s25
      %s28 = sadd.s32 1, %s19
      %s29 = scalar_select %p26, %s28, %s19
      %p30 = scmp.ge.s32.totalorder %s29, 2
      %s31 = scalar_select %p30, 0, %s29
      %s32 = ssub.s32 %s19, %s31
      %s33 = ssub.s32 %s20, %s27
      %s34 = sor.u32 %s32, %s33
      %p35 = scmp.eq.s32.totalorder %s34, 0
      %s37 = sadd.s32 %s36, 1
      %s38 = scalar_select %p35, %s36, %s37
      %p41 = pneg %p35
      %p42 = scmp.eq.s32.totalorder %s12, 1
      %p43 = por %p41, %p42
      %p44 = scmp.ne.s32.totalorder %s36, %s39
      %p45 = scmp.eq.s32.totalorder %s12, 0
      %p46 = por %p44, %p45
      %p47 = scmp.ne.s32.totalorder %s36, %s39
      %p48 = scmp.eq.s32.totalorder %s17, 1
      %p49 = por %p47, %p48
      %p50 = scmp.ne.s32.totalorder %s39, %s40
      %p51 = scmp.eq.s32.totalorder %s17, 0
      %p52 = por %p50, %p51
      %p53 = scmp.ne.s32.totalorder %s39, %s40
      %p54 = scmp.eq.s32.totalorder %s18, 1
      %p55 = por %p53, %p54
      %p57 = scmp.ne.s32.totalorder %s40, %s56
      %p58 = scmp.eq.s32.totalorder %s18, 0
      %p59 = por %p57, %p58
      %s61 = sadd.s32 %s60, 1
      %p64 = scmp.eq.s32.totalorder %s12, 1
      %p65 = scmp.ne.s32.totalorder %s60, %s62
      %p66 = scmp.eq.s32.totalorder %s12, 0
      %p67 = por %p65, %p66
      %p68 = scmp.ne.s32.totalorder %s60, %s62
      %p69 = scmp.eq.s32.totalorder %s17, 1
      %p70 = por %p68, %p69
      %p71 = scmp.ne.s32.totalorder %s62, %s63
      %p72 = scmp.eq.s32.totalorder %s17, 0
      %p73 = por %p71, %p72
      %p74 = scmp.ne.s32.totalorder %s62, %s63
      %p75 = scmp.eq.s32.totalorder %s18, 1
      %p76 = por %p74, %p75
      %p78 = scmp.ne.s32.totalorder %s63, %s77
      %p79 = scmp.eq.s32.totalorder %s18, 0
      %p80 = por %p78, %p79
      %s81 = ssub.s32 %s20, %s27
      %p82 = scmp.eq.s32.totalorder %s81, 0
      %s84 = sadd.s32 %s83, 1
      %s85 = scalar_select %p82, %s83, %s84
      %p88 = pneg %p82
      %p89 = scmp.eq.s32.totalorder %s12, 1
      %p90 = por %p88, %p89
      %p91 = scmp.ne.s32.totalorder %s83, %s86
      %p92 = scmp.eq.s32.totalorder %s12, 0
      %p93 = por %p91, %p92
      %p94 = scmp.ne.s32.totalorder %s83, %s86
      %p95 = scmp.eq.s32.totalorder %s17, 1
      %p96 = por %p94, %p95
      %p97 = scmp.ne.s32.totalorder %s86, %s87
      %p98 = scmp.eq.s32.totalorder %s17, 0
      %p99 = por %p97, %p98
      %p100 = scmp.ne.s32.totalorder %s86, %s87
      %p101 = scmp.eq.s32.totalorder %s18, 1
      %p102 = por %p100, %p101
      %p104 = scmp.ne.s32.totalorder %s87, %s103
      %p105 = scmp.eq.s32.totalorder %s18, 0
      %p106 = por %p104, %p105
      %s107 = ssub.s32 %s19, %s31
      %s108 = ssub.s32 %s20, %s27
      %s109 = sor.u32 %s107, %s108
      %p110 = scmp.eq.s32.totalorder %s109, 0
      %s112 = sadd.s32 %s111, 1
      %s113 = scalar_select %p110, %s111, %s112
      %p116 = pneg %p110
      %p117 = scmp.eq.s32.totalorder %s12, 1
      %p118 = por %p116, %p117
      %p119 = scmp.ne.s32.totalorder %s111, %s114
      %p120 = scmp.eq.s32.totalorder %s12, 0
      %p121 = por %p119, %p120
      %p122 = scmp.ne.s32.totalorder %s111, %s114
      %p123 = scmp.eq.s32.totalorder %s17, 1
      %p124 = por %p122, %p123
      %p125 = scmp.ne.s32.totalorder %s114, %s115
      %p126 = scmp.eq.s32.totalorder %s17, 0
      %p127 = por %p125, %p126
      %p128 = scmp.ne.s32.totalorder %s114, %s115
      %p129 = scmp.eq.s32.totalorder %s18, 1
      %p130 = por %p128, %p129
      %p132 = scmp.ne.s32.totalorder %s115, %s131
      %p133 = scmp.eq.s32.totalorder %s18, 0
      %p134 = por %p132, %p133
      %p135 = scmp.le.s32.totalorder 1, %s12
      %p136 = scmp.lt.s32.totalorder %s12, 3
      %p137 = pnand %p135, %p136
      %p138 = pneg %p137
      // Predicated region
      $region9: #{obj_decoder_forward.3} parent=5 // pred_check
        _
      $region10: #{obj_decoder_forward.3} parent=5 // pred_check_branch
        %140 = sbr.rel (%p137) target = $region12
      $region11: #{obj_decoder_forward.3} parent=5 // pred_region
        %s141 = ssub.s32 %s12, 1
        // Predicated region
        $region13: #{obj_decoder_forward.3} parent=11 // pred_check
          %p142 = pneg %p73
        $region14: #{obj_decoder_forward.3} parent=11 // pred_check_branch
          %144 = sbr.rel (%p142) target = $region16
        $region15: #{obj_decoder_forward.3} parent=11 // pred_region
          _
        $region16: #{obj_decoder_forward.3} parent=11 // pred_fallthru
          _
        // Predicated region
        $region17: #{obj_decoder_forward.3} parent=11 // pred_check
          %p145 = pneg %p99
        $region18: #{obj_decoder_forward.3} parent=11 // pred_check_branch
          %147 = sbr.rel (%p145) target = $region20
        $region19: #{obj_decoder_forward.3} parent=11 // pred_region
          %s148 = smul.u32 8, %s22
          %p149 = scmp.lt.s32.totalorder %s148, 7
          %s150 = scalar_select %p149, %s148, 7
          %s151 = smul.addr %s150, 8
          %s152 = scalar_lea.vmem %s2, %s151
          %s153 = smul.u32 8, %s22
        $region20: #{obj_decoder_forward.3} parent=11 // pred_fallthru
          _
      $region12: #{obj_decoder_forward.3} parent=5 // pred_fallthru
        _
      %p154 = scmp.lt.s32.totalorder %s12, 2
      // Predicated region
      $region21: #{obj_decoder_forward.3} parent=5 // pred_check
        %p155 = pneg %p154
      $region22: #{obj_decoder_forward.3} parent=5 // pred_check_branch
        %157 = sbr.rel (%p155) target = $region24
      $region23: #{obj_decoder_forward.3} parent=5 // pred_region
        // Predicated region
        $region25: #{obj_decoder_forward.3} parent=23 // pred_check
          %p158 = pneg %p46
        $region26: #{obj_decoder_forward.3} parent=23 // pred_check_branch
          %160 = sbr.rel (%p158) target = $region28
        $region27: #{obj_decoder_forward.3} parent=23 // pred_region
          %s161 = sand.u32 %s36, 1
          %s162 = scalar_lea.sflag [#allocation3], %s161
          %s163 = sand.u32 %s36, 1
          %s164 = smul.addr %s163, 64
          %s165 = scalar_lea.vmem [#allocation2], %s164
          %s166 = smul.u32 8, %s20
          %168 = vsyncadd %s162, 0
          %s169 = smul.addr %s19, 8
          %s170 = sadd.s32 %s166, %s169
          %s171 = smul.addr %s170, 8
          %s172 = scalar_lea.hbm %s0, %s171
          %s173 = sshll.u32 %s172, 4
          %s174 = int_to_ptr.hbm [resolvable:$true] %s173
          %s175 = sshll.u32 %s165, 4
          %s176 = int_to_ptr.vmem [resolvable:$true] %s175
          %181 = dma.hbm_to_vmem [thread:$0]  %s174, 1024, %s176, %s162, 128, 128, 8
        $region28: #{obj_decoder_forward.3} parent=23 // pred_fallthru
          _
      $region24: #{obj_decoder_forward.3} parent=5 // pred_fallthru
        _
      %p182 = scmp.le.s32.totalorder 1, %s12
      %p183 = scmp.lt.s32.totalorder %s12, 3
      %p184 = pnand %p182, %p183
      %p185 = pneg %p184
      // Predicated region
      $region29: #{obj_decoder_forward.3} parent=5 // pred_check
        _
      $region30: #{obj_decoder_forward.3} parent=5 // pred_check_branch
        %187 = sbr.rel (%p184) target = $region32
      $region31: #{obj_decoder_forward.3} parent=5 // pred_region
        %s188 = ssub.s32 %s12, 1
        %s189 = sand.u32 %s39, 1
        %s190 = scalar_lea.sflag [#allocation3], %s189
        %s191 = sand.u32 %s39, 1
        %s192 = smul.addr %s191, 64
        %s193 = scalar_lea.vmem [#allocation2], %s192
        // Predicated region
        $region33: #{obj_decoder_forward.3} parent=31 // pred_check
          %p194 = pneg %p52
        $region34: #{obj_decoder_forward.3} parent=31 // pred_check_branch
          %196 = sbr.rel (%p194) target = $region36
        $region35: #{obj_decoder_forward.3} parent=31 // pred_region
          %198 = dma.done %s190, 1024
        $region36: #{obj_decoder_forward.3} parent=31 // pred_fallthru
          _
        %s199 = sand.u32 %s39, 1
        %s200 = scalar_lea.sflag [#allocation3], %s199
        %s201 = sand.u32 %s39, 1
        %s202 = smul.addr %s201, 64
        %s203 = scalar_lea.vmem [#allocation2], %s202
        %p204 = pneg %p52
        %p205 = pneg %p49
        %p206 = pneg %p73
        %p207 = pneg %p70
        %s208 = smul.u32 8, %s22
        %p209 = scmp.lt.s32.totalorder %s208, 7
        %s210 = scalar_select %p209, %s208, 7
        %s211 = smul.addr %s210, 8
        %s212 = scalar_lea.vmem %s2, %s211
        %p213 = pneg %p99
        %p214 = pneg %p96
        %p215 = pneg %p127
        %p216 = pneg %p124
        %s217 = smul.u32 8, %s22
        %p218 = scmp.lt.s32.totalorder %s21, 1
        %s219 = scalar_select %p218, %s21, 1
        %p220 = scmp.lt.s32.totalorder %s217, 7
        %s221 = scalar_select %p220, %s217, 7
        %s222 = smul.addr %s219, 8
        %s223 = sadd.s32 %s221, %s222
        %s224 = smul.addr %s223, 4
        %s225 = scalar_lea.vmem %s3, %s224
        %s226 = smul.u32 8, %s22
        %s227 = smul.u32 8, %s22
        %p228 = scmp.lt.s32.totalorder %s227, 7
        %s229 = scalar_select %p228, %s227, 7
        %s230 = smul.addr %s229, 8
        %s231 = scalar_lea.vmem %s2, %s230
        %s232 = smul.u32 8, %s22
        %s233 = smul.u32 8, %s22
        %p234 = scmp.lt.s32.totalorder %s21, 1
        %s235 = scalar_select %p234, %s21, 1
        %p236 = scmp.lt.s32.totalorder %s233, 7
        %s237 = scalar_select %p236, %s233, 7
        %s238 = smul.addr %s235, 8
        %s239 = sadd.s32 %s237, %s238
        %s240 = smul.addr %s239, 4
        %s241 = scalar_lea.vmem %s3, %s240
        %s242 = smul.u32 8, %s22
        %v244 = vld [vmem:[%s193] sm:$0xff]
        %v245 = vld [vmem:[%s193 + $0x8] sm:$0xff]
        %v246 = vld [vmem:[%s193 + $0x10] sm:$0xff]
        %v247 = vld [vmem:[%s193 + $0x18] sm:$0xff]
        %v248 = vld [vmem:[%s193 + $0x20] sm:$0xff]
        %v249 = vld [vmem:[%s193 + $0x28] sm:$0xff]
        %v250 = vld [vmem:[%s193 + $0x30] sm:$0xff]
        %v251 = vld [vmem:[%s193 + $0x38] sm:$0xff]
        %v252 = vpack.c.bf16 %v245, %v244
        %v253 = vpack.c.bf16 %v247, %v246
        %v254 = vpack.c.bf16 %v249, %v248
        %v255 = vpack.c.bf16 %v251, %v250
        %v256 = vld [vmem:[%s1] sm:$0xf]
        %v257 = vld [vmem:[%s1 + $0x4] sm:$0xf]
        %v258 = vld [vmem:[%s1 + $0x8] sm:$0xf]
        %v259 = vld [vmem:[%s1 + $0xc] sm:$0xf]
        %v260 = vld [vmem:[%s231] sm:$0xff]
        %v261 = vld [vmem:[%s231 + $0x8] sm:$0xff]
        %v262 = vld [vmem:[%s231 + $0x10] sm:$0xff]
        %v263 = vld [vmem:[%s231 + $0x18] sm:$0xff]
        %v264 = vld [vmem:[%s231 + $0x20] sm:$0xff]
        %v265 = vld [vmem:[%s231 + $0x28] sm:$0xff]
        %v266 = vld [vmem:[%s231 + $0x30] sm:$0xff]
        %v267 = vld [vmem:[%s231 + $0x38] sm:$0xff]
        %v272 = vunpack.c.l.b16 %v256
        %v273 = vunpack.c.l.b16 %v257
        %v274 = vunpack.c.l.b16 %v258
        %v275 = vunpack.c.l.b16 %v259
        %v276 = vpack.c.b16 %v273, %v272
        %v277 = vpack.c.b16 %v275, %v274
        %vm280 = vcmask 261120
        %v282 = vsel %vm280, %v252, 0
        %v285 = vsel %vm280, %v253, 0
        %v288 = vsel %vm280, %v254, 0
        %v291 = vsel %vm280, %v255, 0
        %293 = vmatpush.bf16.msra.mxu0 0
        %294 = vmatpush.bf16.msra.mxu0 0
        %295 = vmatpush.bf16.msra.mxu0 0
        %296 = vmatpush.bf16.msra.mxu0 0
        %297 = vmatpush.bf16.msra.mxu0 0
        %298 = vmatpush.bf16.msra.mxu0 0
        %299 = vmatpush.bf16.msra.mxu0 %v277
        %300 = vmatpush.bf16.msra.mxu0 %v276
        %301 = vmatmul.bf16.gmra.mxu0 %v282
        %v302 = vpop.f32.mrf.mxu0
        %v303 = vadd.f32 %v260, %v302
        %v304 = vpop.f32.mrf.mxu0
        %v305 = vadd.f32 %v261, %v304
        %306 = vmatmul.bf16.gmra.mxu0 %v285
        %v307 = vpop.f32.mrf.mxu0
        %v308 = vadd.f32 %v262, %v307
        %v309 = vpop.f32.mrf.mxu0
        %v310 = vadd.f32 %v263, %v309
        %311 = vmatmul.bf16.gmra.mxu0 %v288
        %v312 = vpop.f32.mrf.mxu0
        %v313 = vadd.f32 %v264, %v312
        %v314 = vpop.f32.mrf.mxu0
        %v315 = vadd.f32 %v265, %v314
        %316 = vmatmul.bf16.gmra.mxu0 %v291
        %v317 = vpop.f32.mrf.mxu0
        %v318 = vadd.f32 %v266, %v317
        %v319 = vpop.f32.mrf.mxu0
        %v320 = vadd.f32 %v267, %v319
        %321 = vdwg.mxu0
        %v322 = vpack.c.bf16 %v303, %v303
        %v323 = vpack.c.bf16 %v305, %v305
        %v324 = vpack.c.bf16 %v308, %v308
        %v325 = vpack.c.bf16 %v310, %v310
        %v326 = vpack.c.bf16 %v313, %v313
        %v327 = vpack.c.bf16 %v315, %v315
        %v328 = vpack.c.bf16 %v318, %v318
        %v329 = vpack.c.bf16 %v320, %v320
        %vm330 = vcmask 257024
        %331 = vst.msk [vmem:[%s241] sm:$0xf] %vm330, %v322
        %332 = vst.msk [vmem:[%s241 + $0x4] sm:$0xf] %vm330, %v323
        %333 = vst.msk [vmem:[%s241 + $0x8] sm:$0xf] %vm330, %v324
        %334 = vst.msk [vmem:[%s241 + $0xc] sm:$0xf] %vm330, %v325
        %335 = vst.msk [vmem:[%s241 + $0x10] sm:$0xf] %vm330, %v326
        %336 = vst.msk [vmem:[%s241 + $0x14] sm:$0xf] %vm330, %v327
        %337 = vst.msk [vmem:[%s241 + $0x18] sm:$0xf] %vm330, %v328
        %338 = vst.msk [vmem:[%s241 + $0x1c] sm:$0xf] %vm330, %v329
        %s339 = smul.u32 8, %s22
        %p340 = scmp.lt.s32.totalorder %s21, 1
        %s341 = scalar_select %p340, %s21, 1
        %p342 = scmp.lt.s32.totalorder %s339, 7
        %s343 = scalar_select %p342, %s339, 7
        %s344 = smul.addr %s341, 8
        %s345 = sadd.s32 %s343, %s344
        %s346 = smul.addr %s345, 4
        %s347 = scalar_lea.vmem %s3, %s346
        // Predicated region
        $region37: #{obj_decoder_forward.3} parent=31 // pred_check
          %p348 = pneg %p124
        $region38: #{obj_decoder_forward.3} parent=31 // pred_check_branch
          %350 = sbr.rel (%p348) target = $region40
        $region39: #{obj_decoder_forward.3} parent=31 // pred_region
          %s351 = smul.u32 8, %s22
        $region40: #{obj_decoder_forward.3} parent=31 // pred_fallthru
          _
      $region32: #{obj_decoder_forward.3} parent=5 // pred_fallthru
        _
      %p352 = scmp.le.s32.totalorder 2, %s12
      // Predicated region
      $region41: #{obj_decoder_forward.3} parent=5 // pred_check
        %p353 = pneg %p352
      $region42: #{obj_decoder_forward.3} parent=5 // pred_check_branch
        %355 = sbr.rel (%p353) target = $region44
      $region43: #{obj_decoder_forward.3} parent=5 // pred_region
        %s356 = ssub.s32 %s12, 2
        // Predicated region
        $region45: #{obj_decoder_forward.3} parent=43 // pred_check
          %p357 = pneg %p130
        $region46: #{obj_decoder_forward.3} parent=43 // pred_check_branch
          %359 = sbr.rel (%p357) target = $region48
        $region47: #{obj_decoder_forward.3} parent=43 // pred_region
          %s360 = smul.u32 8, %s24
          %p361 = scmp.lt.s32.totalorder %s23, 1
          %s362 = scalar_select %p361, %s23, 1
          %p363 = scmp.lt.s32.totalorder %s360, 7
          %s364 = scalar_select %p363, %s360, 7
          %s365 = smul.addr %s362, 8
          %s366 = sadd.s32 %s364, %s365
          %s367 = smul.addr %s366, 4
          %s368 = scalar_lea.vmem %s3, %s367
        $region48: #{obj_decoder_forward.3} parent=43 // pred_fallthru
          _
      $region44: #{obj_decoder_forward.3} parent=5 // pred_fallthru
        _
    $region6: #{obj_decoder_forward.3} parent=1 // loop_footer
      %s16 = sadd.s32 1, %s12
    $region7: #{obj_decoder_forward.3} parent=1 // loop_footer_branch
      %11 = sbr.rel target = $region3
    $region8: #{obj_decoder_forward.3} parent=1 // loop_exit
      _
    %369 = vsyncpa [#allocation3], 1
    %s370 = scalar_lea.sflag [#allocation3], 1
    %371 = vsyncpa %s370, 1

// kernel: obj_decoder_forward.5
$region0: #{obj_decoder_forward.5}
  #allocation0 [shape = 'u32[]', space=smem, size = 0x4, offset = 0x4, fixed_abs, tag = 'smem constant byte address 0x4 - core index']
  #allocation1 [shape = 'u32[72,128]{1,0:T(1,128)}', space=vmem, size = 0x9000, scoped, tag = 'internal scratch']
  #allocation2 [shape = 'f32[2,4,32]{2,1,0:T(4,128)}', space=vmem, size = 0x1000, scoped, tag = 'scratch operand']
  %s0 = inlined_call_operand.vmem [shape: bf16[2,4,32], index: 0, kind: input, shape index: {}]
  %s1 = inlined_call_operand.vmem [shape: bf16[32,128], index: 1, kind: input, shape index: {}]
  %s2 = inlined_call_operand.vmem [shape: f32[1,128], index: 2, kind: input, shape index: {}]
  %s3 = inlined_call_operand.vmem [shape: bf16[32,32], index: 3, kind: input, shape index: {}]
  %s4 = inlined_call_operand.vmem [shape: f32[1,32], index: 4, kind: input, shape index: {}]
  %s5 = inlined_call_operand.vmem [shape: f32[4,1,32], index: 5, kind: input, shape index: {}]
  %s6 = inlined_call_operand.vmem [shape: bf16[32,32], index: 6, kind: input, shape index: {}]
  %s7 = inlined_call_operand.vmem [shape: f32[1,32], index: 7, kind: input, shape index: {}]
  %s8 = inlined_call_operand.vmem [shape: bf16[32,32], index: 8, kind: input, shape index: {}]
  %s9 = inlined_call_operand.vmem [shape: f32[1,32], index: 9, kind: input, shape index: {}]
  %s10 = inlined_call_operand.vmem [shape: bf16[32,128], index: 10, kind: input, shape index: {}]
  %s11 = inlined_call_operand.vmem [shape: f32[1,128], index: 11, kind: input, shape index: {}]
  %s12 = inlined_call_operand.vmem [shape: f32[2,4,128], index: 12, kind: output, shape index: {0}]
  %s13 = inlined_call_operand.vmem [shape: f32[2,4,4,128], index: 13, kind: output, shape index: {1}]
  %14 = xla_tuple %s12, %s13
  %s15 = sld [smem:[#allocation0]]
  $region130: #{obj_decoder_forward.5} parent=0
    _
  %s17 = ssub.s32 1, %s15
  %s18 = scalar_select 0, %s17, %s15
  $region1: #{obj_decoder_forward.5} parent=0
    #allocation3 [shape = 'u8[8192]{0}', space=vmem, size = 0x2000, scoped, tag = 'output window, operand 1']
    loop: start=0, step=1, limit=6
    $region2: #{obj_decoder_forward.5} parent=1 // loop_pre_header
      _
    $region3: #{obj_decoder_forward.5} parent=1 // loop_header
      %s20 = sphi 0, %s24
      %p21 = scmp.ge.s32.totalorder %s20, 6
      %s28 = sphi 0, %s28
      %s30 = sphi 0, %s28
      %s31 = sphi 0, %s30
      %s45 = sphi 0, %s31
      %s49 = sphi 0, %s49
      %s51 = sphi 0, %s49
      %s52 = sphi 0, %s51
      %s66 = sphi 0, %s52
      %s70 = sphi 0, %s70
      %s72 = sphi 0, %s70
      %s73 = sphi 0, %s72
      %s87 = sphi 0, %s73
      %s91 = sphi 0, %s91
      %s93 = sphi 0, %s91
      %s94 = sphi 0, %s93
      %s108 = sphi 0, %s94
      %s112 = sphi 0, %s112
      %s114 = sphi 0, %s112
      %s115 = sphi 0, %s114
      %s129 = sphi 0, %s115
      %s135 = sphi 0, %s137
      %s138 = sphi 0, %s135
      %s139 = sphi 0, %s138
      %s155 = sphi 0, %s139
      %s159 = sphi 0, %s159
      %s161 = sphi 0, %s159
      %s162 = sphi 0, %s161
      %s176 = sphi 0, %s162
      %s180 = sphi 0, %s180
      %s182 = sphi 0, %s180
      %s183 = sphi 0, %s182
      %s197 = sphi 0, %s183
      %s201 = sphi 0, %s201
      %s203 = sphi 0, %s201
      %s204 = sphi 0, %s203
      %s218 = sphi 0, %s204
      %s222 = sphi 0, %s222
      %s224 = sphi 0, %s222
      %s225 = sphi 0, %s224
      %s239 = sphi 0, %s225
      %s243 = sphi 0, %s243
      %s245 = sphi 0, %s243
      %s246 = sphi 0, %s245
      %s260 = sphi 0, %s246
      %s264 = sphi 0, %s264
      %s266 = sphi 0, %s264
      %s267 = sphi 0, %s266
      %s281 = sphi 0, %s267
      %s285 = sphi 0, %s285
      %s287 = sphi 0, %s285
      %s288 = sphi 0, %s287
      %s302 = sphi 0, %s288
      %s308 = sphi 0, %s310
      %s311 = sphi 0, %s308
      %s312 = sphi 0, %s311
      %s328 = sphi 0, %s312
    $region4: #{obj_decoder_forward.5} parent=1 // loop_header_branch
      %23 = sbr.rel (%p21) target = $region8
    $region5: #{obj_decoder_forward.5} parent=1 // loop_body
      %s25 = ssub.s32 %s20, 1
      %s26 = ssub.s32 %s20, 2
      %s27 = sadd.s32 %s20, 1
      %s29 = sadd.s32 %s28, 1
      %p32 = scmp.eq.s32.totalorder %s20, 3
      %p33 = scmp.ne.s32.totalorder %s28, %s30
      %p34 = scmp.eq.s32.totalorder %s20, 0
      %p35 = por %p33, %p34
      %p36 = scmp.ne.s32.totalorder %s28, %s30
      %p37 = scmp.eq.s32.totalorder %s25, 3
      %p38 = por %p36, %p37
      %p39 = scmp.ne.s32.totalorder %s30, %s31
      %p40 = scmp.eq.s32.totalorder %s25, 0
      %p41 = por %p39, %p40
      %p42 = scmp.ne.s32.totalorder %s30, %s31
      %p43 = scmp.eq.s32.totalorder %s26, 3
      %p44 = por %p42, %p43
      %p46 = scmp.ne.s32.totalorder %s31, %s45
      %p47 = scmp.eq.s32.totalorder %s26, 0
      %p48 = por %p46, %p47
      %s50 = sadd.s32 %s49, 1
      %p53 = scmp.eq.s32.totalorder %s20, 3
      %p54 = scmp.ne.s32.totalorder %s49, %s51
      %p55 = scmp.eq.s32.totalorder %s20, 0
      %p56 = por %p54, %p55
      %p57 = scmp.ne.s32.totalorder %s49, %s51
      %p58 = scmp.eq.s32.totalorder %s25, 3
      %p59 = por %p57, %p58
      %p60 = scmp.ne.s32.totalorder %s51, %s52
      %p61 = scmp.eq.s32.totalorder %s25, 0
      %p62 = por %p60, %p61
      %p63 = scmp.ne.s32.totalorder %s51, %s52
      %p64 = scmp.eq.s32.totalorder %s26, 3
      %p65 = por %p63, %p64
      %p67 = scmp.ne.s32.totalorder %s52, %s66
      %p68 = scmp.eq.s32.totalorder %s26, 0
      %p69 = por %p67, %p68
      %s71 = sadd.s32 %s70, 1
      %p74 = scmp.eq.s32.totalorder %s20, 3
      %p75 = scmp.ne.s32.totalorder %s70, %s72
      %p76 = scmp.eq.s32.totalorder %s20, 0
      %p77 = por %p75, %p76
      %p78 = scmp.ne.s32.totalorder %s70, %s72
      %p79 = scmp.eq.s32.totalorder %s25, 3
      %p80 = por %p78, %p79
      %p81 = scmp.ne.s32.totalorder %s72, %s73
      %p82 = scmp.eq.s32.totalorder %s25, 0
      %p83 = por %p81, %p82
      %p84 = scmp.ne.s32.totalorder %s72, %s73
      %p85 = scmp.eq.s32.totalorder %s26, 3
      %p86 = por %p84, %p85
      %p88 = scmp.ne.s32.totalorder %s73, %s87
      %p89 = scmp.eq.s32.totalorder %s26, 0
      %p90 = por %p88, %p89
      %s92 = sadd.s32 %s91, 1
      %p95 = scmp.eq.s32.totalorder %s20, 3
      %p96 = scmp.ne.s32.totalorder %s91, %s93
      %p97 = scmp.eq.s32.totalorder %s20, 0
      %p98 = por %p96, %p97
      %p99 = scmp.ne.s32.totalorder %s91, %s93
      %p100 = scmp.eq.s32.totalorder %s25, 3
      %p101 = por %p99, %p100
      %p102 = scmp.ne.s32.totalorder %s93, %s94
      %p103 = scmp.eq.s32.totalorder %s25, 0
      %p104 = por %p102, %p103
      %p105 = scmp.ne.s32.totalorder %s93, %s94
      %p106 = scmp.eq.s32.totalorder %s26, 3
      %p107 = por %p105, %p106
      %p109 = scmp.ne.s32.totalorder %s94, %s108
      %p110 = scmp.eq.s32.totalorder %s26, 0
      %p111 = por %p109, %p110
      %s113 = sadd.s32 %s112, 1
      %p116 = scmp.eq.s32.totalorder %s20, 3
      %p117 = scmp.ne.s32.totalorder %s112, %s114
      %p118 = scmp.eq.s32.totalorder %s20, 0
      %p119 = por %p117, %p118
      %p120 = scmp.ne.s32.totalorder %s112, %s114
      %p121 = scmp.eq.s32.totalorder %s25, 3
      %p122 = por %p120, %p121
      %p123 = scmp.ne.s32.totalorder %s114, %s115
      %p124 = scmp.eq.s32.totalorder %s25, 0
      %p125 = por %p123, %p124
      %p126 = scmp.ne.s32.totalorder %s114, %s115
      %p127 = scmp.eq.s32.totalorder %s26, 3
      %p128 = por %p126, %p127
      %p130 = scmp.ne.s32.totalorder %s115, %s129
      %p131 = scmp.eq.s32.totalorder %s26, 0
      %p132 = por %p130, %p131
      %s133 = ssub.s32 %s20, %s27
      %p134 = scmp.eq.s32.totalorder %s133, 0
      %s136 = sadd.s32 %s135, 1
      %s137 = scalar_select %p134, %s135, %s136
      %p140 = pneg %p134
      %p141 = scmp.eq.s32.totalorder %s20, 3
      %p142 = por %p140, %p141
      %p143 = scmp.ne.s32.totalorder %s135, %s138
      %p144 = scmp.eq.s32.totalorder %s20, 0
      %p145 = por %p143, %p144
      %p146 = scmp.ne.s32.totalorder %s135, %s138
      %p147 = scmp.eq.s32.totalorder %s25, 3
      %p148 = por %p146, %p147
      %p149 = scmp.ne.s32.totalorder %s138, %s139
      %p150 = scmp.eq.s32.totalorder %s25, 0
      %p151 = por %p149, %p150
      %p152 = scmp.ne.s32.totalorder %s138, %s139
      %p153 = scmp.eq.s32.totalorder %s26, 3
      %p154 = por %p152, %p153
      %p156 = scmp.ne.s32.totalorder %s139, %s155
      %p157 = scmp.eq.s32.totalorder %s26, 0
      %p158 = por %p156, %p157
      %s160 = sadd.s32 %s159, 1
      %p163 = scmp.eq.s32.totalorder %s20, 3
      %p164 = scmp.ne.s32.totalorder %s159, %s161
      %p165 = scmp.eq.s32.totalorder %s20, 0
      %p166 = por %p164, %p165
      %p167 = scmp.ne.s32.totalorder %s159, %s161
      %p168 = scmp.eq.s32.totalorder %s25, 3
      %p169 = por %p167, %p168
      %p170 = scmp.ne.s32.totalorder %s161, %s162
      %p171 = scmp.eq.s32.totalorder %s25, 0
      %p172 = por %p170, %p171
      %p173 = scmp.ne.s32.totalorder %s161, %s162
      %p174 = scmp.eq.s32.totalorder %s26, 3
      %p175 = por %p173, %p174
      %p177 = scmp.ne.s32.totalorder %s162, %s176
      %p178 = scmp.eq.s32.totalorder %s26, 0
      %p179 = por %p177, %p178
      %s181 = sadd.s32 %s180, 1
      %p184 = scmp.eq.s32.totalorder %s20, 3
      %p185 = scmp.ne.s32.totalorder %s180, %s182
      %p186 = scmp.eq.s32.totalorder %s20, 0
      %p187 = por %p185, %p186
      %p188 = scmp.ne.s32.totalorder %s180, %s182
      %p189 = scmp.eq.s32.totalorder %s25, 3
      %p190 = por %p188, %p189
      %p191 = scmp.ne.s32.totalorder %s182, %s183
      %p192 = scmp.eq.s32.totalorder %s25, 0
      %p193 = por %p191, %p192
      %p194 = scmp.ne.s32.totalorder %s182, %s183
      %p195 = scmp.eq.s32.totalorder %s26, 3
      %p196 = por %p194, %p195
      %p198 = scmp.ne.s32.totalorder %s183, %s197
      %p199 = scmp.eq.s32.totalorder %s26, 0
      %p200 = por %p198, %p199
      %s202 = sadd.s32 %s201, 1
      %p205 = scmp.eq.s32.totalorder %s20, 3
      %p206 = scmp.ne.s32.totalorder %s201, %s203
      %p207 = scmp.eq.s32.totalorder %s20, 0
      %p208 = por %p206, %p207
      %p209 = scmp.ne.s32.totalorder %s201, %s203
      %p210 = scmp.eq.s32.totalorder %s25, 3
      %p211 = por %p209, %p210
      %p212 = scmp.ne.s32.totalorder %s203, %s204
      %p213 = scmp.eq.s32.totalorder %s25, 0
      %p214 = por %p212, %p213
      %p215 = scmp.ne.s32.totalorder %s203, %s204
      %p216 = scmp.eq.s32.totalorder %s26, 3
      %p217 = por %p215, %p216
      %p219 = scmp.ne.s32.totalorder %s204, %s218
      %p220 = scmp.eq.s32.totalorder %s26, 0
      %p221 = por %p219, %p220
      %s223 = sadd.s32 %s222, 1
      %p226 = scmp.eq.s32.totalorder %s20, 3
      %p227 = scmp.ne.s32.totalorder %s222, %s224
      %p228 = scmp.eq.s32.totalorder %s20, 0
      %p229 = por %p227, %p228
      %p230 = scmp.ne.s32.totalorder %s222, %s224
      %p231 = scmp.eq.s32.totalorder %s25, 3
      %p232 = por %p230, %p231
      %p233 = scmp.ne.s32.totalorder %s224, %s225
      %p234 = scmp.eq.s32.totalorder %s25, 0
      %p235 = por %p233, %p234
      %p236 = scmp.ne.s32.totalorder %s224, %s225
      %p237 = scmp.eq.s32.totalorder %s26, 3
      %p238 = por %p236, %p237
      %p240 = scmp.ne.s32.totalorder %s225, %s239
      %p241 = scmp.eq.s32.totalorder %s26, 0
      %p242 = por %p240, %p241
      %s244 = sadd.s32 %s243, 1
      %p247 = scmp.eq.s32.totalorder %s20, 3
      %p248 = scmp.ne.s32.totalorder %s243, %s245
      %p249 = scmp.eq.s32.totalorder %s20, 0
      %p250 = por %p248, %p249
      %p251 = scmp.ne.s32.totalorder %s243, %s245
      %p252 = scmp.eq.s32.totalorder %s25, 3
      %p253 = por %p251, %p252
      %p254 = scmp.ne.s32.totalorder %s245, %s246
      %p255 = scmp.eq.s32.totalorder %s25, 0
      %p256 = por %p254, %p255
      %p257 = scmp.ne.s32.totalorder %s245, %s246
      %p258 = scmp.eq.s32.totalorder %s26, 3
      %p259 = por %p257, %p258
      %p261 = scmp.ne.s32.totalorder %s246, %s260
      %p262 = scmp.eq.s32.totalorder %s26, 0
      %p263 = por %p261, %p262
      %s265 = sadd.s32 %s264, 1
      %p268 = scmp.eq.s32.totalorder %s20, 3
      %p269 = scmp.ne.s32.totalorder %s264, %s266
      %p270 = scmp.eq.s32.totalorder %s20, 0
      %p271 = por %p269, %p270
      %p272 = scmp.ne.s32.totalorder %s264, %s266
      %p273 = scmp.eq.s32.totalorder %s25, 3
      %p274 = por %p272, %p273
      %p275 = scmp.ne.s32.totalorder %s266, %s267
      %p276 = scmp.eq.s32.totalorder %s25, 0
      %p277 = por %p275, %p276
      %p278 = scmp.ne.s32.totalorder %s266, %s267
      %p279 = scmp.eq.s32.totalorder %s26, 3
      %p280 = por %p278, %p279
      %p282 = scmp.ne.s32.totalorder %s267, %s281
      %p283 = scmp.eq.s32.totalorder %s26, 0
      %p284 = por %p282, %p283
      %s286 = sadd.s32 %s285, 1
      %p289 = scmp.eq.s32.totalorder %s20, 3
      %p290 = scmp.ne.s32.totalorder %s285, %s287
      %p291 = scmp.eq.s32.totalorder %s20, 0
      %p292 = por %p290, %p291
      %p293 = scmp.ne.s32.totalorder %s285, %s287
      %p294 = scmp.eq.s32.totalorder %s25, 3
      %p295 = por %p293, %p294
      %p296 = scmp.ne.s32.totalorder %s287, %s288
      %p297 = scmp.eq.s32.totalorder %s25, 0
      %p298 = por %p296, %p297
      %p299 = scmp.ne.s32.totalorder %s287, %s288
      %p300 = scmp.eq.s32.totalorder %s26, 3
      %p301 = por %p299, %p300
      %p303 = scmp.ne.s32.totalorder %s288, %s302
      %p304 = scmp.eq.s32.totalorder %s26, 0
      %p305 = por %p303, %p304
      %s306 = ssub.s32 %s20, %s27
      %p307 = scmp.eq.s32.totalorder %s306, 0
      %s309 = sadd.s32 %s308, 1
      %s310 = scalar_select %p307, %s308, %s309
      %p313 = pneg %p307
      %p314 = scmp.eq.s32.totalorder %s20, 3
      %p315 = por %p313, %p314
      %p316 = scmp.ne.s32.totalorder %s308, %s311
      %p317 = scmp.eq.s32.totalorder %s20, 0
      %p318 = por %p316, %p317
      %p319 = scmp.ne.s32.totalorder %s308, %s311
      %p320 = scmp.eq.s32.totalorder %s25, 3
      %p321 = por %p319, %p320
      %p322 = scmp.ne.s32.totalorder %s311, %s312
      %p323 = scmp.eq.s32.totalorder %s25, 0
      %p324 = por %p322, %p323
      %p325 = scmp.ne.s32.totalorder %s311, %s312
      %p326 = scmp.eq.s32.totalorder %s26, 3
      %p327 = por %p325, %p326
      %p329 = scmp.ne.s32.totalorder %s312, %s328
      %p330 = scmp.eq.s32.totalorder %s26, 0
      %p331 = por %p329, %p330
      %p332 = scmp.le.s32.totalorder 1, %s20
      %p333 = scmp.lt.s32.totalorder %s20, 5
      %p334 = pnand %p332, %p333
      %p335 = pneg %p334
      // Predicated region
      $region9: #{obj_decoder_forward.5} parent=5 // pred_check
        _
      $region10: #{obj_decoder_forward.5} parent=5 // pred_check_branch
        %337 = sbr.rel (%p334) target = $region12
      $region11: #{obj_decoder_forward.5} parent=5 // pred_region
        %s338 = ssub.s32 %s20, 1
        // Predicated region
        $region13: #{obj_decoder_forward.5} parent=11 // pred_check
          %p339 = pneg %p41
        $region14: #{obj_decoder_forward.5} parent=11 // pred_check_branch
          %341 = sbr.rel (%p339) target = $region16
        $region15: #{obj_decoder_forward.5} parent=11 // pred_region
          _
        $region16: #{obj_decoder_forward.5} parent=11 // pred_fallthru
          _
        // Predicated region
        $region17: #{obj_decoder_forward.5} parent=11 // pred_check
          %p342 = pneg %p62
        $region18: #{obj_decoder_forward.5} parent=11 // pred_check_branch
          %344 = sbr.rel (%p342) target = $region20
        $region19: #{obj_decoder_forward.5} parent=11 // pred_region
          _
        $region20: #{obj_decoder_forward.5} parent=11 // pred_fallthru
          _
        // Predicated region
        $region21: #{obj_decoder_forward.5} parent=11 // pred_check
          %p345 = pneg %p83
        $region22: #{obj_decoder_forward.5} parent=11 // pred_check_branch
          %347 = sbr.rel (%p345) target = $region24
        $region23: #{obj_decoder_forward.5} parent=11 // pred_region
          _
        $region24: #{obj_decoder_forward.5} parent=11 // pred_fallthru
          _
        // Predicated region
        $region25: #{obj_decoder_forward.5} parent=11 // pred_check
          %p348 = pneg %p104
        $region26: #{obj_decoder_forward.5} parent=11 // pred_check_branch
          %350 = sbr.rel (%p348) target = $region28
        $region27: #{obj_decoder_forward.5} parent=11 // pred_region
          _
        $region28: #{obj_decoder_forward.5} parent=11 // pred_fallthru
          _
        // Predicated region
        $region29: #{obj_decoder_forward.5} parent=11 // pred_check
          %p351 = pneg %p125
        $region30: #{obj_decoder_forward.5} parent=11 // pred_check_branch
          %353 = sbr.rel (%p351) target = $region32
        $region31: #{obj_decoder_forward.5} parent=11 // pred_region
          _
        $region32: #{obj_decoder_forward.5} parent=11 // pred_fallthru
          _
        // Predicated region
        $region33: #{obj_decoder_forward.5} parent=11 // pred_check
          %p354 = pneg %p172
        $region34: #{obj_decoder_forward.5} parent=11 // pred_check_branch
          %356 = sbr.rel (%p354) target = $region36
        $region35: #{obj_decoder_forward.5} parent=11 // pred_region
          _
        $region36: #{obj_decoder_forward.5} parent=11 // pred_fallthru
          _
        // Predicated region
        $region37: #{obj_decoder_forward.5} parent=11 // pred_check
          %p357 = pneg %p193
        $region38: #{obj_decoder_forward.5} parent=11 // pred_check_branch
          %359 = sbr.rel (%p357) target = $region40
        $region39: #{obj_decoder_forward.5} parent=11 // pred_region
          _
        $region40: #{obj_decoder_forward.5} parent=11 // pred_fallthru
          _
        // Predicated region
        $region41: #{obj_decoder_forward.5} parent=11 // pred_check
          %p360 = pneg %p214
        $region42: #{obj_decoder_forward.5} parent=11 // pred_check_branch
          %362 = sbr.rel (%p360) target = $region44
        $region43: #{obj_decoder_forward.5} parent=11 // pred_region
          _
        $region44: #{obj_decoder_forward.5} parent=11 // pred_fallthru
          _
        // Predicated region
        $region45: #{obj_decoder_forward.5} parent=11 // pred_check
          %p363 = pneg %p235
        $region46: #{obj_decoder_forward.5} parent=11 // pred_check_branch
          %365 = sbr.rel (%p363) target = $region48
        $region47: #{obj_decoder_forward.5} parent=11 // pred_region
          _
        $region48: #{obj_decoder_forward.5} parent=11 // pred_fallthru
          _
        // Predicated region
        $region49: #{obj_decoder_forward.5} parent=11 // pred_check
          %p366 = pneg %p256
        $region50: #{obj_decoder_forward.5} parent=11 // pred_check_branch
          %368 = sbr.rel (%p366) target = $region52
        $region51: #{obj_decoder_forward.5} parent=11 // pred_region
          _
        $region52: #{obj_decoder_forward.5} parent=11 // pred_fallthru
          _
        // Predicated region
        $region53: #{obj_decoder_forward.5} parent=11 // pred_check
          %p369 = pneg %p277
        $region54: #{obj_decoder_forward.5} parent=11 // pred_check_branch
          %371 = sbr.rel (%p369) target = $region56
        $region55: #{obj_decoder_forward.5} parent=11 // pred_region
          _
        $region56: #{obj_decoder_forward.5} parent=11 // pred_fallthru
          _
      $region12: #{obj_decoder_forward.5} parent=5 // pred_fallthru
        _
      %p372 = scmp.lt.s32.totalorder %s20, 4
      // Predicated region
      $region57: #{obj_decoder_forward.5} parent=5 // pred_check
        %p373 = pneg %p372
      $region58: #{obj_decoder_forward.5} parent=5 // pred_check_branch
        %375 = sbr.rel (%p373) target = $region60
      $region59: #{obj_decoder_forward.5} parent=5 // pred_region
        // Predicated region
        $region61: #{obj_decoder_forward.5} parent=59 // pred_check
          %p376 = pneg %p145
        $region62: #{obj_decoder_forward.5} parent=59 // pred_check_branch
          %378 = sbr.rel (%p376) target = $region64
        $region63: #{obj_decoder_forward.5} parent=59 // pred_region
          %p379 = scmp.lt.s32.totalorder %s20, 3
          %s380 = scalar_select %p379, %s20, 3
          %s381 = scalar_lea.vmem %s5, %s380
        $region64: #{obj_decoder_forward.5} parent=59 // pred_fallthru
          _
      $region60: #{obj_decoder_forward.5} parent=5 // pred_fallthru
        _
      %p382 = scmp.le.s32.totalorder 1, %s20
      %p383 = scmp.lt.s32.totalorder %s20, 5
      %p384 = pnand %p382, %p383
      %p385 = pneg %p384
      // Predicated region
      $region65: #{obj_decoder_forward.5} parent=5 // pred_check
        _
      $region66: #{obj_decoder_forward.5} parent=5 // pred_check_branch
        %387 = sbr.rel (%p384) target = $region68
      $region67: #{obj_decoder_forward.5} parent=5 // pred_region
        %s388 = ssub.s32 %s20, 1
        %p389 = pneg %p41
        %p390 = pneg %p38
        %p391 = pneg %p62
        %p392 = pneg %p59
        %p393 = pneg %p83
        %p394 = pneg %p80
        %p395 = pneg %p104
        %p396 = pneg %p101
        %p397 = pneg %p125
        %p398 = pneg %p122
        %p399 = scmp.lt.s32.totalorder %s25, 3
        %s400 = scalar_select %p399, %s25, 3
        %s401 = scalar_lea.vmem %s5, %s400
        %p402 = pneg %p151
        %p403 = pneg %p148
        %p404 = pneg %p172
        %p405 = pneg %p169
        %p406 = pneg %p193
        %p407 = pneg %p190
        %p408 = pneg %p214
        %p409 = pneg %p211
        %p410 = pneg %p235
        %p411 = pneg %p232
        %p412 = pneg %p256
        %p413 = pneg %p253
        %p414 = pneg %p277
        %p415 = pneg %p274
        %p416 = pneg %p298
        %p417 = pneg %p295
        %p418 = pneg %p324
        %p419 = pneg %p321
        %s420 = sand.u32 %s311, 1
        %s421 = sand.u32 %s311, 1
        %s422 = smul.addr %s421, 8
        %s423 = scalar_lea.vmem [#allocation3], %s422
        %p424 = scmp.lt.s32.totalorder %s25, 3
        %s425 = scalar_select %p424, %s25, 3
        %s426 = scalar_lea.vmem %s5, %s425
        %v428 = vld [vmem:[%s0] sm:$0x3]
        %v429 = vld [vmem:[%s0 + $0x2] sm:$0x3]
        %p430 = scmp.eq.s32.totalorder %s25, 0
        // Predicated region
        $region69: #{obj_decoder_forward.5} parent=67 // pred_check
          %p431 = pneg %p430
        $region70: #{obj_decoder_forward.5} parent=67 // pred_check_branch
          %433 = sbr.rel (%p431) target = $region72
        $region71: #{obj_decoder_forward.5} parent=67 // pred_region
          %v434 = vld [vmem:[%s1] sm:$0xf]
          %v435 = vld [vmem:[%s1 + $0x4] sm:$0xf]
          %v436 = vld [vmem:[%s1 + $0x8] sm:$0xf]
          %v437 = vld [vmem:[%s1 + $0xc] sm:$0xf]
          %v438 = vld [vmem:[%s2] sm:$0x1]
          %v440 = vperm.slane %v438, 0
          %443 = vst [vmem:[#allocation1] ss:$4 sm:$0xff] %v428
          %s445 = scalar_lea.vmem [#allocation1], 1
          %446 = vst [vmem:[%s445] ss:$4 sm:$0xff] %v429
          %v447 = vld.sshfl [vmem:[#allocation1] sm:$0xff pattern:$0x73625140]
          %v452 = vunpack.c.l.b16 %v434
          %v453 = vunpack.c.l.b16 %v435
          %v454 = vunpack.c.l.b16 %v436
          %v455 = vunpack.c.l.b16 %v437
          %v456 = vpack.c.b16 %v453, %v452
          %v457 = vpack.c.b16 %v455, %v454
          %vm460 = vcmask 261120
          %v461 = vsel %vm460, %v447, 0
          %463 = vmatpush.bf16.msra.mxu0 0
          %464 = vmatpush.bf16.msra.mxu0 0
          %465 = vmatpush.bf16.msra.mxu0 0
          %466 = vmatpush.bf16.msra.mxu0 0
          %467 = vmatpush.bf16.msra.mxu0 0
          %468 = vmatpush.bf16.msra.mxu0 0
          %469 = vmatpush.bf16.msra.mxu0 %v457
          %470 = vmatpush.bf16.msra.mxu0 %v456
          %471 = vmatmul.bf16.gmra.mxu0 %v461
          %v472 = vpop.f32.mrf.mxu0
          %v473 = vadd.f32 %v440, %v472
          %v474 = vpop.f32.mrf.mxu0
          %475 = vdwg.mxu0
          %v477 = vrot.slane %v473, 4
          %479 = vst [vmem:[%s12] sm:$0xf] %v473
          %480 = vst [vmem:[%s12 + $0x4] sm:$0xf] %v477
          %v481 = vld [vmem:[%s3] sm:$0xf]
          %v482 = vld [vmem:[%s3 + $0x4] sm:$0xf]
          %v483 = vld [vmem:[%s3 + $0x8] sm:$0xf]
          %v484 = vld [vmem:[%s3 + $0xc] sm:$0xf]
          %v485 = vld [vmem:[%s4] sm:$0x1]
          %v487 = vperm.slane %v485, 0
          %489 = vst [vmem:[#allocation1] ss:$4 sm:$0xff] %v428
          %s490 = scalar_lea.vmem [#allocation1], 1
          %491 = vst [vmem:[%s490] ss:$4 sm:$0xff] %v429
          %v492 = vld.sshfl [vmem:[#allocation1] sm:$0xff pattern:$0x73625140]
          %v497 = vunpack.c.l.b16 %v481
          %v498 = vunpack.c.l.b16 %v482
          %v499 = vunpack.c.l.b16 %v483
          %v500 = vunpack.c.l.b16 %v484
          %v501 = vpack.c.b16 %v498, %v497
          %v502 = vpack.c.b16 %v500, %v499
          %v505 = vsel %vm460, %v492, 0
          %507 = vmatpush.bf16.msra.mxu0 0
          %508 = vmatpush.bf16.msra.mxu0 0
          %509 = vmatpush.bf16.msra.mxu0 0
          %510 = vmatpush.bf16.msra.mxu0 0
          %511 = vmatpush.bf16.msra.mxu0 0
          %512 = vmatpush.bf16.msra.mxu0 0
          %513 = vmatpush.bf16.msra.mxu0 %v502
          %514 = vmatpush.bf16.msra.mxu0 %v501
          %515 = vmatmul.bf16.gmra.mxu0 %v505
          %v516 = vpop.f32.mrf.mxu0
          %v517 = vadd.f32 %v487, %v516
          %v518 = vpop.f32.mrf.mxu0
          %519 = vdwg.mxu0
          %v521 = vrot.slane %v517, 4
          %vm523 = vcmask 257024
          %524 = vst.msk [vmem:[#allocation2] sm:$0xf] %vm523, %v517
          %525 = vst.msk [vmem:[#allocation2 + $0x4] sm:$0xf] %vm523, %v521
        $region72: #{obj_decoder_forward.5} parent=67 // pred_fallthru
          _
        %v526 = vld [vmem:[#allocation2] sm:$0xf]
        %v527 = vld [vmem:[#allocation2 + $0x4] sm:$0xf]
        %v528 = vld [vmem:[%s426] sm:$0x1]
        %v530 = vperm.slane %v528, 0
        %v532 = vrot.slane %v530, 4
        %v534 = vadd.f32 %v526, %v530
        %v535 = vadd.f32 %v527, %v532
        %538 = vst [vmem:[#allocation1] ss:$2 sm:$0xff] %v534
        %s539 = scalar_lea.vmem [#allocation1], 1
        %540 = vst [vmem:[%s539] ss:$2 sm:$0xff] %v535
        %v541 = vld.sshfl [vmem:[#allocation1] sm:$0xff pattern:$0x75316420]
        %v543 = vpack.c.bf16 %v541, %v541
        %v544 = vld [vmem:[%s6] sm:$0xf]
        %v545 = vld [vmem:[%s6 + $0x4] sm:$0xf]
        %v546 = vld [vmem:[%s6 + $0x8] sm:$0xf]
        %v547 = vld [vmem:[%s6 + $0xc] sm:$0xf]
        %v548 = vld [vmem:[%s7] sm:$0x1]
        %v550 = vperm.slane %v548, 0
        %v556 = vunpack.c.l.b16 %v544
        %v557 = vunpack.c.l.b16 %v545
        %v558 = vunpack.c.l.b16 %v546
        %v559 = vunpack.c.l.b16 %v547
        %v560 = vpack.c.b16 %v557, %v556
        %v561 = vpack.c.b16 %v559, %v558
        %vm564 = vcmask 261120
        %v566 = vsel %vm564, %v543, 0
        %568 = vmatpush.bf16.msra.mxu0 0
        %569 = vmatpush.bf16.msra.mxu0 0
        %570 = vmatpush.bf16.msra.mxu0 0
        %571 = vmatpush.bf16.msra.mxu0 0
        %572 = vmatpush.bf16.msra.mxu0 0
        %573 = vmatpush.bf16.msra.mxu0 0
        %574 = vmatpush.bf16.msra.mxu0 %v561
        %575 = vmatpush.bf16.msra.mxu0 %v560
        %576 = vmatmul.bf16.gmra.mxu0 %v566
        %v577 = vpop.f32.mrf.mxu0
        %v578 = vadd.f32 %v550, %v577
        %v579 = vpop.f32.mrf.mxu0
        %580 = vdwg.mxu0
        %v581 = vmax.f32 %v578, 0.0
        %v582 = vpack.c.bf16 %v581, %v581
        %v583 = vld [vmem:[%s8] sm:$0xf]
        %v584 = vld [vmem:[%s8 + $0x4] sm:$0xf]
        %v585 = vld [vmem:[%s8 + $0x8] sm:$0xf]
        %v586 = vld [vmem:[%s8 + $0xc] sm:$0xf]
        %v587 = vld [vmem:[%s9] sm:$0x1]
        %v589 = vperm.slane %v587, 0
        %v595 = vunpack.c.l.b16 %v583
        %v596 = vunpack.c.l.b16 %v584
        %v597 = vunpack.c.l.b16 %v585
        %v598 = vunpack.c.l.b16 %v586
        %v599 = vpack.c.b16 %v596, %v595
        %v600 = vpack.c.b16 %v598, %v597
        %v604 = vsel %vm564, %v582, 0
        %606 = vmatpush.bf16.msra.mxu0 0
        %607 = vmatpush.bf16.msra.mxu0 0
        %608 = vmatpush.bf16.msra.mxu0 0
        %609 = vmatpush.bf16.msra.mxu0 0
        %610 = vmatpush.bf16.msra.mxu0 0
        %611 = vmatpush.bf16.msra.mxu0 0
        %612 = vmatpush.bf16.msra.mxu0 %v600
        %613 = vmatpush.bf16.msra.mxu0 %v599
        %614 = vmatmul.bf16.gmra.mxu0 %v604
        %v615 = vpop.f32.mrf.mxu0
        %v616 = vadd.f32 %v589, %v615
        %v617 = vpop.f32.mrf.mxu0
        %618 = vdwg.mxu0
        %v619 = vmax.f32 %v616, 0.0
        %v620 = vpack.c.bf16 %v619, %v619
        %v621 = vld [vmem:[%s10] sm:$0xf]
        %v622 = vld [vmem:[%s10 + $0x4] sm:$0xf]
        %v623 = vld [vmem:[%s10 + $0x8] sm:$0xf]
        %v624 = vld [vmem:[%s10 + $0xc] sm:$0xf]
        %v625 = vld [vmem:[%s11] sm:$0x1]
        %v627 = vperm.slane %v625, 0
        %v633 = vunpack.c.l.b16 %v621
        %v634 = vunpack.c.l.b16 %v622
        %v635 = vunpack.c.l.b16 %v623
        %v636 = vunpack.c.l.b16 %v624
        %v637 = vpack.c.b16 %v634, %v633
        %v638 = vpack.c.b16 %v636, %v635
        %v642 = vsel %vm564, %v620, 0
        %644 = vmatpush.bf16.msra.mxu0 0
        %645 = vmatpush.bf16.msra.mxu0 0
        %646 = vmatpush.bf16.msra.mxu0 0
        %647 = vmatpush.bf16.msra.mxu0 0
        %648 = vmatpush.bf16.msra.mxu0 0
        %649 = vmatpush.bf16.msra.mxu0 0
        %650 = vmatpush.bf16.msra.mxu0 %v638
        %651 = vmatpush.bf16.msra.mxu0 %v637
        %652 = vmatmul.bf16.gmra.mxu0 %v642
        %v653 = vpop.f32.mrf.mxu0
        %v654 = vadd.f32 %v627, %v653
        %v655 = vpop.f32.mrf.mxu0
        %656 = vdwg.mxu0
        %v657 = vxor.u32 %v654, 2147483648
        %v658 = vmul.f32 %v657, 1.442695
        %v659 = vpow.pop %v658
        %v660 = vadd.f32 %v659, 1.0
        %v661 = vrcp.pop %v660
        %v662 = vmul.f32 %v660, %v661
        %v663 = vsub.f32 1.0, %v662
        %v664 = vmul.f32 %v661, %v663
        %v665 = vadd.f32 %v661, %v664
        %vm666 = vweird.f32 %v660
        %vm667 = vweird.f32 %v661
        %vm668 = vmor %vm666, %vm667
        %v669 = vsel %vm668, %v661, %v665
        %v670 = vand.u32 2147483647, %v660
        %vm671 = vcmp.eq.f32.partialorder %v670, 8.507059e+37
        %v672 = vand.u32 %v660, 2147483648
        %v673 = vor.u32 1.1754944e-38, %v672
        %v674 = vsel %vm671, %v673, %v669
        %v675 = vmul.f32 1.0, %v674
        %v677 = vrot.slane %v675, 4
        %679 = vst [vmem:[%s423] sm:$0xf] %v675
        %680 = vst [vmem:[%s423 + $0x4] sm:$0xf] %v677
        %s681 = sand.u32 %s311, 1
        %s682 = sand.u32 %s311, 1
        %s683 = smul.addr %s682, 8
        %s684 = scalar_lea.vmem [#allocation3], %s683
        // Predicated region
        $region73: #{obj_decoder_forward.5} parent=67 // pred_check
          %p685 = pneg %p295
        $region74: #{obj_decoder_forward.5} parent=67 // pred_check_branch
          %687 = sbr.rel (%p685) target = $region76
        $region75: #{obj_decoder_forward.5} parent=67 // pred_region
          _
        $region76: #{obj_decoder_forward.5} parent=67 // pred_fallthru
          _
        // Predicated region
        $region77: #{obj_decoder_forward.5} parent=67 // pred_check
          %p688 = pneg %p321
        $region78: #{obj_decoder_forward.5} parent=67 // pred_check_branch
          %690 = sbr.rel (%p688) target = $region80
        $region79: #{obj_decoder_forward.5} parent=67 // pred_region
          %s691 = smul.addr %s25, 4
          %s692 = scalar_lea.vmem %s13, %s691
          // Predicated region
          $region81: #{obj_decoder_forward.5} parent=79 // pred_check
            _
          $region82: #{obj_decoder_forward.5} parent=79 // pred_check_branch
            %694 = sbr.rel (0) target = $region84
          $region83: #{obj_decoder_forward.5} parent=79 // pred_region
            // Predicated region
            $region85: #{obj_decoder_forward.5} parent=83 // pred_check
              _
            $region86: #{obj_decoder_forward.5} parent=83 // pred_check_branch
              %696 = sbr.rel target = $region88
            $region87: #{obj_decoder_forward.5} parent=83 // pred_region
              // Predicated region
              $region100: #{obj_decoder_forward.5} parent=87 // pred_check
                _
              $region101: #{obj_decoder_forward.5} parent=87 // pred_check_branch
                %714 = sbr.rel (0) target = $region103
              $region102: #{obj_decoder_forward.5} parent=87 // pred_region
                loop: start=0, step=1, limit=1
                $region104: #{obj_decoder_forward.5} parent=102 // loop_pre_header
                  _
                $region105: #{obj_decoder_forward.5} parent=102 // loop_header
                  %s716 = sphi 0, %s720
                  %p717 = scmp.ge.s32.totalorder %s716, 1
                  %s721 = sphi %s684, %s684
                  %s722 = sphi %s692, %s692
                $region106: #{obj_decoder_forward.5} parent=102 // loop_header_branch
                  %719 = sbr.rel (%p717) target = $region110
                $region107: #{obj_decoder_forward.5} parent=102 // loop_body
                  _
                $region108: #{obj_decoder_forward.5} parent=102 // loop_footer
                  %s720 = sadd.s32 1, %s716
                $region109: #{obj_decoder_forward.5} parent=102 // loop_footer_branch
                  %715 = sbr.rel target = $region105
                $region110: #{obj_decoder_forward.5} parent=102 // loop_exit
                  _
                %s724 = ssub.s32 16, 1
                loop: start=0, step=1, limit=1
                $region111: #{obj_decoder_forward.5} parent=102 // loop_pre_header
                  _
                $region112: #{obj_decoder_forward.5} parent=102 // loop_header
                  %s726 = sphi 0, %s730
                  %p727 = scmp.ge.s32.totalorder %s726, 1
                  %s731 = sphi %s684, %s684
                  %s732 = sphi %s692, %s692
                $region113: #{obj_decoder_forward.5} parent=102 // loop_header_branch
                  %729 = sbr.rel (%p727) target = $region117
                $region114: #{obj_decoder_forward.5} parent=102 // loop_body
                  %v733 = vld [vmem:[%s731] sm:%s724]
                  %734 = vst [vmem:[%s732] sm:%s724] %v733
                  %v735 = vld [vmem:[%s731 + $0x4] sm:%s724]
                  %736 = vst [vmem:[%s732 + $0x10] sm:%s724] %v735
                $region115: #{obj_decoder_forward.5} parent=102 // loop_footer
                  %s730 = sadd.s32 1, %s726
                $region116: #{obj_decoder_forward.5} parent=102 // loop_footer_branch
                  %725 = sbr.rel target = $region112
                $region117: #{obj_decoder_forward.5} parent=102 // loop_exit
                  _
              $region103: #{obj_decoder_forward.5} parent=87 // pred_fallthru
                _
            $region88: #{obj_decoder_forward.5} parent=83 // pred_fallthru
              _
            // Predicated region
            $region89: #{obj_decoder_forward.5} parent=83 // pred_check
              _
            $region90: #{obj_decoder_forward.5} parent=83 // pred_check_branch
              %698 = sbr.rel (0) target = $region92
            $region91: #{obj_decoder_forward.5} parent=83 // pred_region
              %s700 = ssub.s32 16, 1
              loop: start=0, step=1, limit=1
              $region93: #{obj_decoder_forward.5} parent=91 // loop_pre_header
                _
              $region94: #{obj_decoder_forward.5} parent=91 // loop_header
                %s702 = sphi 0, %s706
                %p703 = scmp.ge.s32.totalorder %s702, 1
                %s707 = sphi %s684, %s684
                %s708 = sphi %s692, %s692
              $region95: #{obj_decoder_forward.5} parent=91 // loop_header_branch
                %705 = sbr.rel (%p703) target = $region99
              $region96: #{obj_decoder_forward.5} parent=91 // loop_body
                %v709 = vld [vmem:[%s707] sm:%s700]
                %710 = vst [vmem:[%s708] sm:%s700] %v709
                %v711 = vld [vmem:[%s707 + $0x4] sm:%s700]
                %712 = vst [vmem:[%s708 + $0x10] sm:%s700] %v711
              $region97: #{obj_decoder_forward.5} parent=91 // loop_footer
                %s706 = sadd.s32 1, %s702
              $region98: #{obj_decoder_forward.5} parent=91 // loop_footer_branch
                %701 = sbr.rel target = $region94
              $region99: #{obj_decoder_forward.5} parent=91 // loop_exit
                _
            $region92: #{obj_decoder_forward.5} parent=83 // pred_fallthru
              _
          $region84: #{obj_decoder_forward.5} parent=79 // pred_fallthru
            _
          %737 = vnop
        $region80: #{obj_decoder_forward.5} parent=67 // pred_fallthru
          _
        // Predicated region
        $region118: #{obj_decoder_forward.5} parent=67 // pred_check
          %p738 = pneg %p295
        $region119: #{obj_decoder_forward.5} parent=67 // pred_check_branch
          %740 = sbr.rel (%p738) target = $region121
        $region120: #{obj_decoder_forward.5} parent=67 // pred_region
          _
        $region121: #{obj_decoder_forward.5} parent=67 // pred_fallthru
          _
      $region68: #{obj_decoder_forward.5} parent=5 // pred_fallthru
        _
      %p741 = scmp.le.s32.totalorder 2, %s20
      // Predicated region
      $region122: #{obj_decoder_forward.5} parent=5 // pred_check
        %p742 = pneg %p741
      $region123: #{obj_decoder_forward.5} parent=5 // pred_check_branch
        %744 = sbr.rel (%p742) target = $region125
      $region124: #{obj_decoder_forward.5} parent=5 // pred_region
        %s745 = ssub.s32 %s20, 2
        // Predicated region
        $region126: #{obj_decoder_forward.5} parent=124 // pred_check
          %p746 = pneg %p327
        $region127: #{obj_decoder_forward.5} parent=124 // pred_check_branch
          %748 = sbr.rel (%p746) target = $region129
        $region128: #{obj_decoder_forward.5} parent=124 // pred_region
          %s749 = sand.u32 %s312, 1
          %s750 = sand.u32 %s312, 1
          %s751 = smul.addr %s750, 8
          %s752 = scalar_lea.vmem [#allocation3], %s751
        $region129: #{obj_decoder_forward.5} parent=124 // pred_fallthru
          _
      $region125: #{obj_decoder_forward.5} parent=5 // pred_fallthru
        _
    $region6: #{obj_decoder_forward.5} parent=1 // loop_footer
      %s24 = sadd.s32 1, %s20
    $region7: #{obj_decoder_forward.5} parent=1 // loop_footer_branch
      %19 = sbr.rel target = $region3
    $region8: #{obj_decoder_forward.5} parent=1 // loop_exit
      _

// kernel: obj_decoder_forward.4
$region0: #{obj_decoder_forward.4}
  #allocation0 [shape = 'u32[]', space=smem, size = 0x4, offset = 0x4, fixed_abs, tag = 'smem constant byte address 0x4 - core index']
  #allocation1 [shape = 'u32[72,128]{1,0:T(1,128)}', space=vmem, size = 0x9000, scoped, tag = 'internal scratch']
  #allocation2 [shape = 'f32[2,4,32]{2,1,0:T(4,128)}', space=vmem, size = 0x1000, scoped, tag = 'scratch operand']
  %s0 = inlined_call_operand.vmem [shape: bf16[2,64,32], index: 0, kind: input, shape index: {}]
  %s1 = inlined_call_operand.vmem [shape: bf16[4,32], index: 1, kind: input, shape index: {}]
  %s2 = inlined_call_operand.vmem [shape: bf16[2,32,32], index: 2, kind: input, shape index: {}]
  %s3 = inlined_call_operand.vmem [shape: f32[2,1,32], index: 3, kind: input, shape index: {}]
  %s4 = inlined_call_operand.vmem [shape: bf16[2,32,32], index: 4, kind: input, shape index: {}]
  %s5 = inlined_call_operand.vmem [shape: f32[2,1,32], index: 5, kind: input, shape index: {}]
  %s6 = inlined_call_operand.vmem [shape: bf16[2,32,32], index: 6, kind: input, shape index: {}]
  %s7 = inlined_call_operand.vmem [shape: f32[2,1,32], index: 7, kind: input, shape index: {}]
  %s8 = inlined_call_operand.vmem [shape: bf16[2,32,32], index: 8, kind: input, shape index: {}]
  %s9 = inlined_call_operand.vmem [shape: f32[2,1,32], index: 9, kind: input, shape index: {}]
  %s10 = inlined_call_operand.vmem [shape: f32[2,1,32], index: 10, kind: input, shape index: {}]
  %s11 = inlined_call_operand.vmem [shape: f32[2,1,32], index: 11, kind: input, shape index: {}]
  %s12 = inlined_call_operand.vmem [shape: bf16[2,32,128], index: 12, kind: input, shape index: {}]
  %s13 = inlined_call_operand.vmem [shape: f32[2,1,128], index: 13, kind: input, shape index: {}]
  %s14 = inlined_call_operand.vmem [shape: bf16[2,128,32], index: 14, kind: input, shape index: {}]
  %s15 = inlined_call_operand.vmem [shape: f32[2,1,32], index: 15, kind: input, shape index: {}]
  %s16 = inlined_call_operand.vmem [shape: f32[2,1,32], index: 16, kind: input, shape index: {}]
  %s17 = inlined_call_operand.hbm [shape: f32[2,1,32], index: 17, kind: input, shape index: {}]
  %s18 = inlined_call_operand.vmem [shape: bf16[2,2,4,32], index: 18, kind: output, shape index: {0}]
  %s19 = inlined_call_operand.hbm [shape: f32[2,4,64], index: 19, kind: output, shape index: {1}]
  %20 = xla_tuple %s18, %s19
  %s21 = sld [smem:[#allocation0]]
  $region125: #{obj_decoder_forward.4} parent=0
    _
  %s23 = ssub.s32 1, %s21
  %s24 = scalar_select 0, %s23, %s21
  $region1: #{obj_decoder_forward.4} parent=0
    #allocation3 [shape = 'u8[1024]{0}', space=vmem, size = 0x400, scoped, tag = 'input window, operand 17']
    #allocation4 [shape = 's32[2]{0}', space=sflag, size = 0x8, scoped, tag = 'scoped memory for obj_decoder_forward.4']
    #allocation5 [shape = 's32[2]{0}', space=sflag, size = 0x8, scoped, tag = 'scoped memory for obj_decoder_forward.4']
    #allocation6 [shape = 'u8[4096]{0}', space=vmem, size = 0x1000, scoped, tag = 'output window, operand 1, single buffered']
    %25 = vsyncpa [#allocation4], 0
    %s26 = scalar_lea.sflag [#allocation4], 1
    %27 = vsyncpa %s26, 0
    %28 = vsyncpa [#allocation5], 0
    loop: start=0, step=1, limit=4
    $region2: #{obj_decoder_forward.4} parent=1 // loop_pre_header
      _
    $region3: #{obj_decoder_forward.4} parent=1 // loop_header
      %s30 = sphi 0, %s34
      %p31 = scmp.ge.s32.totalorder %s30, 4
      %s38 = sphi 0, %s38
      %s40 = sphi 0, %s38
      %s41 = sphi 0, %s40
      %s55 = sphi 0, %s41
      %s59 = sphi 0, %s59
      %s61 = sphi 0, %s59
      %s62 = sphi 0, %s61
      %s76 = sphi 0, %s62
      %s82 = sphi 0, %s84
      %s85 = sphi 0, %s82
      %s86 = sphi 0, %s85
      %s102 = sphi 0, %s86
      %s108 = sphi 0, %s110
      %s111 = sphi 0, %s108
      %s112 = sphi 0, %s111
      %s128 = sphi 0, %s112
      %s134 = sphi 0, %s136
      %s137 = sphi 0, %s134
      %s138 = sphi 0, %s137
      %s154 = sphi 0, %s138
      %s160 = sphi 0, %s162
      %s163 = sphi 0, %s160
      %s164 = sphi 0, %s163
      %s180 = sphi 0, %s164
      %s186 = sphi 0, %s188
      %s189 = sphi 0, %s186
      %s190 = sphi 0, %s189
      %s206 = sphi 0, %s190
      %s212 = sphi 0, %s214
      %s215 = sphi 0, %s212
      %s216 = sphi 0, %s215
      %s232 = sphi 0, %s216
      %s238 = sphi 0, %s240
      %s241 = sphi 0, %s238
      %s242 = sphi 0, %s241
      %s258 = sphi 0, %s242
      %s264 = sphi 0, %s266
      %s267 = sphi 0, %s264
      %s268 = sphi 0, %s267
      %s284 = sphi 0, %s268
      %s290 = sphi 0, %s292
      %s293 = sphi 0, %s290
      %s294 = sphi 0, %s293
      %s310 = sphi 0, %s294
      %s316 = sphi 0, %s318
      %s319 = sphi 0, %s316
      %s320 = sphi 0, %s319
      %s336 = sphi 0, %s320
      %s342 = sphi 0, %s344
      %s345 = sphi 0, %s342
      %s346 = sphi 0, %s345
      %s362 = sphi 0, %s346
      %s368 = sphi 0, %s370
      %s371 = sphi 0, %s368
      %s372 = sphi 0, %s371
      %s388 = sphi 0, %s372
      %s394 = sphi 0, %s396
      %s397 = sphi 0, %s394
      %s398 = sphi 0, %s397
      %s414 = sphi 0, %s398
      %s420 = sphi 0, %s422
      %s423 = sphi 0, %s420
      %s424 = sphi 0, %s423
      %s440 = sphi 0, %s424
      %s446 = sphi 0, %s448
      %s449 = sphi 0, %s446
      %s450 = sphi 0, %s449
      %s466 = sphi 0, %s450
      %s472 = sphi 0, %s474
      %s475 = sphi 0, %s472
      %s476 = sphi 0, %s475
      %s492 = sphi 0, %s476
      %s498 = sphi 0, %s500
      %s501 = sphi 0, %s498
      %s502 = sphi 0, %s501
      %s518 = sphi 0, %s502
      %s522 = sphi 0, %s522
      %s524 = sphi 0, %s522
      %s525 = sphi 0, %s524
      %s539 = sphi 0, %s525
    $region4: #{obj_decoder_forward.4} parent=1 // loop_header_branch
      %33 = sbr.rel (%p31) target = $region8
    $region5: #{obj_decoder_forward.4} parent=1 // loop_body
      %s35 = ssub.s32 %s30, 1
      %s36 = ssub.s32 %s30, 2
      %s37 = sadd.s32 %s30, 1
      %s39 = sadd.s32 %s38, 1
      %p42 = scmp.eq.s32.totalorder %s30, 1
      %p43 = scmp.ne.s32.totalorder %s38, %s40
      %p44 = scmp.eq.s32.totalorder %s30, 0
      %p45 = por %p43, %p44
      %p46 = scmp.ne.s32.totalorder %s38, %s40
      %p47 = scmp.eq.s32.totalorder %s35, 1
      %p48 = por %p46, %p47
      %p49 = scmp.ne.s32.totalorder %s40, %s41
      %p50 = scmp.eq.s32.totalorder %s35, 0
      %p51 = por %p49, %p50
      %p52 = scmp.ne.s32.totalorder %s40, %s41
      %p53 = scmp.eq.s32.totalorder %s36, 1
      %p54 = por %p52, %p53
      %p56 = scmp.ne.s32.totalorder %s41, %s55
      %p57 = scmp.eq.s32.totalorder %s36, 0
      %p58 = por %p56, %p57
      %s60 = sadd.s32 %s59, 1
      %p63 = scmp.eq.s32.totalorder %s30, 1
      %p64 = scmp.ne.s32.totalorder %s59, %s61
      %p65 = scmp.eq.s32.totalorder %s30, 0
      %p66 = por %p64, %p65
      %p67 = scmp.ne.s32.totalorder %s59, %s61
      %p68 = scmp.eq.s32.totalorder %s35, 1
      %p69 = por %p67, %p68
      %p70 = scmp.ne.s32.totalorder %s61, %s62
      %p71 = scmp.eq.s32.totalorder %s35, 0
      %p72 = por %p70, %p71
      %p73 = scmp.ne.s32.totalorder %s61, %s62
      %p74 = scmp.eq.s32.totalorder %s36, 1
      %p75 = por %p73, %p74
      %p77 = scmp.ne.s32.totalorder %s62, %s76
      %p78 = scmp.eq.s32.totalorder %s36, 0
      %p79 = por %p77, %p78
      %s80 = ssub.s32 %s30, %s37
      %p81 = scmp.eq.s32.totalorder %s80, 0
      %s83 = sadd.s32 %s82, 1
      %s84 = scalar_select %p81, %s82, %s83
      %p87 = pneg %p81
      %p88 = scmp.eq.s32.totalorder %s30, 1
      %p89 = por %p87, %p88
      %p90 = scmp.ne.s32.totalorder %s82, %s85
      %p91 = scmp.eq.s32.totalorder %s30, 0
      %p92 = por %p90, %p91
      %p93 = scmp.ne.s32.totalorder %s82, %s85
      %p94 = scmp.eq.s32.totalorder %s35, 1
      %p95 = por %p93, %p94
      %p96 = scmp.ne.s32.totalorder %s85, %s86
      %p97 = scmp.eq.s32.totalorder %s35, 0
      %p98 = por %p96, %p97
      %p99 = scmp.ne.s32.totalorder %s85, %s86
      %p100 = scmp.eq.s32.totalorder %s36, 1
      %p101 = por %p99, %p100
      %p103 = scmp.ne.s32.totalorder %s86, %s102
      %p104 = scmp.eq.s32.totalorder %s36, 0
      %p105 = por %p103, %p104
      %s106 = ssub.s32 %s30, %s37
      %p107 = scmp.eq.s32.totalorder %s106, 0
      %s109 = sadd.s32 %s108, 1
      %s110 = scalar_select %p107, %s108, %s109
      %p113 = pneg %p107
      %p114 = scmp.eq.s32.totalorder %s30, 1
      %p115 = por %p113, %p114
      %p116 = scmp.ne.s32.totalorder %s108, %s111
      %p117 = scmp.eq.s32.totalorder %s30, 0
      %p118 = por %p116, %p117
      %p119 = scmp.ne.s32.totalorder %s108, %s111
      %p120 = scmp.eq.s32.totalorder %s35, 1
      %p121 = por %p119, %p120
      %p122 = scmp.ne.s32.totalorder %s111, %s112
      %p123 = scmp.eq.s32.totalorder %s35, 0
      %p124 = por %p122, %p123
      %p125 = scmp.ne.s32.totalorder %s111, %s112
      %p126 = scmp.eq.s32.totalorder %s36, 1
      %p127 = por %p125, %p126
      %p129 = scmp.ne.s32.totalorder %s112, %s128
      %p130 = scmp.eq.s32.totalorder %s36, 0
      %p131 = por %p129, %p130
      %s132 = ssub.s32 %s30, %s37
      %p133 = scmp.eq.s32.totalorder %s132, 0
      %s135 = sadd.s32 %s134, 1
      %s136 = scalar_select %p133, %s134, %s135
      %p139 = pneg %p133
      %p140 = scmp.eq.s32.totalorder %s30, 1
      %p141 = por %p139, %p140
      %p142 = scmp.ne.s32.totalorder %s134, %s137
      %p143 = scmp.eq.s32.totalorder %s30, 0
      %p144 = por %p142, %p143
      %p145 = scmp.ne.s32.totalorder %s134, %s137
      %p146 = scmp.eq.s32.totalorder %s35, 1
      %p147 = por %p145, %p146
      %p148 = scmp.ne.s32.totalorder %s137, %s138
      %p149 = scmp.eq.s32.totalorder %s35, 0
      %p150 = por %p148, %p149
      %p151 = scmp.ne.s32.totalorder %s137, %s138
      %p152 = scmp.eq.s32.totalorder %s36, 1
      %p153 = por %p151, %p152
      %p155 = scmp.ne.s32.totalorder %s138, %s154
      %p156 = scmp.eq.s32.totalorder %s36, 0
      %p157 = por %p155, %p156
      %s158 = ssub.s32 %s30, %s37
      %p159 = scmp.eq.s32.totalorder %s158, 0
      %s161 = sadd.s32 %s160, 1
      %s162 = scalar_select %p159, %s160, %s161
      %p165 = pneg %p159
      %p166 = scmp.eq.s32.totalorder %s30, 1
      %p167 = por %p165, %p166
      %p168 = scmp.ne.s32.totalorder %s160, %s163
      %p169 = scmp.eq.s32.totalorder %s30, 0
      %p170 = por %p168, %p169
      %p171 = scmp.ne.s32.totalorder %s160, %s163
      %p172 = scmp.eq.s32.totalorder %s35, 1
      %p173 = por %p171, %p172
      %p174 = scmp.ne.s32.totalorder %s163, %s164
      %p175 = scmp.eq.s32.totalorder %s35, 0
      %p176 = por %p174, %p175
      %p177 = scmp.ne.s32.totalorder %s163, %s164
      %p178 = scmp.eq.s32.totalorder %s36, 1
      %p179 = por %p177, %p178
      %p181 = scmp.ne.s32.totalorder %s164, %s180
      %p182 = scmp.eq.s32.totalorder %s36, 0
      %p183 = por %p181, %p182
      %s184 = ssub.s32 %s30, %s37
      %p185 = scmp.eq.s32.totalorder %s184, 0
      %s187 = sadd.s32 %s186, 1
      %s188 = scalar_select %p185, %s186, %s187
      %p191 = pneg %p185
      %p192 = scmp.eq.s32.totalorder %s30, 1
      %p193 = por %p191, %p192
      %p194 = scmp.ne.s32.totalorder %s186, %s189
      %p195 = scmp.eq.s32.totalorder %s30, 0
      %p196 = por %p194, %p195
      %p197 = scmp.ne.s32.totalorder %s186, %s189
      %p198 = scmp.eq.s32.totalorder %s35, 1
      %p199 = por %p197, %p198
      %p200 = scmp.ne.s32.totalorder %s189, %s190
      %p201 = scmp.eq.s32.totalorder %s35, 0
      %p202 = por %p200, %p201
      %p203 = scmp.ne.s32.totalorder %s189, %s190
      %p204 = scmp.eq.s32.totalorder %s36, 1
      %p205 = por %p203, %p204
      %p207 = scmp.ne.s32.totalorder %s190, %s206
      %p208 = scmp.eq.s32.totalorder %s36, 0
      %p209 = por %p207, %p208
      %s210 = ssub.s32 %s30, %s37
      %p211 = scmp.eq.s32.totalorder %s210, 0
      %s213 = sadd.s32 %s212, 1
      %s214 = scalar_select %p211, %s212, %s213
      %p217 = pneg %p211
      %p218 = scmp.eq.s32.totalorder %s30, 1
      %p219 = por %p217, %p218
      %p220 = scmp.ne.s32.totalorder %s212, %s215
      %p221 = scmp.eq.s32.totalorder %s30, 0
      %p222 = por %p220, %p221
      %p223 = scmp.ne.s32.totalorder %s212, %s215
      %p224 = scmp.eq.s32.totalorder %s35, 1
      %p225 = por %p223, %p224
      %p226 = scmp.ne.s32.totalorder %s215, %s216
      %p227 = scmp.eq.s32.totalorder %s35, 0
      %p228 = por %p226, %p227
      %p229 = scmp.ne.s32.totalorder %s215, %s216
      %p230 = scmp.eq.s32.totalorder %s36, 1
      %p231 = por %p229, %p230
      %p233 = scmp.ne.s32.totalorder %s216, %s232
      %p234 = scmp.eq.s32.totalorder %s36, 0
      %p235 = por %p233, %p234
      %s236 = ssub.s32 %s30, %s37
      %p237 = scmp.eq.s32.totalorder %s236, 0
      %s239 = sadd.s32 %s238, 1
      %s240 = scalar_select %p237, %s238, %s239
      %p243 = pneg %p237
      %p244 = scmp.eq.s32.totalorder %s30, 1
      %p245 = por %p243, %p244
      %p246 = scmp.ne.s32.totalorder %s238, %s241
      %p247 = scmp.eq.s32.totalorder %s30, 0
      %p248 = por %p246, %p247
      %p249 = scmp.ne.s32.totalorder %s238, %s241
      %p250 = scmp.eq.s32.totalorder %s35, 1
      %p251 = por %p249, %p250
      %p252 = scmp.ne.s32.totalorder %s241, %s242
      %p253 = scmp.eq.s32.totalorder %s35, 0
      %p254 = por %p252, %p253
      %p255 = scmp.ne.s32.totalorder %s241, %s242
      %p256 = scmp.eq.s32.totalorder %s36, 1
      %p257 = por %p255, %p256
      %p259 = scmp.ne.s32.totalorder %s242, %s258
      %p260 = scmp.eq.s32.totalorder %s36, 0
      %p261 = por %p259, %p260
      %s262 = ssub.s32 %s30, %s37
      %p263 = scmp.eq.s32.totalorder %s262, 0
      %s265 = sadd.s32 %s264, 1
      %s266 = scalar_select %p263, %s264, %s265
      %p269 = pneg %p263
      %p270 = scmp.eq.s32.totalorder %s30, 1
      %p271 = por %p269, %p270
      %p272 = scmp.ne.s32.totalorder %s264, %s267
      %p273 = scmp.eq.s32.totalorder %s30, 0
      %p274 = por %p272, %p273
      %p275 = scmp.ne.s32.totalorder %s264, %s267
      %p276 = scmp.eq.s32.totalorder %s35, 1
      %p277 = por %p275, %p276
      %p278 = scmp.ne.s32.totalorder %s267, %s268
      %p279 = scmp.eq.s32.totalorder %s35, 0
      %p280 = por %p278, %p279
      %p281 = scmp.ne.s32.totalorder %s267, %s268
      %p282 = scmp.eq.s32.totalorder %s36, 1
      %p283 = por %p281, %p282
      %p285 = scmp.ne.s32.totalorder %s268, %s284
      %p286 = scmp.eq.s32.totalorder %s36, 0
      %p287 = por %p285, %p286
      %s288 = ssub.s32 %s30, %s37
      %p289 = scmp.eq.s32.totalorder %s288, 0
      %s291 = sadd.s32 %s290, 1
      %s292 = scalar_select %p289, %s290, %s291
      %p295 = pneg %p289
      %p296 = scmp.eq.s32.totalorder %s30, 1
      %p297 = por %p295, %p296
      %p298 = scmp.ne.s32.totalorder %s290, %s293
      %p299 = scmp.eq.s32.totalorder %s30, 0
      %p300 = por %p298, %p299
      %p301 = scmp.ne.s32.totalorder %s290, %s293
      %p302 = scmp.eq.s32.totalorder %s35, 1
      %p303 = por %p301, %p302
      %p304 = scmp.ne.s32.totalorder %s293, %s294
      %p305 = scmp.eq.s32.totalorder %s35, 0
      %p306 = por %p304, %p305
      %p307 = scmp.ne.s32.totalorder %s293, %s294
      %p308 = scmp.eq.s32.totalorder %s36, 1
      %p309 = por %p307, %p308
      %p311 = scmp.ne.s32.totalorder %s294, %s310
      %p312 = scmp.eq.s32.totalorder %s36, 0
      %p313 = por %p311, %p312
      %s314 = ssub.s32 %s30, %s37
      %p315 = scmp.eq.s32.totalorder %s314, 0
      %s317 = sadd.s32 %s316, 1
      %s318 = scalar_select %p315, %s316, %s317
      %p321 = pneg %p315
      %p322 = scmp.eq.s32.totalorder %s30, 1
      %p323 = por %p321, %p322
      %p324 = scmp.ne.s32.totalorder %s316, %s319
      %p325 = scmp.eq.s32.totalorder %s30, 0
      %p326 = por %p324, %p325
      %p327 = scmp.ne.s32.totalorder %s316, %s319
      %p328 = scmp.eq.s32.totalorder %s35, 1
      %p329 = por %p327, %p328
      %p330 = scmp.ne.s32.totalorder %s319, %s320
      %p331 = scmp.eq.s32.totalorder %s35, 0
      %p332 = por %p330, %p331
      %p333 = scmp.ne.s32.totalorder %s319, %s320
      %p334 = scmp.eq.s32.totalorder %s36, 1
      %p335 = por %p333, %p334
      %p337 = scmp.ne.s32.totalorder %s320, %s336
      %p338 = scmp.eq.s32.totalorder %s36, 0
      %p339 = por %p337, %p338
      %s340 = ssub.s32 %s30, %s37
      %p341 = scmp.eq.s32.totalorder %s340, 0
      %s343 = sadd.s32 %s342, 1
      %s344 = scalar_select %p341, %s342, %s343
      %p347 = pneg %p341
      %p348 = scmp.eq.s32.totalorder %s30, 1
      %p349 = por %p347, %p348
      %p350 = scmp.ne.s32.totalorder %s342, %s345
      %p351 = scmp.eq.s32.totalorder %s30, 0
      %p352 = por %p350, %p351
      %p353 = scmp.ne.s32.totalorder %s342, %s345
      %p354 = scmp.eq.s32.totalorder %s35, 1
      %p355 = por %p353, %p354
      %p356 = scmp.ne.s32.totalorder %s345, %s346
      %p357 = scmp.eq.s32.totalorder %s35, 0
      %p358 = por %p356, %p357
      %p359 = scmp.ne.s32.totalorder %s345, %s346
      %p360 = scmp.eq.s32.totalorder %s36, 1
      %p361 = por %p359, %p360
      %p363 = scmp.ne.s32.totalorder %s346, %s362
      %p364 = scmp.eq.s32.totalorder %s36, 0
      %p365 = por %p363, %p364
      %s366 = ssub.s32 %s30, %s37
      %p367 = scmp.eq.s32.totalorder %s366, 0
      %s369 = sadd.s32 %s368, 1
      %s370 = scalar_select %p367, %s368, %s369
      %p373 = pneg %p367
      %p374 = scmp.eq.s32.totalorder %s30, 1
      %p375 = por %p373, %p374
      %p376 = scmp.ne.s32.totalorder %s368, %s371
      %p377 = scmp.eq.s32.totalorder %s30, 0
      %p378 = por %p376, %p377
      %p379 = scmp.ne.s32.totalorder %s368, %s371
      %p380 = scmp.eq.s32.totalorder %s35, 1
      %p381 = por %p379, %p380
      %p382 = scmp.ne.s32.totalorder %s371, %s372
      %p383 = scmp.eq.s32.totalorder %s35, 0
      %p384 = por %p382, %p383
      %p385 = scmp.ne.s32.totalorder %s371, %s372
      %p386 = scmp.eq.s32.totalorder %s36, 1
      %p387 = por %p385, %p386
      %p389 = scmp.ne.s32.totalorder %s372, %s388
      %p390 = scmp.eq.s32.totalorder %s36, 0
      %p391 = por %p389, %p390
      %s392 = ssub.s32 %s30, %s37
      %p393 = scmp.eq.s32.totalorder %s392, 0
      %s395 = sadd.s32 %s394, 1
      %s396 = scalar_select %p393, %s394, %s395
      %p399 = pneg %p393
      %p400 = scmp.eq.s32.totalorder %s30, 1
      %p401 = por %p399, %p400
      %p402 = scmp.ne.s32.totalorder %s394, %s397
      %p403 = scmp.eq.s32.totalorder %s30, 0
      %p404 = por %p402, %p403
      %p405 = scmp.ne.s32.totalorder %s394, %s397
      %p406 = scmp.eq.s32.totalorder %s35, 1
      %p407 = por %p405, %p406
      %p408 = scmp.ne.s32.totalorder %s397, %s398
      %p409 = scmp.eq.s32.totalorder %s35, 0
      %p410 = por %p408, %p409
      %p411 = scmp.ne.s32.totalorder %s397, %s398
      %p412 = scmp.eq.s32.totalorder %s36, 1
      %p413 = por %p411, %p412
      %p415 = scmp.ne.s32.totalorder %s398, %s414
      %p416 = scmp.eq.s32.totalorder %s36, 0
      %p417 = por %p415, %p416
      %s418 = ssub.s32 %s30, %s37
      %p419 = scmp.eq.s32.totalorder %s418, 0
      %s421 = sadd.s32 %s420, 1
      %s422 = scalar_select %p419, %s420, %s421
      %p425 = pneg %p419
      %p426 = scmp.eq.s32.totalorder %s30, 1
      %p427 = por %p425, %p426
      %p428 = scmp.ne.s32.totalorder %s420, %s423
      %p429 = scmp.eq.s32.totalorder %s30, 0
      %p430 = por %p428, %p429
      %p431 = scmp.ne.s32.totalorder %s420, %s423
      %p432 = scmp.eq.s32.totalorder %s35, 1
      %p433 = por %p431, %p432
      %p434 = scmp.ne.s32.totalorder %s423, %s424
      %p435 = scmp.eq.s32.totalorder %s35, 0
      %p436 = por %p434, %p435
      %p437 = scmp.ne.s32.totalorder %s423, %s424
      %p438 = scmp.eq.s32.totalorder %s36, 1
      %p439 = por %p437, %p438
      %p441 = scmp.ne.s32.totalorder %s424, %s440
      %p442 = scmp.eq.s32.totalorder %s36, 0
      %p443 = por %p441, %p442
      %s444 = ssub.s32 %s30, %s37
      %p445 = scmp.eq.s32.totalorder %s444, 0
      %s447 = sadd.s32 %s446, 1
      %s448 = scalar_select %p445, %s446, %s447
      %p451 = pneg %p445
      %p452 = scmp.eq.s32.totalorder %s30, 1
      %p453 = por %p451, %p452
      %p454 = scmp.ne.s32.totalorder %s446, %s449
      %p455 = scmp.eq.s32.totalorder %s30, 0
      %p456 = por %p454, %p455
      %p457 = scmp.ne.s32.totalorder %s446, %s449
      %p458 = scmp.eq.s32.totalorder %s35, 1
      %p459 = por %p457, %p458
      %p460 = scmp.ne.s32.totalorder %s449, %s450
      %p461 = scmp.eq.s32.totalorder %s35, 0
      %p462 = por %p460, %p461
      %p463 = scmp.ne.s32.totalorder %s449, %s450
      %p464 = scmp.eq.s32.totalorder %s36, 1
      %p465 = por %p463, %p464
      %p467 = scmp.ne.s32.totalorder %s450, %s466
      %p468 = scmp.eq.s32.totalorder %s36, 0
      %p469 = por %p467, %p468
      %s470 = ssub.s32 %s30, %s37
      %p471 = scmp.eq.s32.totalorder %s470, 0
      %s473 = sadd.s32 %s472, 1
      %s474 = scalar_select %p471, %s472, %s473
      %p477 = pneg %p471
      %p478 = scmp.eq.s32.totalorder %s30, 1
      %p479 = por %p477, %p478
      %p480 = scmp.ne.s32.totalorder %s472, %s475
      %p481 = scmp.eq.s32.totalorder %s30, 0
      %p482 = por %p480, %p481
      %p483 = scmp.ne.s32.totalorder %s472, %s475
      %p484 = scmp.eq.s32.totalorder %s35, 1
      %p485 = por %p483, %p484
      %p486 = scmp.ne.s32.totalorder %s475, %s476
      %p487 = scmp.eq.s32.totalorder %s35, 0
      %p488 = por %p486, %p487
      %p489 = scmp.ne.s32.totalorder %s475, %s476
      %p490 = scmp.eq.s32.totalorder %s36, 1
      %p491 = por %p489, %p490
      %p493 = scmp.ne.s32.totalorder %s476, %s492
      %p494 = scmp.eq.s32.totalorder %s36, 0
      %p495 = por %p493, %p494
      %s496 = ssub.s32 %s30, %s37
      %p497 = scmp.eq.s32.totalorder %s496, 0
      %s499 = sadd.s32 %s498, 1
      %s500 = scalar_select %p497, %s498, %s499
      %p503 = pneg %p497
      %p504 = scmp.eq.s32.totalorder %s30, 1
      %p505 = por %p503, %p504
      %p506 = scmp.ne.s32.totalorder %s498, %s501
      %p507 = scmp.eq.s32.totalorder %s30, 0
      %p508 = por %p506, %p507
      %p509 = scmp.ne.s32.totalorder %s498, %s501
      %p510 = scmp.eq.s32.totalorder %s35, 1
      %p511 = por %p509, %p510
      %p512 = scmp.ne.s32.totalorder %s501, %s502
      %p513 = scmp.eq.s32.totalorder %s35, 0
      %p514 = por %p512, %p513
      %p515 = scmp.ne.s32.totalorder %s501, %s502
      %p516 = scmp.eq.s32.totalorder %s36, 1
      %p517 = por %p515, %p516
      %p519 = scmp.ne.s32.totalorder %s502, %s518
      %p520 = scmp.eq.s32.totalorder %s36, 0
      %p521 = por %p519, %p520
      %s523 = sadd.s32 %s522, 1
      %p526 = scmp.eq.s32.totalorder %s30, 1
      %p527 = scmp.ne.s32.totalorder %s522, %s524
      %p528 = scmp.eq.s32.totalorder %s30, 0
      %p529 = por %p527, %p528
      %p530 = scmp.ne.s32.totalorder %s522, %s524
      %p531 = scmp.eq.s32.totalorder %s35, 1
      %p532 = por %p530, %p531
      %p533 = scmp.ne.s32.totalorder %s524, %s525
      %p534 = scmp.eq.s32.totalorder %s35, 0
      %p535 = por %p533, %p534
      %p536 = scmp.ne.s32.totalorder %s524, %s525
      %p537 = scmp.eq.s32.totalorder %s36, 1
      %p538 = por %p536, %p537
      %p540 = scmp.ne.s32.totalorder %s525, %s539
      %p541 = scmp.eq.s32.totalorder %s36, 0
      %p542 = por %p540, %p541
      %p543 = scmp.le.s32.totalorder 1, %s30
      %p544 = scmp.lt.s32.totalorder %s30, 3
      %p545 = pnand %p543, %p544
      %p546 = pneg %p545
      // Predicated region
      $region9: #{obj_decoder_forward.4} parent=5 // pred_check
        _
      $region10: #{obj_decoder_forward.4} parent=5 // pred_check_branch
        %548 = sbr.rel (%p545) target = $region12
      $region11: #{obj_decoder_forward.4} parent=5 // pred_region
        %s549 = ssub.s32 %s30, 1
        // Predicated region
        $region13: #{obj_decoder_forward.4} parent=11 // pred_check
          %p550 = pneg %p51
        $region14: #{obj_decoder_forward.4} parent=11 // pred_check_branch
          %552 = sbr.rel (%p550) target = $region16
        $region15: #{obj_decoder_forward.4} parent=11 // pred_region
          _
        $region16: #{obj_decoder_forward.4} parent=11 // pred_fallthru
          _
        // Predicated region
        $region17: #{obj_decoder_forward.4} parent=11 // pred_check
          %p553 = pneg %p72
        $region18: #{obj_decoder_forward.4} parent=11 // pred_check_branch
          %555 = sbr.rel (%p553) target = $region20
        $region19: #{obj_decoder_forward.4} parent=11 // pred_region
          _
        $region20: #{obj_decoder_forward.4} parent=11 // pred_fallthru
          _
      $region12: #{obj_decoder_forward.4} parent=5 // pred_fallthru
        _
      %p556 = scmp.lt.s32.totalorder %s30, 2
      // Predicated region
      $region21: #{obj_decoder_forward.4} parent=5 // pred_check
        %p557 = pneg %p556
      $region22: #{obj_decoder_forward.4} parent=5 // pred_check_branch
        %559 = sbr.rel (%p557) target = $region24
      $region23: #{obj_decoder_forward.4} parent=5 // pred_region
        // Predicated region
        $region25: #{obj_decoder_forward.4} parent=23 // pred_check
          %p560 = pneg %p92
        $region26: #{obj_decoder_forward.4} parent=23 // pred_check_branch
          %562 = sbr.rel (%p560) target = $region28
        $region27: #{obj_decoder_forward.4} parent=23 // pred_region
          %p563 = scmp.lt.s32.totalorder %s30, 1
          %s564 = scalar_select %p563, %s30, 1
          %s565 = smul.addr %s564, 4
          %s566 = smul.addr %s565, 4
          %s567 = scalar_lea.vmem %s2, %s566
        $region28: #{obj_decoder_forward.4} parent=23 // pred_fallthru
          _
        // Predicated region
        $region29: #{obj_decoder_forward.4} parent=23 // pred_check
          %p568 = pneg %p118
        $region30: #{obj_decoder_forward.4} parent=23 // pred_check_branch
          %570 = sbr.rel (%p568) target = $region32
        $region31: #{obj_decoder_forward.4} parent=23 // pred_region
          %p571 = scmp.lt.s32.totalorder %s30, 1
          %s572 = scalar_select %p571, %s30, 1
          %s573 = scalar_lea.vmem %s3, %s572
        $region32: #{obj_decoder_forward.4} parent=23 // pred_fallthru
          _
        // Predicated region
        $region33: #{obj_decoder_forward.4} parent=23 // pred_check
          %p574 = pneg %p144
        $region34: #{obj_decoder_forward.4} parent=23 // pred_check_branch
          %576 = sbr.rel (%p574) target = $region36
        $region35: #{obj_decoder_forward.4} parent=23 // pred_region
          %p577 = scmp.lt.s32.totalorder %s30, 1
          %s578 = scalar_select %p577, %s30, 1
          %s579 = smul.addr %s578, 4
          %s580 = smul.addr %s579, 4
          %s581 = scalar_lea.vmem %s4, %s580
        $region36: #{obj_decoder_forward.4} parent=23 // pred_fallthru
          _
        // Predicated region
        $region37: #{obj_decoder_forward.4} parent=23 // pred_check
          %p582 = pneg %p170
        $region38: #{obj_decoder_forward.4} parent=23 // pred_check_branch
          %584 = sbr.rel (%p582) target = $region40
        $region39: #{obj_decoder_forward.4} parent=23 // pred_region
          %p585 = scmp.lt.s32.totalorder %s30, 1
          %s586 = scalar_select %p585, %s30, 1
          %s587 = scalar_lea.vmem %s5, %s586
        $region40: #{obj_decoder_forward.4} parent=23 // pred_fallthru
          _
        // Predicated region
        $region41: #{obj_decoder_forward.4} parent=23 // pred_check
          %p588 = pneg %p196
        $region42: #{obj_decoder_forward.4} parent=23 // pred_check_branch
          %590 = sbr.rel (%p588) target = $region44
        $region43: #{obj_decoder_forward.4} parent=23 // pred_region
          %p591 = scmp.lt.s32.totalorder %s30, 1
          %s592 = scalar_select %p591, %s30, 1
          %s593 = smul.addr %s592, 4
          %s594 = smul.addr %s593, 4
          %s595 = scalar_lea.vmem %s6, %s594
        $region44: #{obj_decoder_forward.4} parent=23 // pred_fallthru
          _
        // Predicated region
        $region45: #{obj_decoder_forward.4} parent=23 // pred_check
          %p596 = pneg %p222
        $region46: #{obj_decoder_forward.4} parent=23 // pred_check_branch
          %598 = sbr.rel (%p596) target = $region48
        $region47: #{obj_decoder_forward.4} parent=23 // pred_region
          %p599 = scmp.lt.s32.totalorder %s30, 1
          %s600 = scalar_select %p599, %s30, 1
          %s601 = scalar_lea.vmem %s7, %s600
        $region48: #{obj_decoder_forward.4} parent=23 // pred_fallthru
          _
        // Predicated region
        $region49: #{obj_decoder_forward.4} parent=23 // pred_check
          %p602 = pneg %p248
        $region50: #{obj_decoder_forward.4} parent=23 // pred_check_branch
          %604 = sbr.rel (%p602) target = $region52
        $region51: #{obj_decoder_forward.4} parent=23 // pred_region
          %p605 = scmp.lt.s32.totalorder %s30, 1
          %s606 = scalar_select %p605, %s30, 1
          %s607 = smul.addr %s606, 4
          %s608 = smul.addr %s607, 4
          %s609 = scalar_lea.vmem %s8, %s608
        $region52: #{obj_decoder_forward.4} parent=23 // pred_fallthru
          _
        // Predicated region
        $region53: #{obj_decoder_forward.4} parent=23 // pred_check
          %p610 = pneg %p274
        $region54: #{obj_decoder_forward.4} parent=23 // pred_check_branch
          %612 = sbr.rel (%p610) target = $region56
        $region55: #{obj_decoder_forward.4} parent=23 // pred_region
          %p613 = scmp.lt.s32.totalorder %s30, 1
          %s614 = scalar_select %p613, %s30, 1
          %s615 = scalar_lea.vmem %s9, %s614
        $region56: #{obj_decoder_forward.4} parent=23 // pred_fallthru
          _
        // Predicated region
        $region57: #{obj_decoder_forward.4} parent=23 // pred_check
          %p616 = pneg %p300
        $region58: #{obj_decoder_forward.4} parent=23 // pred_check_branch
          %618 = sbr.rel (%p616) target = $region60
        $region59: #{obj_decoder_forward.4} parent=23 // pred_region
          %p619 = scmp.lt.s32.totalorder %s30, 1
          %s620 = scalar_select %p619, %s30, 1
          %s621 = scalar_lea.vmem %s10, %s620
        $region60: #{obj_decoder_forward.4} parent=23 // pred_fallthru
          _
        // Predicated region
        $region61: #{obj_decoder_forward.4} parent=23 // pred_check
          %p622 = pneg %p326
        $region62: #{obj_decoder_forward.4} parent=23 // pred_check_branch
          %624 = sbr.rel (%p622) target = $region64
        $region63: #{obj_decoder_forward.4} parent=23 // pred_region
          %p625 = scmp.lt.s32.totalorder %s30, 1
          %s626 = scalar_select %p625, %s30, 1
          %s627 = scalar_lea.vmem %s11, %s626
        $region64: #{obj_decoder_forward.4} parent=23 // pred_fallthru
          _
        // Predicated region
        $region65: #{obj_decoder_forward.4} parent=23 // pred_check
          %p628 = pneg %p352
        $region66: #{obj_decoder_forward.4} parent=23 // pred_check_branch
          %630 = sbr.rel (%p628) target = $region68
        $region67: #{obj_decoder_forward.4} parent=23 // pred_region
          %p631 = scmp.lt.s32.totalorder %s30, 1
          %s632 = scalar_select %p631, %s30, 1
          %s633 = smul.addr %s632, 4
          %s634 = smul.addr %s633, 4
          %s635 = scalar_lea.vmem %s12, %s634
        $region68: #{obj_decoder_forward.4} parent=23 // pred_fallthru
          _
        // Predicated region
        $region69: #{obj_decoder_forward.4} parent=23 // pred_check
          %p636 = pneg %p378
        $region70: #{obj_decoder_forward.4} parent=23 // pred_check_branch
          %638 = sbr.rel (%p636) target = $region72
        $region71: #{obj_decoder_forward.4} parent=23 // pred_region
          %p639 = scmp.lt.s32.totalorder %s30, 1
          %s640 = scalar_select %p639, %s30, 1
          %s641 = scalar_lea.vmem %s13, %s640
        $region72: #{obj_decoder_forward.4} parent=23 // pred_fallthru
          _
        // Predicated region
        $region73: #{obj_decoder_forward.4} parent=23 // pred_check
          %p642 = pneg %p404
        $region74: #{obj_decoder_forward.4} parent=23 // pred_check_branch
          %644 = sbr.rel (%p642) target = $region76
        $region75: #{obj_decoder_forward.4} parent=23 // pred_region
          %p645 = scmp.lt.s32.totalorder %s30, 1
          %s646 = scalar_select %p645, %s30, 1
          %s647 = smul.addr %s646, 16
          %s648 = smul.addr %s647, 4
          %s649 = scalar_lea.vmem %s14, %s648
        $region76: #{obj_decoder_forward.4} parent=23 // pred_fallthru
          _
        // Predicated region
        $region77: #{obj_decoder_forward.4} parent=23 // pred_check
          %p650 = pneg %p430
        $region78: #{obj_decoder_forward.4} parent=23 // pred_check_branch
          %652 = sbr.rel (%p650) target = $region80
        $region79: #{obj_decoder_forward.4} parent=23 // pred_region
          %p653 = scmp.lt.s32.totalorder %s30, 1
          %s654 = scalar_select %p653, %s30, 1
          %s655 = scalar_lea.vmem %s15, %s654
        $region80: #{obj_decoder_forward.4} parent=23 // pred_fallthru
          _
        // Predicated region
        $region81: #{obj_decoder_forward.4} parent=23 // pred_check
          %p656 = pneg %p456
        $region82: #{obj_decoder_forward.4} parent=23 // pred_check_branch
          %658 = sbr.rel (%p656) target = $region84
        $region83: #{obj_decoder_forward.4} parent=23 // pred_region
          %p659 = scmp.lt.s32.totalorder %s30, 1
          %s660 = scalar_select %p659, %s30, 1
          %s661 = scalar_lea.vmem %s16, %s660
        $region84: #{obj_decoder_forward.4} parent=23 // pred_fallthru
          _
        // Predicated region
        $region85: #{obj_decoder_forward.4} parent=23 // pred_check
          %p662 = pneg %p482
        $region86: #{obj_decoder_forward.4} parent=23 // pred_check_branch
          %664 = sbr.rel (%p662) target = $region88
        $region87: #{obj_decoder_forward.4} parent=23 // pred_region
          %s665 = sand.u32 %s472, 1
          %s666 = scalar_lea.sflag [#allocation4], %s665
          %s667 = sand.u32 %s472, 1
          %s668 = scalar_lea.vmem [#allocation3], %s667
          %670 = vsyncadd %s666, 0
          %s671 = scalar_lea.hbm %s17, %s30
          %s673 = sshll.u32 %s671, 4
          %s674 = int_to_ptr.hbm [resolvable:$true] %s673
          %s675 = sshll.u32 %s668, 4
          %s676 = int_to_ptr.vmem [resolvable:$true] %s675
          %678 = dma.hbm_to_vmem [thread:$0]  %s674, 16, %s676, %s666
        $region88: #{obj_decoder_forward.4} parent=23 // pred_fallthru
          _
      $region24: #{obj_decoder_forward.4} parent=5 // pred_fallthru
        _
      %p679 = scmp.le.s32.totalorder 1, %s30
      %p680 = scmp.lt.s32.totalorder %s30, 3
      %p681 = pnand %p679, %p680
      %p682 = pneg %p681
      // Predicated region
      $region89: #{obj_decoder_forward.4} parent=5 // pred_check
        _
      $region90: #{obj_decoder_forward.4} parent=5 // pred_check_branch
        %684 = sbr.rel (%p681) target = $region92
      $region91: #{obj_decoder_forward.4} parent=5 // pred_region
        %s685 = ssub.s32 %s30, 1
        %s686 = sand.u32 %s475, 1
        %s687 = scalar_lea.sflag [#allocation4], %s686
        %s688 = sand.u32 %s475, 1
        %s689 = scalar_lea.vmem [#allocation3], %s688
        // Predicated region
        $region93: #{obj_decoder_forward.4} parent=91 // pred_check
          %p690 = pneg %p488
        $region94: #{obj_decoder_forward.4} parent=91 // pred_check_branch
          %692 = sbr.rel (%p690) target = $region96
        $region95: #{obj_decoder_forward.4} parent=91 // pred_region
          %694 = dma.done %s687, 16
        $region96: #{obj_decoder_forward.4} parent=91 // pred_fallthru
          _
        %p695 = pneg %p51
        %p696 = pneg %p48
        %p697 = pneg %p72
        %p698 = pneg %p69
        %p699 = scmp.lt.s32.totalorder %s35, 1
        %s700 = scalar_select %p699, %s35, 1
        %s701 = smul.addr %s700, 4
        %s702 = smul.addr %s701, 4
        %s703 = scalar_lea.vmem %s2, %s702
        %p704 = pneg %p98
        %p705 = pneg %p95
        %p706 = scmp.lt.s32.totalorder %s35, 1
        %s707 = scalar_select %p706, %s35, 1
        %s708 = scalar_lea.vmem %s3, %s707
        %p709 = pneg %p124
        %p710 = pneg %p121
        %p711 = scmp.lt.s32.totalorder %s35, 1
        %s712 = scalar_select %p711, %s35, 1
        %s713 = smul.addr %s712, 4
        %s714 = smul.addr %s713, 4
        %s715 = scalar_lea.vmem %s4, %s714
        %p716 = pneg %p150
        %p717 = pneg %p147
        %p718 = scmp.lt.s32.totalorder %s35, 1
        %s719 = scalar_select %p718, %s35, 1
        %s720 = scalar_lea.vmem %s5, %s719
        %p721 = pneg %p176
        %p722 = pneg %p173
        %p723 = scmp.lt.s32.totalorder %s35, 1
        %s724 = scalar_select %p723, %s35, 1
        %s725 = smul.addr %s724, 4
        %s726 = smul.addr %s725, 4
        %s727 = scalar_lea.vmem %s6, %s726
        %p728 = pneg %p202
        %p729 = pneg %p199
        %p730 = scmp.lt.s32.totalorder %s35, 1
        %s731 = scalar_select %p730, %s35, 1
        %s732 = scalar_lea.vmem %s7, %s731
        %p733 = pneg %p228
        %p734 = pneg %p225
        %p735 = scmp.lt.s32.totalorder %s35, 1
        %s736 = scalar_select %p735, %s35, 1
        %s737 = smul.addr %s736, 4
        %s738 = smul.addr %s737, 4
        %s739 = scalar_lea.vmem %s8, %s738
        %p740 = pneg %p254
        %p741 = pneg %p251
        %p742 = scmp.lt.s32.totalorder %s35, 1
        %s743 = scalar_select %p742, %s35, 1
        %s744 = scalar_lea.vmem %s9, %s743
        %p745 = pneg %p280
        %p746 = pneg %p277
        %p747 = scmp.lt.s32.totalorder %s35, 1
        %s748 = scalar_select %p747, %s35, 1
        %s749 = scalar_lea.vmem %s10, %s748
        %p750 = pneg %p306
        %p751 = pneg %p303
        %p752 = scmp.lt.s32.totalorder %s35, 1
        %s753 = scalar_select %p752, %s35, 1
        %s754 = scalar_lea.vmem %s11, %s753
        %p755 = pneg %p332
        %p756 = pneg %p329
        %p757 = scmp.lt.s32.totalorder %s35, 1
        %s758 = scalar_select %p757, %s35, 1
        %s759 = smul.addr %s758, 4
        %s760 = smul.addr %s759, 4
        %s761 = scalar_lea.vmem %s12, %s760
        %p762 = pneg %p358
        %p763 = pneg %p355
        %p764 = scmp.lt.s32.totalorder %s35, 1
        %s765 = scalar_select %p764, %s35, 1
        %s766 = scalar_lea.vmem %s13, %s765
        %p767 = pneg %p384
        %p768 = pneg %p381
        %p769 = scmp.lt.s32.totalorder %s35, 1
        %s770 = scalar_select %p769, %s35, 1
        %s771 = smul.addr %s770, 16
        %s772 = smul.addr %s771, 4
        %s773 = scalar_lea.vmem %s14, %s772
        %p774 = pneg %p410
        %p775 = pneg %p407
        %p776 = scmp.lt.s32.totalorder %s35, 1
        %s777 = scalar_select %p776, %s35, 1
        %s778 = scalar_lea.vmem %s15, %s777
        %p779 = pneg %p436
        %p780 = pneg %p433
        %p781 = scmp.lt.s32.totalorder %s35, 1
        %s782 = scalar_select %p781, %s35, 1
        %s783 = scalar_lea.vmem %s16, %s782
        %p784 = pneg %p462
        %p785 = pneg %p459
        %s786 = sand.u32 %s475, 1
        %s787 = scalar_lea.sflag [#allocation4], %s786
        %s788 = sand.u32 %s475, 1
        %s789 = scalar_lea.vmem [#allocation3], %s788
        %p790 = pneg %p488
        %p791 = pneg %p485
        %p792 = pneg %p514
        %p793 = pneg %p511
        %p794 = scmp.lt.s32.totalorder %s35, 1
        %s795 = scalar_select %p794, %s35, 1
        %s796 = smul.addr %s795, 2
        %s797 = smul.addr %s796, 2
        %s798 = scalar_lea.vmem %s18, %s797
        %p799 = pneg %p535
        %p800 = pneg %p532
        %p801 = scmp.lt.s32.totalorder %s35, 1
        %s802 = scalar_select %p801, %s35, 1
        %s803 = smul.addr %s802, 4
        %s804 = smul.addr %s803, 4
        %s805 = scalar_lea.vmem %s2, %s804
        %p806 = scmp.lt.s32.totalorder %s35, 1
        %s807 = scalar_select %p806, %s35, 1
        %s808 = scalar_lea.vmem %s3, %s807
        %p809 = scmp.lt.s32.totalorder %s35, 1
        %s810 = scalar_select %p809, %s35, 1
        %s811 = smul.addr %s810, 4
        %s812 = smul.addr %s811, 4
        %s813 = scalar_lea.vmem %s4, %s812
        %p814 = scmp.lt.s32.totalorder %s35, 1
        %s815 = scalar_select %p814, %s35, 1
        %s816 = scalar_lea.vmem %s5, %s815
        %p817 = scmp.lt.s32.totalorder %s35, 1
        %s818 = scalar_select %p817, %s35, 1
        %s819 = smul.addr %s818, 4
        %s820 = smul.addr %s819, 4
        %s821 = scalar_lea.vmem %s6, %s820
        %p822 = scmp.lt.s32.totalorder %s35, 1
        %s823 = scalar_select %p822, %s35, 1
        %s824 = scalar_lea.vmem %s7, %s823
        %p825 = scmp.lt.s32.totalorder %s35, 1
        %s826 = scalar_select %p825, %s35, 1
        %s827 = smul.addr %s826, 4
        %s828 = smul.addr %s827, 4
        %s829 = scalar_lea.vmem %s8, %s828
        %p830 = scmp.lt.s32.totalorder %s35, 1
        %s831 = scalar_select %p830, %s35, 1
        %s832 = scalar_lea.vmem %s9, %s831
        %p833 = scmp.lt.s32.totalorder %s35, 1
        %s834 = scalar_select %p833, %s35, 1
        %s835 = scalar_lea.vmem %s10, %s834
        %p836 = scmp.lt.s32.totalorder %s35, 1
        %s837 = scalar_select %p836, %s35, 1
        %s838 = scalar_lea.vmem %s11, %s837
        %p839 = scmp.lt.s32.totalorder %s35, 1
        %s840 = scalar_select %p839, %s35, 1
        %s841 = smul.addr %s840, 4
        %s842 = smul.addr %s841, 4
        %s843 = scalar_lea.vmem %s12, %s842
        %p844 = scmp.lt.s32.totalorder %s35, 1
        %s845 = scalar_select %p844, %s35, 1
        %s846 = scalar_lea.vmem %s13, %s845
        %p847 = scmp.lt.s32.totalorder %s35, 1
        %s848 = scalar_select %p847, %s35, 1
        %s849 = smul.addr %s848, 16
        %s850 = smul.addr %s849, 4
        %s851 = scalar_lea.vmem %s14, %s850
        %p852 = scmp.lt.s32.totalorder %s35, 1
        %s853 = scalar_select %p852, %s35, 1
        %s854 = scalar_lea.vmem %s15, %s853
        %p855 = scmp.lt.s32.totalorder %s35, 1
        %s856 = scalar_select %p855, %s35, 1
        %s857 = scalar_lea.vmem %s16, %s856
        %p858 = scmp.lt.s32.totalorder %s35, 1
        %s859 = scalar_select %p858, %s35, 1
        %s860 = smul.addr %s859, 2
        %s861 = smul.addr %s860, 2
        %s862 = scalar_lea.vmem %s18, %s861
        %p864 = scmp.eq.s32.totalorder %s35, 0
        // Predicated region
        $region97: #{obj_decoder_forward.4} parent=91 // pred_check
          %p865 = pneg %p864
        $region98: #{obj_decoder_forward.4} parent=91 // pred_check_branch
          %867 = sbr.rel (%p865) target = $region100
        $region99: #{obj_decoder_forward.4} parent=91 // pred_region
          %vm868 = vcmask 257024
          %869 = vst.msk [vmem:[#allocation2] sm:$0xf] %vm868, 0.0
          %870 = vst.msk [vmem:[#allocation2 + $0x4] sm:$0xf] %vm868, 0.0
        $region100: #{obj_decoder_forward.4} parent=91 // pred_fallthru
          _
        %v871 = vld [vmem:[#allocation2] sm:$0xf]
        %v872 = vld [vmem:[#allocation2 + $0x4] sm:$0xf]
        %v873 = vld [vmem:[%s0] sm:$0xf]
        %v874 = vld [vmem:[%s0 + $0x4] sm:$0xf]
        %v875 = vld [vmem:[%s0 + $0x8] sm:$0xf]
        %v876 = vld [vmem:[%s0 + $0xc] sm:$0xf]
        %v877 = vld [vmem:[%s0 + $0x10] sm:$0xf]
        %v878 = vld [vmem:[%s0 + $0x14] sm:$0xf]
        %v879 = vld [vmem:[%s0 + $0x18] sm:$0xf]
        %v880 = vld [vmem:[%s0 + $0x1c] sm:$0xf]
        %v881 = vld [vmem:[%s0 + $0x20] sm:$0xf]
        %v882 = vld [vmem:[%s0 + $0x24] sm:$0xf]
        %v883 = vld [vmem:[%s0 + $0x28] sm:$0xf]
        %v884 = vld [vmem:[%s0 + $0x2c] sm:$0xf]
        %v885 = vld [vmem:[%s0 + $0x30] sm:$0xf]
        %v886 = vld [vmem:[%s0 + $0x34] sm:$0xf]
        %v887 = vld [vmem:[%s0 + $0x38] sm:$0xf]
        %v888 = vld [vmem:[%s0 + $0x3c] sm:$0xf]
        %v889 = vld [vmem:[%s813] sm:$0xf]
        %v890 = vld [vmem:[%s813 + $0x4] sm:$0xf]
        %v891 = vld [vmem:[%s813 + $0x8] sm:$0xf]
        %v892 = vld [vmem:[%s813 + $0xc] sm:$0xf]
        %v893 = vld [vmem:[%s816] sm:$0x1]
        %v895 = vperm.slane %v893, 0
        %v913 = vunpack.c.l.b16 %v873
        %v914 = vunpack.c.l.b16 %v874
        %v915 = vunpack.c.l.b16 %v875
        %v916 = vunpack.c.l.b16 %v876
        %v917 = vunpack.c.l.b16 %v877
        %v918 = vunpack.c.l.b16 %v878
        %v919 = vunpack.c.l.b16 %v879
        %v920 = vunpack.c.l.b16 %v880
        %v921 = vunpack.c.l.b16 %v881
        %v922 = vunpack.c.l.b16 %v882
        %v923 = vunpack.c.l.b16 %v883
        %v924 = vunpack.c.l.b16 %v884
        %v925 = vunpack.c.l.b16 %v885
        %v926 = vunpack.c.l.b16 %v886
        %v927 = vunpack.c.l.b16 %v887
        %v928 = vunpack.c.l.b16 %v888
        %v929 = vpack.c.b16 %v914, %v913
        %v930 = vpack.c.b16 %v916, %v915
        %v931 = vpack.c.b16 %v918, %v917
        %v932 = vpack.c.b16 %v920, %v919
        %v933 = vpack.c.b16 %v922, %v921
        %v934 = vpack.c.b16 %v924, %v923
        %v935 = vpack.c.b16 %v926, %v925
        %v936 = vpack.c.b16 %v928, %v927
        %v941 = vunpack.c.l.b16 %v889
        %v942 = vunpack.c.l.b16 %v890
        %v943 = vunpack.c.l.b16 %v891
        %v944 = vunpack.c.l.b16 %v892
        %v945 = vpack.c.b16 %v942, %v941
        %v946 = vpack.c.b16 %v944, %v943
        %vm949 = vcmask 261120
        %v951 = vsel %vm949, %v929, 0
        %v954 = vsel %vm949, %v930, 0
        %v957 = vsel %vm949, %v931, 0
        %v960 = vsel %vm949, %v932, 0
        %v963 = vsel %vm949, %v933, 0
        %v966 = vsel %vm949, %v934, 0
        %v969 = vsel %vm949, %v935, 0
        %v972 = vsel %vm949, %v936, 0
        %974 = vmatpush.bf16.msra.mxu0 0
        %975 = vmatpush.bf16.msra.mxu0 0
        %976 = vmatpush.bf16.msra.mxu0 0
        %977 = vmatpush.bf16.msra.mxu0 0
        %978 = vmatpush.bf16.msra.mxu0 0
        %979 = vmatpush.bf16.msra.mxu0 0
        %980 = vmatpush.bf16.msra.mxu0 %v946
        %981 = vmatpush.bf16.msra.mxu0 %v945
        %982 = vmatmul.bf16.gmra.mxu0 %v951
        %v983 = vpop.f32.mrf.mxu0
        %v984 = vadd.f32 %v895, %v983
        %v985 = vpop.f32.mrf.mxu0
        %v986 = vadd.f32 %v895, %v985
        %987 = vmatmul.bf16.gmra.mxu0 %v954
        %v988 = vpop.f32.mrf.mxu0
        %v989 = vadd.f32 %v895, %v988
        %v990 = vpop.f32.mrf.mxu0
        %v991 = vadd.f32 %v895, %v990
        %992 = vmatmul.bf16.gmra.mxu0 %v957
        %v993 = vpop.f32.mrf.mxu0
        %v994 = vadd.f32 %v895, %v993
        %v995 = vpop.f32.mrf.mxu0
        %v996 = vadd.f32 %v895, %v995
        %997 = vmatmul.bf16.gmra.mxu0 %v960
        %v998 = vpop.f32.mrf.mxu0
        %v999 = vadd.f32 %v895, %v998
        %v1000 = vpop.f32.mrf.mxu0
        %v1001 = vadd.f32 %v895, %v1000
        %1002 = vmatmul.bf16.gmra.mxu0 %v963
        %v1003 = vpop.f32.mrf.mxu0
        %v1004 = vadd.f32 %v895, %v1003
        %v1005 = vpop.f32.mrf.mxu0
        %v1006 = vadd.f32 %v895, %v1005
        %1007 = vmatmul.bf16.gmra.mxu0 %v966
        %v1008 = vpop.f32.mrf.mxu0
        %v1009 = vadd.f32 %v895, %v1008
        %v1010 = vpop.f32.mrf.mxu0
        %v1011 = vadd.f32 %v895, %v1010
        %1012 = vmatmul.bf16.gmra.mxu0 %v969
        %v1013 = vpop.f32.mrf.mxu0
        %v1014 = vadd.f32 %v895, %v1013
        %v1015 = vpop.f32.mrf.mxu0
        %v1016 = vadd.f32 %v895, %v1015
        %1017 = vmatmul.bf16.gmra.mxu0 %v972
        %v1018 = vpop.f32.mrf.mxu0
        %v1019 = vadd.f32 %v895, %v1018
        %v1020 = vpop.f32.mrf.mxu0
        %v1021 = vadd.f32 %v895, %v1020
        %1022 = vdwg.mxu0
        %v1023 = vpack.c.bf16 %v984, %v984
        %v1024 = vpack.c.bf16 %v986, %v986
        %v1025 = vpack.c.bf16 %v989, %v989
        %v1026 = vpack.c.bf16 %v991, %v991
        %v1027 = vpack.c.bf16 %v994, %v994
        %v1028 = vpack.c.bf16 %v996, %v996
        %v1029 = vpack.c.bf16 %v999, %v999
        %v1030 = vpack.c.bf16 %v1001, %v1001
        %v1031 = vpack.c.bf16 %v1004, %v1004
        %v1032 = vpack.c.bf16 %v1006, %v1006
        %v1033 = vpack.c.bf16 %v1009, %v1009
        %v1034 = vpack.c.bf16 %v1011, %v1011
        %v1035 = vpack.c.bf16 %v1014, %v1014
        %v1036 = vpack.c.bf16 %v1016, %v1016
        %v1037 = vpack.c.bf16 %v1019, %v1019
        %v1038 = vpack.c.bf16 %v1021, %v1021
        %v1039 = vld [vmem:[%s821] sm:$0xf]
        %v1040 = vld [vmem:[%s821 + $0x4] sm:$0xf]
        %v1041 = vld [vmem:[%s821 + $0x8] sm:$0xf]
        %v1042 = vld [vmem:[%s821 + $0xc] sm:$0xf]
        %v1043 = vld [vmem:[%s824] sm:$0x1]
        %v1045 = vperm.slane %v1043, 0
        %v1051 = vunpack.c.l.b16 %v1039
        %v1052 = vunpack.c.l.b16 %v1040
        %v1053 = vunpack.c.l.b16 %v1041
        %v1054 = vunpack.c.l.b16 %v1042
        %v1055 = vpack.c.b16 %v1052, %v1051
        %v1056 = vpack.c.b16 %v1054, %v1053
        %1059 = vmatpush.bf16.msra.mxu0 0
        %1060 = vmatpush.bf16.msra.mxu0 0
        %1061 = vmatpush.bf16.msra.mxu0 0
        %1062 = vmatpush.bf16.msra.mxu0 0
        %1063 = vmatpush.bf16.msra.mxu0 0
        %1064 = vmatpush.bf16.msra.mxu0 0
        %1065 = vmatpush.bf16.msra.mxu0 %v1056
        %1066 = vmatpush.bf16.msra.mxu0 %v1055
        %1067 = vmatmul.bf16.gmra.mxu0 %v951
        %v1068 = vpop.f32.mrf.mxu0
        %v1069 = vadd.f32 %v1045, %v1068
        %v1070 = vpop.f32.mrf.mxu0
        %v1071 = vadd.f32 %v1045, %v1070
        %1072 = vmatmul.bf16.gmra.mxu0 %v954
        %v1073 = vpop.f32.mrf.mxu0
        %v1074 = vadd.f32 %v1045, %v1073
        %v1075 = vpop.f32.mrf.mxu0
        %v1076 = vadd.f32 %v1045, %v1075
        %1077 = vmatmul.bf16.gmra.mxu0 %v957
        %v1078 = vpop.f32.mrf.mxu0
        %v1079 = vadd.f32 %v1045, %v1078
        %v1080 = vpop.f32.mrf.mxu0
        %v1081 = vadd.f32 %v1045, %v1080
        %1082 = vmatmul.bf16.gmra.mxu0 %v960
        %v1083 = vpop.f32.mrf.mxu0
        %v1084 = vadd.f32 %v1045, %v1083
        %v1085 = vpop.f32.mrf.mxu0
        %v1086 = vadd.f32 %v1045, %v1085
        %1087 = vmatmul.bf16.gmra.mxu0 %v963
        %v1088 = vpop.f32.mrf.mxu0
        %v1089 = vadd.f32 %v1045, %v1088
        %v1090 = vpop.f32.mrf.mxu0
        %v1091 = vadd.f32 %v1045, %v1090
        %1092 = vmatmul.bf16.gmra.mxu0 %v966
        %v1093 = vpop.f32.mrf.mxu0
        %v1094 = vadd.f32 %v1045, %v1093
        %v1095 = vpop.f32.mrf.mxu0
        %v1096 = vadd.f32 %v1045, %v1095
        %1097 = vmatmul.bf16.gmra.mxu0 %v969
        %v1098 = vpop.f32.mrf.mxu0
        %v1099 = vadd.f32 %v1045, %v1098
        %v1100 = vpop.f32.mrf.mxu0
        %v1101 = vadd.f32 %v1045, %v1100
        %1102 = vmatmul.bf16.gmra.mxu0 %v972
        %v1103 = vpop.f32.mrf.mxu0
        %v1104 = vadd.f32 %v1045, %v1103
        %v1105 = vpop.f32.mrf.mxu0
        %v1106 = vadd.f32 %v1045, %v1105
        %1107 = vdwg.mxu0
        %v1108 = vpack.c.bf16 %v1069, %v1069
        %v1109 = vpack.c.bf16 %v1071, %v1071
        %v1110 = vpack.c.bf16 %v1074, %v1074
        %v1111 = vpack.c.bf16 %v1076, %v1076
        %v1112 = vpack.c.bf16 %v1079, %v1079
        %v1113 = vpack.c.bf16 %v1081, %v1081
        %v1114 = vpack.c.bf16 %v1084, %v1084
        %v1115 = vpack.c.bf16 %v1086, %v1086
        %v1116 = vpack.c.bf16 %v1089, %v1089
        %v1117 = vpack.c.bf16 %v1091, %v1091
        %v1118 = vpack.c.bf16 %v1094, %v1094
        %v1119 = vpack.c.bf16 %v1096, %v1096
        %v1120 = vpack.c.bf16 %v1099, %v1099
        %v1121 = vpack.c.bf16 %v1101, %v1101
        %v1122 = vpack.c.bf16 %v1104, %v1104
        %v1123 = vpack.c.bf16 %v1106, %v1106
        %v1124 = vld [vmem:[%s1] sm:$0x3]
        %v1125 = vunpack.c.l.bf16 %v1124
        %v1126 = vadd.f32 %v871, %v1125
        %v1127 = vadd.f32 %v872, %v1125
        %v1128 = vpack.c.bf16 %v1126, %v1126
        %v1129 = vpack.c.bf16 %v1127, %v1127
        %v1130 = vld [vmem:[%s805] sm:$0xf]
        %v1131 = vld [vmem:[%s805 + $0x4] sm:$0xf]
        %v1132 = vld [vmem:[%s805 + $0x8] sm:$0xf]
        %v1133 = vld [vmem:[%s805 + $0xc] sm:$0xf]
        %v1134 = vld [vmem:[%s808] sm:$0x1]
        %v1136 = vperm.slane %v1134, 0
        %1139 = vst [vmem:[#allocation1] ss:$4 sm:$0xff] %v1128
        %s1141 = scalar_lea.vmem [#allocation1], 1
        %1142 = vst [vmem:[%s1141] ss:$4 sm:$0xff] %v1129
        %v1143 = vld.sshfl [vmem:[#allocation1] sm:$0xff pattern:$0x73625140]
        %v1148 = vunpack.c.l.b16 %v1130
        %v1149 = vunpack.c.l.b16 %v1131
        %v1150 = vunpack.c.l.b16 %v1132
        %v1151 = vunpack.c.l.b16 %v1133
        %v1152 = vpack.c.b16 %v1149, %v1148
        %v1153 = vpack.c.b16 %v1151, %v1150
        %v1156 = vsel %vm949, %v1143, 0
        %1158 = vmatpush.bf16.msra.mxu0 0
        %1159 = vmatpush.bf16.msra.mxu0 0
        %1160 = vmatpush.bf16.msra.mxu0 0
        %1161 = vmatpush.bf16.msra.mxu0 0
        %1162 = vmatpush.bf16.msra.mxu0 0
        %1163 = vmatpush.bf16.msra.mxu0 0
        %1164 = vmatpush.bf16.msra.mxu0 %v1153
        %1165 = vmatpush.bf16.msra.mxu0 %v1152
        %1166 = vmatmul.bf16.gmra.mxu0 %v1156
        %v1167 = vpop.f32.mrf.mxu0
        %v1168 = vadd.f32 %v1136, %v1167
        %v1169 = vpop.f32.mrf.mxu0
        %1170 = vdwg.mxu0
        %v1171 = vpack.c.bf16 %v1168, %v1168
        %v1173 = vrot.slane %v1171, 2
        %vm1174 = vcmask 1041408
        %v1177 = vsel %vm1174, %v1171, %v1173
        %vm1178 = vcmask 1043458
        %v1179 = vsel %vm1178, %v1171, %v1173
        %v1181 = vrot.slane %v1179, 2
        %v1190 = vunpack.c.l.b16 %v1023
        %v1191 = vunpack.c.l.b16 %v1024
        %v1192 = vunpack.c.l.b16 %v1025
        %v1193 = vunpack.c.l.b16 %v1026
        %v1194 = vunpack.c.l.b16 %v1027
        %v1195 = vunpack.c.l.b16 %v1028
        %v1196 = vunpack.c.l.b16 %v1029
        %v1197 = vunpack.c.l.b16 %v1030
        %v1198 = vpack.c.b16 %v1191, %v1190
        %v1199 = vpack.c.b16 %v1193, %v1192
        %v1200 = vpack.c.b16 %v1195, %v1194
        %v1201 = vpack.c.b16 %v1197, %v1196
        %v1202 = vsel %vm949, %v1177, 0
        %v1205 = vsel %vm949, %v1198, 0
        %v1208 = vsel %vm949, %v1199, 0
        %v1211 = vsel %vm949, %v1200, 0
        %v1214 = vsel %vm949, %v1201, 0
        %1216 = vmatpush.bf16.xpose.msra.mxu0 0
        %1217 = vmatpush.bf16.xpose.msra.mxu0 0
        %1218 = vmatpush.bf16.xpose.msra.mxu0 0
        %1219 = vmatpush.bf16.xpose.msra.mxu0 0
        %1220 = vmatpush.bf16.xpose.msra.mxu0 %v1214
        %1221 = vmatpush.bf16.xpose.msra.mxu0 %v1211
        %1222 = vmatpush.bf16.xpose.msra.mxu0 %v1208
        %1223 = vmatpush.bf16.xpose.msra.mxu0 %v1205
        %1224 = vmatmul.bf16.gmra.mxu0 %v1202
        %v1225 = vpop.f32.mrf.mxu0
        %v1226 = vadd.f32 0.0, %v1225
        %v1227 = vpop.f32.mrf.mxu0
        %1228 = vdwg.mxu0
        %v1237 = vunpack.c.l.b16 %v1031
        %v1238 = vunpack.c.l.b16 %v1032
        %v1239 = vunpack.c.l.b16 %v1033
        %v1240 = vunpack.c.l.b16 %v1034
        %v1241 = vunpack.c.l.b16 %v1035
        %v1242 = vunpack.c.l.b16 %v1036
        %v1243 = vunpack.c.l.b16 %v1037
        %v1244 = vunpack.c.l.b16 %v1038
        %v1245 = vpack.c.b16 %v1238, %v1237
        %v1246 = vpack.c.b16 %v1240, %v1239
        %v1247 = vpack.c.b16 %v1242, %v1241
        %v1248 = vpack.c.b16 %v1244, %v1243
        %v1250 = vsel %vm949, %v1181, 0
        %v1253 = vsel %vm949, %v1245, 0
        %v1256 = vsel %vm949, %v1246, 0
        %v1259 = vsel %vm949, %v1247, 0
        %v1262 = vsel %vm949, %v1248, 0
        %1264 = vmatpush.bf16.xpose.msra.mxu0 0
        %1265 = vmatpush.bf16.xpose.msra.mxu0 0
        %1266 = vmatpush.bf16.xpose.msra.mxu0 0
        %1267 = vmatpush.bf16.xpose.msra.mxu0 0
        %1268 = vmatpush.bf16.xpose.msra.mxu0 %v1262
        %1269 = vmatpush.bf16.xpose.msra.mxu0 %v1259
        %1270 = vmatpush.bf16.xpose.msra.mxu0 %v1256
        %1271 = vmatpush.bf16.xpose.msra.mxu0 %v1253
        %1272 = vmatmul.bf16.gmra.mxu0 %v1250
        %v1273 = vpop.f32.mrf.mxu0
        %v1274 = vadd.f32 0.0, %v1273
        %v1275 = vpop.f32.mrf.mxu0
        %1276 = vdwg.mxu0
        %vm1277 = vcmask 519168
        %v1278 = vsel %vm1277, %v1226, -inf
        %1279 = vmax.xlane.f32.xlu0 %v1278
        %v1280 = vpop.xlane.xlu0 %1279
        %v1281 = vsel %vm1277, %v1274, -inf
        %1282 = vmax.xlane.f32.xlu0 %v1281
        %v1283 = vpop.xlane.xlu0 %1282
        %v1284 = vsub.f32 %v1226, %v1280
        %v1285 = vsub.f32 %v1274, %v1283
        %v1286 = vmul.f32 %v1284, 1.442695
        %v1287 = vpow.pop %v1286
        %v1288 = vmul.f32 %v1285, 1.442695
        %v1289 = vpow.pop %v1288
        %v1290 = vsel %vm1277, %v1287, 0.0
        %1291 = vadd.xlane.f32.xlu0 %v1290
        %v1292 = vpop.xlane.xlu0 %1291
        %v1293 = vsel %vm1277, %v1289, 0.0
        %1294 = vadd.xlane.f32.xlu0 %v1293
        %v1295 = vpop.xlane.xlu0 %1294
        %v1296 = vrcp.pop %v1292
        %v1297 = vmul.f32 %v1292, %v1296
        %v1298 = vsub.f32 1.0, %v1297
        %v1299 = vmul.f32 %v1296, %v1298
        %v1300 = vadd.f32 %v1296, %v1299
        %vm1301 = vweird.f32 %v1292
        %vm1302 = vweird.f32 %v1296
        %vm1303 = vmor %vm1301, %vm1302
        %v1304 = vsel %vm1303, %v1296, %v1300
        %v1305 = vand.u32 2147483647, %v1292
        %vm1306 = vcmp.eq.f32.partialorder %v1305, 8.507059e+37
        %v1307 = vand.u32 %v1292, 2147483648
        %v1308 = vor.u32 1.1754944e-38, %v1307
        %v1309 = vsel %vm1306, %v1308, %v1304
        %v1310 = vmul.f32 %v1287, %v1309
        %v1311 = vrcp.pop %v1295
        %v1312 = vmul.f32 %v1295, %v1311
        %v1313 = vsub.f32 1.0, %v1312
        %v1314 = vmul.f32 %v1311, %v1313
        %v1315 = vadd.f32 %v1311, %v1314
        %vm1316 = vweird.f32 %v1295
        %vm1317 = vweird.f32 %v1311
        %vm1318 = vmor %vm1316, %vm1317
        %v1319 = vsel %vm1318, %v1311, %v1315
        %v1320 = vand.u32 2147483647, %v1295
        %vm1321 = vcmp.eq.f32.partialorder %v1320, 8.507059e+37
        %v1322 = vand.u32 %v1295, 2147483648
        %v1323 = vor.u32 1.1754944e-38, %v1322
        %v1324 = vsel %vm1321, %v1323, %v1319
        %v1325 = vmul.f32 %v1289, %v1324
        %v1326 = vpack.c.bf16 %v1310, %v1310
        %v1327 = vpack.c.bf16 %v1325, %v1325
        %v1336 = vunpack.c.l.b16 %v1108
        %v1337 = vunpack.c.l.b16 %v1109
        %v1338 = vunpack.c.l.b16 %v1110
        %v1339 = vunpack.c.l.b16 %v1111
        %v1340 = vunpack.c.l.b16 %v1112
        %v1341 = vunpack.c.l.b16 %v1113
        %v1342 = vunpack.c.l.b16 %v1114
        %v1343 = vunpack.c.l.b16 %v1115
        %v1344 = vpack.c.b16 %v1337, %v1336
        %v1345 = vpack.c.b16 %v1339, %v1338
        %v1346 = vpack.c.b16 %v1341, %v1340
        %v1347 = vpack.c.b16 %v1343, %v1342
        %vm1352 = vcmask 523264
        %v1354 = vsel %vm1352, %v1326, 0
        %1356 = vmatpush.bf16.msra.mxu0 0
        %1357 = vmatpush.bf16.msra.mxu0 0
        %1358 = vmatpush.bf16.msra.mxu0 0
        %1359 = vmatpush.bf16.msra.mxu0 0
        %1360 = vmatpush.bf16.msra.mxu0 %v1347
        %1361 = vmatpush.bf16.msra.mxu0 %v1346
        %1362 = vmatpush.bf16.msra.mxu0 %v1345
        %1363 = vmatpush.bf16.msra.mxu0 %v1344
        %1364 = vmatmul.bf16.gmra.mxu0 %v1354
        %v1365 = vpop.f32.mrf.mxu0
        %v1366 = vadd.f32 0.0, %v1365
        %v1367 = vpop.f32.mrf.mxu0
        %1368 = vdwg.mxu0
        %v1377 = vunpack.c.l.b16 %v1116
        %v1378 = vunpack.c.l.b16 %v1117
        %v1379 = vunpack.c.l.b16 %v1118
        %v1380 = vunpack.c.l.b16 %v1119
        %v1381 = vunpack.c.l.b16 %v1120
        %v1382 = vunpack.c.l.b16 %v1121
        %v1383 = vunpack.c.l.b16 %v1122
        %v1384 = vunpack.c.l.b16 %v1123
        %v1385 = vpack.c.b16 %v1378, %v1377
        %v1386 = vpack.c.b16 %v1380, %v1379
        %v1387 = vpack.c.b16 %v1382, %v1381
        %v1388 = vpack.c.b16 %v1384, %v1383
        %v1394 = vsel %vm1352, %v1327, 0
        %1396 = vmatpush.bf16.msra.mxu0 0
        %1397 = vmatpush.bf16.msra.mxu0 0
        %1398 = vmatpush.bf16.msra.mxu0 0
        %1399 = vmatpush.bf16.msra.mxu0 0
        %1400 = vmatpush.bf16.msra.mxu0 %v1388
        %1401 = vmatpush.bf16.msra.mxu0 %v1387
        %1402 = vmatpush.bf16.msra.mxu0 %v1386
        %1403 = vmatpush.bf16.msra.mxu0 %v1385
        %1404 = vmatmul.bf16.gmra.mxu0 %v1394
        %v1405 = vpop.f32.mrf.mxu0
        %v1406 = vadd.f32 0.0, %v1405
        %v1407 = vpop.f32.mrf.mxu0
        %1408 = vdwg.mxu0
        %1411 = vst [vmem:[#allocation1] ss:$2 sm:$0xff] %v1366
        %s1412 = scalar_lea.vmem [#allocation1], 1
        %1413 = vst [vmem:[%s1412] ss:$2 sm:$0xff] %v1406
        %v1414 = vld.sshfl [vmem:[#allocation1] sm:$0xff pattern:$0x75316420]
        %v1416 = vpack.c.bf16 %v1414, %v1414
        %v1417 = vld [vmem:[%s829] sm:$0xf]
        %v1418 = vld [vmem:[%s829 + $0x4] sm:$0xf]
        %v1419 = vld [vmem:[%s829 + $0x8] sm:$0xf]
        %v1420 = vld [vmem:[%s829 + $0xc] sm:$0xf]
        %v1421 = vld [vmem:[%s832] sm:$0x1]
        %v1423 = vperm.slane %v1421, 0
        %v1429 = vunpack.c.l.b16 %v1417
        %v1430 = vunpack.c.l.b16 %v1418
        %v1431 = vunpack.c.l.b16 %v1419
        %v1432 = vunpack.c.l.b16 %v1420
        %v1433 = vpack.c.b16 %v1430, %v1429
        %v1434 = vpack.c.b16 %v1432, %v1431
        %v1438 = vsel %vm949, %v1416, 0
        %1440 = vmatpush.bf16.msra.mxu0 0
        %1441 = vmatpush.bf16.msra.mxu0 0
        %1442 = vmatpush.bf16.msra.mxu0 0
        %1443 = vmatpush.bf16.msra.mxu0 0
        %1444 = vmatpush.bf16.msra.mxu0 0
        %1445 = vmatpush.bf16.msra.mxu0 0
        %1446 = vmatpush.bf16.msra.mxu0 %v1434
        %1447 = vmatpush.bf16.msra.mxu0 %v1433
        %1448 = vmatmul.bf16.gmra.mxu0 %v1438
        %v1449 = vpop.f32.mrf.mxu0
        %v1450 = vadd.f32 %v1423, %v1449
        %v1451 = vpop.f32.mrf.mxu0
        %1452 = vdwg.mxu0
        %v1454 = vrot.slane %v1450, 4
        %v1456 = vadd.f32 %v871, %v1450
        %v1457 = vadd.f32 %v872, %v1454
        %v1458 = vld [vmem:[%s835] sm:$0x1]
        %v1459 = vld [vmem:[%s838] sm:$0x1]
        %1462 = vst [vmem:[#allocation1] ss:$2 sm:$0xff] %v1456
        %s1463 = scalar_lea.vmem [#allocation1], 1
        %1464 = vst [vmem:[%s1463] ss:$2 sm:$0xff] %v1457
        %v1465 = vld.sshfl [vmem:[#allocation1] sm:$0xff pattern:$0x75316420]
        %v1467 = vsel %vm949, %v1465, 0.0
        %1468 = vadd.xlane.f32.xlu0 %v1467
        %v1469 = vpop.xlane.xlu0 %1468
        %v1470 = vrcp.pop 32.0
        %v1471 = vmul.f32 32.0, %v1470
        %v1472 = vsub.f32 1.0, %v1471
        %v1473 = vmul.f32 %v1470, %v1472
        %v1474 = vadd.f32 %v1470, %v1473
        %vm1475 = vweird.f32 %v1470
        %v1476 = vsel %vm1475, %v1470, %v1474
        %v1477 = vmul.f32 %v1469, %v1476
        %v1480 = vunpack.c.l.s4 839922192
        %v1481 = vunpack.c.0.s8 %v1480
        %v1482 = vperm.slane %v1477, %v1481
        %v1484 = vunpack.c.l.s4 1985246804
        %v1485 = vunpack.c.0.s8 %v1484
        %v1486 = vperm.slane %v1477, %v1485
        %v1489 = vsub.f32 %v1456, %v1482
        %v1490 = vsub.f32 %v1457, %v1486
        %v1491 = vmul.f32 %v1489, %v1489
        %v1492 = vmul.f32 %v1490, %v1490
        %1495 = vst [vmem:[#allocation1] ss:$2 sm:$0xff] %v1491
        %s1496 = scalar_lea.vmem [#allocation1], 1
        %1497 = vst [vmem:[%s1496] ss:$2 sm:$0xff] %v1492
        %v1498 = vld.sshfl [vmem:[#allocation1] sm:$0xff pattern:$0x75316420]
        %v1500 = vsel %vm949, %v1498, 0.0
        %1501 = vadd.xlane.f32.xlu0 %v1500
        %v1502 = vpop.xlane.xlu0 %1501
        %v1503 = vmul.f32 %v1502, %v1476
        %v1504 = vadd.f32 %v1503, 1e-05
        %v1505 = vrsqrt.pop %v1504
        %v1506 = vmul.f32 %v1505, %v1504
        %v1507 = vmul.f32 %v1506, %v1505
        %v1508 = vmul.f32 0.5, %v1507
        %v1509 = vsub.f32 1.5, %v1508
        %v1510 = vmul.f32 %v1505, %v1509
        %vm1511 = vweird.f32 %v1504
        %vm1512 = vweird.f32 %v1505
        %vm1513 = vmor %vm1511, %vm1512
        %v1514 = vsel %vm1513, %v1505, %v1510
        %v1517 = vunpack.c.l.s4 839922192
        %v1518 = vunpack.c.0.s8 %v1517
        %v1519 = vperm.slane %v1514, %v1518
        %v1521 = vunpack.c.l.s4 1985246804
        %v1522 = vunpack.c.0.s8 %v1521
        %v1523 = vperm.slane %v1514, %v1522
        %v1526 = vmul.f32 %v1489, %v1519
        %v1527 = vmul.f32 %v1490, %v1523
        %v1529 = vperm.slane %v1458, 0
        %v1531 = vrot.slane %v1529, 4
        %v1533 = vmul.f32 %v1526, %v1529
        %v1534 = vmul.f32 %v1527, %v1531
        %v1536 = vperm.slane %v1459, 0
        %v1538 = vrot.slane %v1536, 4
        %v1540 = vadd.f32 %v1533, %v1536
        %v1541 = vadd.f32 %v1534, %v1538
        %1544 = vst [vmem:[#allocation1] ss:$2 sm:$0xff] %v1540
        %s1545 = scalar_lea.vmem [#allocation1], 1
        %1546 = vst [vmem:[%s1545] ss:$2 sm:$0xff] %v1541
        %v1547 = vld.sshfl [vmem:[#allocation1] sm:$0xff pattern:$0x75316420]
        %v1549 = vpack.c.bf16 %v1547, %v1547
        %v1550 = vld [vmem:[%s843] sm:$0xf]
        %v1551 = vld [vmem:[%s843 + $0x4] sm:$0xf]
        %v1552 = vld [vmem:[%s843 + $0x8] sm:$0xf]
        %v1553 = vld [vmem:[%s843 + $0xc] sm:$0xf]
        %v1554 = vld [vmem:[%s846] sm:$0x1]
        %v1556 = vperm.slane %v1554, 0
        %v1562 = vunpack.c.l.b16 %v1550
        %v1563 = vunpack.c.l.b16 %v1551
        %v1564 = vunpack.c.l.b16 %v1552
        %v1565 = vunpack.c.l.b16 %v1553
        %v1566 = vpack.c.b16 %v1563, %v1562
        %v1567 = vpack.c.b16 %v1565, %v1564
        %v1571 = vsel %vm949, %v1549, 0
        %1573 = vmatpush.bf16.msra.mxu0 0
        %1574 = vmatpush.bf16.msra.mxu0 0
        %1575 = vmatpush.bf16.msra.mxu0 0
        %1576 = vmatpush.bf16.msra.mxu0 0
        %1577 = vmatpush.bf16.msra.mxu0 0
        %1578 = vmatpush.bf16.msra.mxu0 0
        %1579 = vmatpush.bf16.msra.mxu0 %v1567
        %1580 = vmatpush.bf16.msra.mxu0 %v1566
        %1581 = vmatmul.bf16.gmra.mxu0 %v1571
        %v1582 = vpop.f32.mrf.mxu0
        %v1583 = vadd.f32 %v1556, %v1582
        %v1584 = vpop.f32.mrf.mxu0
        %1585 = vdwg.mxu0
        %v1586 = vmax.f32 %v1583, 0.0
        %v1587 = vpack.c.bf16 %v1586, %v1586
        %v1588 = vld [vmem:[%s851] sm:$0xf]
        %v1589 = vld [vmem:[%s851 + $0x4] sm:$0xf]
        %v1590 = vld [vmem:[%s851 + $0x8] sm:$0xf]
        %v1591 = vld [vmem:[%s851 + $0xc] sm:$0xf]
        %v1592 = vld [vmem:[%s851 + $0x10] sm:$0xf]
        %v1593 = vld [vmem:[%s851 + $0x14] sm:$0xf]
        %v1594 = vld [vmem:[%s851 + $0x18] sm:$0xf]
        %v1595 = vld [vmem:[%s851 + $0x1c] sm:$0xf]
        %v1596 = vld [vmem:[%s851 + $0x20] sm:$0xf]
        %v1597 = vld [vmem:[%s851 + $0x24] sm:$0xf]
        %v1598 = vld [vmem:[%s851 + $0x28] sm:$0xf]
        %v1599 = vld [vmem:[%s851 + $0x2c] sm:$0xf]
        %v1600 = vld [vmem:[%s851 + $0x30] sm:$0xf]
        %v1601 = vld [vmem:[%s851 + $0x34] sm:$0xf]
        %v1602 = vld [vmem:[%s851 + $0x38] sm:$0xf]
        %v1603 = vld [vmem:[%s851 + $0x3c] sm:$0xf]
        %v1604 = vld [vmem:[%s854] sm:$0x1]
        %v1606 = vperm.slane %v1604, 0
        %v1624 = vunpack.c.l.b16 %v1588
        %v1625 = vunpack.c.l.b16 %v1589
        %v1626 = vunpack.c.l.b16 %v1590
        %v1627 = vunpack.c.l.b16 %v1591
        %v1628 = vunpack.c.l.b16 %v1592
        %v1629 = vunpack.c.l.b16 %v1593
        %v1630 = vunpack.c.l.b16 %v1594
        %v1631 = vunpack.c.l.b16 %v1595
        %v1632 = vunpack.c.l.b16 %v1596
        %v1633 = vunpack.c.l.b16 %v1597
        %v1634 = vunpack.c.l.b16 %v1598
        %v1635 = vunpack.c.l.b16 %v1599
        %v1636 = vunpack.c.l.b16 %v1600
        %v1637 = vunpack.c.l.b16 %v1601
        %v1638 = vunpack.c.l.b16 %v1602
        %v1639 = vunpack.c.l.b16 %v1603
        %v1640 = vpack.c.b16 %v1625, %v1624
        %v1641 = vpack.c.b16 %v1627, %v1626
        %v1642 = vpack.c.b16 %v1629, %v1628
        %v1643 = vpack.c.b16 %v1631, %v1630
        %v1644 = vpack.c.b16 %v1633, %v1632
        %v1645 = vpack.c.b16 %v1635, %v1634
        %v1646 = vpack.c.b16 %v1637, %v1636
        %v1647 = vpack.c.b16 %v1639, %v1638
        %1656 = vmatpush.bf16.msra.mxu0 %v1647
        %1657 = vmatpush.bf16.msra.mxu0 %v1646
        %1658 = vmatpush.bf16.msra.mxu0 %v1645
        %1659 = vmatpush.bf16.msra.mxu0 %v1644
        %1660 = vmatpush.bf16.msra.mxu0 %v1643
        %1661 = vmatpush.bf16.msra.mxu0 %v1642
        %1662 = vmatpush.bf16.msra.mxu0 %v1641
        %1663 = vmatpush.bf16.msra.mxu0 %v1640
        %1664 = vmatmul.bf16.gmra.mxu0 %v1587
        %v1665 = vpop.f32.mrf.mxu0
        %v1666 = vadd.f32 %v1606, %v1665
        %v1667 = vpop.f32.mrf.mxu0
        %1668 = vdwg.mxu0
        %v1670 = vrot.slane %v1666, 4
        %v1672 = vadd.f32 %v1540, %v1666
        %v1673 = vadd.f32 %v1541, %v1670
        %v1674 = vld [vmem:[%s857] sm:$0x1]
        %v1675 = vld [vmem:[%s689] sm:$0x1]
        %1678 = vst [vmem:[#allocation1] ss:$2 sm:$0xff] %v1672
        %s1679 = scalar_lea.vmem [#allocation1], 1
        %1680 = vst [vmem:[%s1679] ss:$2 sm:$0xff] %v1673
        %v1681 = vld.sshfl [vmem:[#allocation1] sm:$0xff pattern:$0x75316420]
        %v1683 = vsel %vm949, %v1681, 0.0
        %1684 = vadd.xlane.f32.xlu0 %v1683
        %v1685 = vpop.xlane.xlu0 %1684
        %v1686 = vmul.f32 %v1685, %v1476
        %v1689 = vunpack.c.l.s4 839922192
        %v1690 = vunpack.c.0.s8 %v1689
        %v1691 = vperm.slane %v1686, %v1690
        %v1693 = vunpack.c.l.s4 1985246804
        %v1694 = vunpack.c.0.s8 %v1693
        %v1695 = vperm.slane %v1686, %v1694
        %v1698 = vsub.f32 %v1672, %v1691
        %v1699 = vsub.f32 %v1673, %v1695
        %v1700 = vmul.f32 %v1698, %v1698
        %v1701 = vmul.f32 %v1699, %v1699
        %1704 = vst [vmem:[#allocation1] ss:$2 sm:$0xff] %v1700
        %s1705 = scalar_lea.vmem [#allocation1], 1
        %1706 = vst [vmem:[%s1705] ss:$2 sm:$0xff] %v1701
        %v1707 = vld.sshfl [vmem:[#allocation1] sm:$0xff pattern:$0x75316420]
        %v1709 = vsel %vm949, %v1707, 0.0
        %1710 = vadd.xlane.f32.xlu0 %v1709
        %v1711 = vpop.xlane.xlu0 %1710
        %v1712 = vmul.f32 %v1711, %v1476
        %v1713 = vadd.f32 %v1712, 1e-05
        %v1714 = vrsqrt.pop %v1713
        %v1715 = vmul.f32 %v1714, %v1713
        %v1716 = vmul.f32 %v1715, %v1714
        %v1717 = vmul.f32 0.5, %v1716
        %v1718 = vsub.f32 1.5, %v1717
        %v1719 = vmul.f32 %v1714, %v1718
        %vm1720 = vweird.f32 %v1713
        %vm1721 = vweird.f32 %v1714
        %vm1722 = vmor %vm1720, %vm1721
        %v1723 = vsel %vm1722, %v1714, %v1719
        %v1726 = vunpack.c.l.s4 839922192
        %v1727 = vunpack.c.0.s8 %v1726
        %v1728 = vperm.slane %v1723, %v1727
        %v1730 = vunpack.c.l.s4 1985246804
        %v1731 = vunpack.c.0.s8 %v1730
        %v1732 = vperm.slane %v1723, %v1731
        %v1735 = vmul.f32 %v1698, %v1728
        %v1736 = vmul.f32 %v1699, %v1732
        %v1738 = vperm.slane %v1674, 0
        %v1740 = vrot.slane %v1738, 4
        %v1742 = vmul.f32 %v1735, %v1738
        %v1743 = vmul.f32 %v1736, %v1740
        %v1745 = vperm.slane %v1675, 0
        %v1747 = vrot.slane %v1745, 4
        %v1749 = vadd.f32 %v1742, %v1745
        %v1750 = vadd.f32 %v1743, %v1747
        %vm1751 = vcmask 257024
        %1752 = vst.msk [vmem:[#allocation2] sm:$0xf] %vm1751, %v1749
        %1753 = vst.msk [vmem:[#allocation2 + $0x4] sm:$0xf] %vm1751, %v1750
        %v1754 = vpack.c.bf16 %v1749, %v1749
        %v1755 = vpack.c.bf16 %v1750, %v1750
        %vm1756 = vcmask 254976
        %1757 = vst.msk [vmem:[%s862] sm:$0x3] %vm1756, %v1754
        %1758 = vst.msk [vmem:[%s862 + $0x2] sm:$0x3] %vm1756, %v1755
        %p1759 = scmp.eq.s32.totalorder %s35, 1
        // Predicated region
        $region101: #{obj_decoder_forward.4} parent=91 // pred_check
          %p1760 = pneg %p1759
        $region102: #{obj_decoder_forward.4} parent=91 // pred_check_branch
          %1762 = sbr.rel (%p1760) target = $region104
        $region103: #{obj_decoder_forward.4} parent=91 // pred_region
          %1763 = vst.msk [vmem:[#allocation6] sm:$0xf] %vm1277, %v1310
          %1764 = vst.msk [vmem:[#allocation6 + $0x4] sm:$0xf] %vm1277, %v1325
        $region104: #{obj_decoder_forward.4} parent=91 // pred_fallthru
          _
        %p1765 = scmp.lt.s32.totalorder %s35, 1
        %s1766 = scalar_select %p1765, %s35, 1
        %s1767 = smul.addr %s1766, 2
        %s1768 = smul.addr %s1767, 2
        %s1769 = scalar_lea.vmem %s18, %s1768
        // Predicated region
        $region105: #{obj_decoder_forward.4} parent=91 // pred_check
          %p1770 = pneg %p511
        $region106: #{obj_decoder_forward.4} parent=91 // pred_check_branch
          %1772 = sbr.rel (%p1770) target = $region108
        $region107: #{obj_decoder_forward.4} parent=91 // pred_region
          _
        $region108: #{obj_decoder_forward.4} parent=91 // pred_fallthru
          _
        // Predicated region
        $region109: #{obj_decoder_forward.4} parent=91 // pred_check
          %p1773 = pneg %p532
        $region110: #{obj_decoder_forward.4} parent=91 // pred_check_branch
          %1775 = sbr.rel (%p1773) target = $region112
        $region111: #{obj_decoder_forward.4} parent=91 // pred_region
          %1777 = vsyncadd [#allocation5], 0
          %s1778 = sshll.u32 [#allocation6], 4
          %s1779 = int_to_ptr.vmem [resolvable:$true] %s1778
          %s1780 = sshll.u32 %s19, 4
          %s1781 = int_to_ptr.hbm [resolvable:$true] %s1780
          %1786 = dma.vmem_to_hbm [thread:$0]  %s1779, 128, %s1781, [#allocation5], 64, 64, 4
        $region112: #{obj_decoder_forward.4} parent=91 // pred_fallthru
          _
        // Predicated region
        $region113: #{obj_decoder_forward.4} parent=91 // pred_check
          %p1787 = pneg %p532
        $region114: #{obj_decoder_forward.4} parent=91 // pred_check_branch
          %1789 = sbr.rel (%p1787) target = $region116
        $region115: #{obj_decoder_forward.4} parent=91 // pred_region
          %1791 = dma.done [#allocation5], 128
        $region116: #{obj_decoder_forward.4} parent=91 // pred_fallthru
          _
      $region92: #{obj_decoder_forward.4} parent=5 // pred_fallthru
        _
      %p1792 = scmp.le.s32.totalorder 2, %s30
      // Predicated region
      $region117: #{obj_decoder_forward.4} parent=5 // pred_check
        %p1793 = pneg %p1792
      $region118: #{obj_decoder_forward.4} parent=5 // pred_check_branch
        %1795 = sbr.rel (%p1793) target = $region120
      $region119: #{obj_decoder_forward.4} parent=5 // pred_region
        %s1796 = ssub.s32 %s30, 2
        // Predicated region
        $region121: #{obj_decoder_forward.4} parent=119 // pred_check
          %p1797 = pneg %p517
        $region122: #{obj_decoder_forward.4} parent=119 // pred_check_branch
          %1799 = sbr.rel (%p1797) target = $region124
        $region123: #{obj_decoder_forward.4} parent=119 // pred_region
          %p1800 = scmp.lt.s32.totalorder %s36, 1
          %s1801 = scalar_select %p1800, %s36, 1
          %s1802 = smul.addr %s1801, 2
          %s1803 = smul.addr %s1802, 2
          %s1804 = scalar_lea.vmem %s18, %s1803
        $region124: #{obj_decoder_forward.4} parent=119 // pred_fallthru
          _
      $region120: #{obj_decoder_forward.4} parent=5 // pred_fallthru
        _
    $region6: #{obj_decoder_forward.4} parent=1 // loop_footer
      %s34 = sadd.s32 1, %s30
    $region7: #{obj_decoder_forward.4} parent=1 // loop_footer_branch
      %29 = sbr.rel target = $region3
    $region8: #{obj_decoder_forward.4} parent=1 // loop_exit
      _
    %1805 = vsyncpa [#allocation4], 1
    %s1806 = scalar_lea.sflag [#allocation4], 1
    %1807 = vsyncpa %s1806, 1
    %1808 = vsyncpa [#allocation5], 1
    %s1809 = scalar_lea.sflag [#allocation5], 1
    %1810 = vsyncpa %s1809, 1

</llo_original>
